<compile_context>
chip_gen: v7x
topology: tpu7x:2x2x1
jax: 0.10.0
libtpu: 0.0.40
codegen_flags: <defaults>
</compile_context>

<pallas_src>
import math
import functools

import jax
import jax.numpy as jnp
from jax import lax
from jax.experimental import pallas as pl
from jax.experimental.pallas import tpu as pltpu


def _layernorm(x, gamma, beta, eps=1e-5):
    # PyTorch LayerNorm: biased variance over the last dim, eps inside rsqrt.
    mean = jnp.mean(x, axis=-1, keepdims=True)
    var = jnp.mean((x - mean) ** 2, axis=-1, keepdims=True)
    return (x - mean) * lax.rsqrt(var + eps) * gamma + beta


def attention_block_kernel(x_ref,
                           w_q_ref, b_q_ref, w_k_ref, b_k_ref, w_v_ref, b_v_ref,
                           w_o_ref, b_o_ref,
                           g1_ref, be1_ref,
                           w1_ref, b1_ref, w2_ref, b2_ref,
                           g2_ref, be2_ref,
                           o_ref,
                           k_scr, v_scr,
                           *, num_heads, q_tile):
    i = pl.program_id(1)

    # ---- K/V projection: once per batch element (q-tile axis is "arbitrary",
    # so k_scr / v_scr persist across the q tiles of this batch).  Results are
    # stored directly in bf16; no (S, 2H) f32 intermediate exists. ----
    @pl.when(i == 0)
    def _():
        x_full = x_ref[0]                                                 # (S, H) bf16
        k_scr[...] = (jnp.dot(x_full, w_k_ref[...],
                              preferred_element_type=jnp.float32)
                      + b_k_ref[...]).astype(jnp.bfloat16)
        v_scr[...] = (jnp.dot(x_full, w_v_ref[...],
                              preferred_element_type=jnp.float32)
                      + b_v_ref[...]).astype(jnp.bfloat16)

    # ---- This block's query rows, sliced from the resident full-sequence
    # block (no duplicate x input / second HBM read). ----
    row0 = pl.multiple_of(i * q_tile, q_tile)
    xq = x_ref[0, pl.ds(row0, q_tile), :]                                 # (TQ, H) bf16

    H = xq.shape[-1]
    hd = H // num_heads

    # Q projection; 1/sqrt(hd) is already folded into w_q / b_q.
    q = jnp.dot(xq, w_q_ref[...], preferred_element_type=jnp.float32) + b_q_ref[...]

    k = k_scr[...]                                                        # (S, H) bf16
    v = v_scr[...]                                                        # (S, H) bf16

    # ---- Per-head attention.  Head outputs are concatenated and the output
    # projection runs as ONE full-contraction (TQ,H)@(H,H) matmul. ----
    heads = []
    for h in range(num_heads):
        qh = q[:, h * hd:(h + 1) * hd].astype(jnp.bfloat16)               # (TQ, hd)
        kh = k[:, h * hd:(h + 1) * hd]                                     # (S,  hd)
        vh = v[:, h * hd:(h + 1) * hd]                                     # (S,  hd)

        s = lax.dot_general(qh, kh, (((1,), (1,)), ((), ())),
                            preferred_element_type=jnp.float32)            # (TQ, S)
        s = s - jnp.max(s, axis=-1, keepdims=True)
        p = jnp.exp(s)
        p = p * pl.reciprocal(jnp.sum(p, axis=-1, keepdims=True), approx=True)

        heads.append(jnp.dot(p.astype(jnp.bfloat16), vh,
                             preferred_element_type=jnp.float32))           # (TQ, hd)

    ctx = jnp.concatenate(heads, axis=-1).astype(jnp.bfloat16)              # (TQ, H)
    attn = jnp.dot(ctx, w_o_ref[...],
                   preferred_element_type=jnp.float32) + b_o_ref[...]

    # ---- Residual + norm1 (f32 statistics) ----
    x1 = _layernorm(xq.astype(jnp.float32) + attn, g1_ref[...], be1_ref[...])

    # ---- FFN: Linear(H, 4H) -> exact (erf) GELU -> Linear(4H, H) ----
    h1 = jnp.dot(x1.astype(jnp.bfloat16), w1_ref[...],
                 preferred_element_type=jnp.float32) + b1_ref[...]
    h1 = 0.5 * h1 * (1.0 + lax.erf(h1 * (1.0 / math.sqrt(2.0))))
    ffn = jnp.dot(h1.astype(jnp.bfloat16), w2_ref[...],
                  preferred_element_type=jnp.float32) + b2_ref[...]

    # ---- Residual + norm2 ----
    o_ref[0] = _layernorm(x1 + ffn, g2_ref[...], be2_ref[...]).astype(o_ref.dtype)


def _vmem_capacity_bytes():
    try:
        return int(pltpu.get_tpu_info().vmem_capacity_bytes)
    except Exception:
        return 64 * 1024 * 1024  # conservative: v7x per-core VMEM


def _vmem_limit_bytes(cap):
    # Leave ~16 MiB headroom for Mosaic internal scratch / semaphores / spills.
    return max(32 * 1024 * 1024, cap - 16 * 1024 * 1024)


def _pick_q_tile(S, vmem_cap):
    # Largest sublane-aligned tile that divides S, bounded by VMEM capacity
    # (TQ up to 512 on 128-MiB parts, 256 on v7x's 64-MiB part); otherwise the
    # full sequence (block == full dim is always legal).
    max_t = 512 if vmem_cap >= 96 * 1024 * 1024 else 256
    for t in (512, 256, 128, 64, 32, 16, 8):
        if t <= max_t and t <= S and S % t == 0:
            return t
    return S


def attention_block(x, params, num_heads, *, single_buffer_invariants=True,
                    out_dtype=jnp.float32):
    B, S, H = x.shape
    assert H % num_heads == 0, "hidden_dim must be divisible by num_heads"

    vmem_cap = _vmem_capacity_bytes()
    TQ = _pick_q_tile(S, vmem_cap)

    x_bf = x.astype(jnp.bfloat16)

    p = params
    weight_args = (p["w_q"], p["b_q"], p["w_k"], p["b_k"], p["w_v"], p["b_v"],
                   p["w_o"], p["b_o"], p["g1"], p["be1"],
                   p["w1"], p["b1"], p["w2"], p["b2"], p["g2"], p["be2"])

    spec_kwargs = {}
    if single_buffer_invariants:
        # These blocks' indices never change within a batch; double-buffering
        # them only burns VMEM (the dominant constraint on v7x's 64 MiB).
        spec_kwargs = dict(pipeline_mode=pl.Buffered(1))

    def invariant_spec(arr):
        nd = arr.ndim
        return pl.BlockSpec(arr.shape, lambda b, i, _nd=nd: (0,) * _nd, **spec_kwargs)

    in_specs = [
        # Full sequence per batch element: used once for the K/V projection,
        # and the query-row block is sliced from it in-kernel.
        pl.BlockSpec((1, S, H), lambda b, i: (b, 0, 0), **spec_kwargs),
    ] + [invariant_spec(a) for a in weight_args]

    kernel = functools.partial(attention_block_kernel,
                               num_heads=num_heads, q_tile=TQ)
    return pl.pallas_call(
        kernel,
        out_shape=jax.ShapeDtypeStruct((B, S, H), out_dtype),
        grid_spec=pltpu.PrefetchScalarGridSpec(
            num_scalar_prefetch=0,
            grid=(B, S // TQ),
            in_specs=in_specs,
            out_specs=pl.BlockSpec((1, TQ, H), lambda b, i: (b, i, 0)),
            scratch_shapes=[pltpu.VMEM((S, H), jnp.bfloat16),   # K (per batch)
                            pltpu.VMEM((S, H), jnp.bfloat16)],  # V (per batch)
        ),
        compiler_params=pltpu.CompilerParams(
            # q-tile axis is "arbitrary": the K/V scratch carries across q tiles.
            dimension_semantics=("parallel", "arbitrary"),
            vmem_limit_bytes=_vmem_limit_bytes(vmem_cap)),
    )(x_bf, *weight_args)


def attention_block_reference(x, params, num_heads):
    """Pure-JAX mirror of the kernel's math (bf16 matmul operands, f32 accum)."""
    B, S, H = x.shape
    hd = H // num_heads
    p = params
    f32, bf16 = jnp.float32, jnp.bfloat16
    xb = x.astype(bf16)

    def proj(a, w, b):
        return jnp.einsum("bsh,hd->bsd", a.astype(bf16), w,
                          preferred_element_type=f32) + b

    q = proj(xb, p["w_q"], p["b_q"])
    k = proj(xb, p["w_k"], p["b_k"]).astype(bf16)
    v = proj(xb, p["w_v"], p["b_v"]).astype(bf16)

    def split_heads(t):
        return t.reshape(B, S, num_heads, hd).transpose(0, 2, 1, 3)

    qh, kh, vh = split_heads(q).astype(bf16), split_heads(k), split_heads(v)
    s = jnp.einsum("bhqd,bhkd->bhqk", qh, kh, preferred_element_type=f32)
    pa = jax.nn.softmax(s, axis=-1)
    ctx = jnp.einsum("bhqk,bhkd->bhqd", pa.astype(bf16), vh,
                     preferred_element_type=f32)
    ctx = ctx.transpose(0, 2, 1, 3).reshape(B, S, H)

    attn = proj(ctx, p["w_o"], p["b_o"])
    x1 = _layernorm(xb.astype(f32) + attn, p["g1"], p["be1"])
    h1 = proj(x1, p["w1"], p["b1"])
    h1 = 0.5 * h1 * (1.0 + lax.erf(h1 * (1.0 / math.sqrt(2.0))))
    ffn = proj(h1, p["w2"], p["b2"])
    return _layernorm(x1 + ffn, p["g2"], p["be2"])


def init_params(key, hidden_dim, num_heads):
    H = hidden_dim
    hd = H // num_heads
    scale = 1.0 / math.sqrt(hd)
    ks = jax.random.split(key, 10)
    std = 0.1
    wdt = jnp.bfloat16   # weights stored bf16 (MXU-native); all dots accumulate in f32
    w_q = std * jax.random.normal(ks[0], (H, H), jnp.float32)
    b_q = std * jax.random.normal(ks[1], (1, H), jnp.float32)
    params = {
        # in_proj pre-transposed to the x @ W convention and split Q / K / V.
        # 1/sqrt(head_dim) is folded into the Q projection (weight AND bias),
        # so the kernel does no per-head scaling.
        "w_q": (w_q * scale).astype(wdt),
        "b_q": b_q * scale,
        "w_k": (std * jax.random.normal(ks[2], (H, H), jnp.float32)).astype(wdt),
        "b_k": std * jax.random.normal(ks[3], (1, H), jnp.float32),
        "w_v": (std * jax.random.normal(ks[4], (H, H), jnp.float32)).astype(wdt),
        "b_v": std * jax.random.normal(ks[5], (1, H), jnp.float32),
        "w_o": (std * jax.random.normal(ks[6], (H, H), jnp.float32)).astype(wdt),
        "b_o": std * jax.random.normal(ks[7], (1, H), jnp.float32),
        "g1":  jnp.ones((1, H), jnp.float32),
        "be1": jnp.zeros((1, H), jnp.float32),
        "w1":  (std * jax.random.normal(ks[8], (H, 4 * H), jnp.float32)).astype(wdt),
        "b1":  jnp.zeros((1, 4 * H), jnp.float32),
        "w2":  (std * jax.random.normal(ks[9], (4 * H, H), jnp.float32)).astype(wdt),
        "b2":  jnp.zeros((1, H), jnp.float32),
        "g2":  jnp.ones((1, H), jnp.float32),
        "be2": jnp.zeros((1, H), jnp.float32),
    }
    return params


if __name__ == "__main__":
    B, S, H, NUM_HEADS = 2, 8, 32, 4
    key = jax.random.PRNGKey(0)
    k_x, k_p = jax.random.split(key)
    x = jax.random.normal(k_x, (B, S, H), jnp.float32)
    params = init_params(k_p, H, NUM_HEADS)

    try:
        out = jax.block_until_ready(attention_block(x, params, NUM_HEADS))
    except Exception:
        # Older jax/jaxlib versions may not support pl.Buffered single-buffering
        # of grid-invariant blocks; retry with default (double-buffered) specs.
        out = jax.block_until_ready(
            attention_block(x, params, NUM_HEADS, single_buffer_invariants=False))

    assert out.shape == (B, S, H) and out.dtype == jnp.float32
    assert bool(jnp.all(jnp.isfinite(out)))

    ref = attention_block_reference(x, params, NUM_HEADS)
    assert bool(jnp.allclose(out, ref.astype(out.dtype), atol=1e-2, rtol=1e-2))
    print("KERNEL_OK")
</pallas_src>

<mosaic_0001>
module attributes {stable_mosaic.version = 11 : i64} {
  func.func @attention_block_kernel(%arg0: i32, %arg1: i32, %arg2: memref<1x8x32xbf16, #tpu.memory_space<vmem>>, %arg3: memref<32x32xbf16, #tpu.memory_space<vmem>>, %arg4: memref<1x32xf32, #tpu.memory_space<vmem>>, %arg5: memref<32x32xbf16, #tpu.memory_space<vmem>>, %arg6: memref<1x32xf32, #tpu.memory_space<vmem>>, %arg7: memref<32x32xbf16, #tpu.memory_space<vmem>>, %arg8: memref<1x32xf32, #tpu.memory_space<vmem>>, %arg9: memref<32x32xbf16, #tpu.memory_space<vmem>>, %arg10: memref<1x32xf32, #tpu.memory_space<vmem>>, %arg11: memref<1x32xf32, #tpu.memory_space<vmem>>, %arg12: memref<1x32xf32, #tpu.memory_space<vmem>>, %arg13: memref<32x128xbf16, #tpu.memory_space<vmem>>, %arg14: memref<1x128xf32, #tpu.memory_space<vmem>>, %arg15: memref<128x32xbf16, #tpu.memory_space<vmem>>, %arg16: memref<1x32xf32, #tpu.memory_space<vmem>>, %arg17: memref<1x32xf32, #tpu.memory_space<vmem>>, %arg18: memref<1x32xf32, #tpu.memory_space<vmem>>, %arg19: memref<1x8x32xf32, #tpu.memory_space<vmem>>, %arg20: memref<8x32xbf16, #tpu.memory_space<vmem>>, %arg21: memref<8x32xbf16, #tpu.memory_space<vmem>>) attributes {dimension_semantics = [#tpu.dimension_semantics<parallel>, #tpu.dimension_semantics<arbitrary>], iteration_bounds = array<i64: 2, 1>, scalar_prefetch = 0 : i64, scratch_operands = 2 : i64, tpu.core_type = #tpu.core_type<tc>, window_params = [{pipeline_mode = #tpu.pipeline_mode<synchronous>, transform_indices = @transform_0, window_bounds = array<i64: 1, 8, 32>}, {pipeline_mode = #tpu.pipeline_mode<synchronous>, transform_indices = @transform_1, window_bounds = array<i64: 32, 32>}, {pipeline_mode = #tpu.pipeline_mode<synchronous>, transform_indices = @transform_2, window_bounds = array<i64: 1, 32>}, {pipeline_mode = #tpu.pipeline_mode<synchronous>, transform_indices = @transform_3, window_bounds = array<i64: 32, 32>}, {pipeline_mode = #tpu.pipeline_mode<synchronous>, transform_indices = @transform_4, window_bounds = array<i64: 1, 32>}, {pipeline_mode = #tpu.pipeline_mode<synchronous>, transform_indices = @transform_5, window_bounds = array<i64: 32, 32>}, {pipeline_mode = #tpu.pipeline_mode<synchronous>, transform_indices = @transform_6, window_bounds = array<i64: 1, 32>}, {pipeline_mode = #tpu.pipeline_mode<synchronous>, transform_indices = @transform_7, window_bounds = array<i64: 32, 32>}, {pipeline_mode = #tpu.pipeline_mode<synchronous>, transform_indices = @transform_8, window_bounds = array<i64: 1, 32>}, {pipeline_mode = #tpu.pipeline_mode<synchronous>, transform_indices = @transform_9, window_bounds = array<i64: 1, 32>}, {pipeline_mode = #tpu.pipeline_mode<synchronous>, transform_indices = @transform_10, window_bounds = array<i64: 1, 32>}, {pipeline_mode = #tpu.pipeline_mode<synchronous>, transform_indices = @transform_11, window_bounds = array<i64: 32, 128>}, {pipeline_mode = #tpu.pipeline_mode<synchronous>, transform_indices = @transform_12, window_bounds = array<i64: 1, 128>}, {pipeline_mode = #tpu.pipeline_mode<synchronous>, transform_indices = @transform_13, window_bounds = array<i64: 128, 32>}, {pipeline_mode = #tpu.pipeline_mode<synchronous>, transform_indices = @transform_14, window_bounds = array<i64: 1, 32>}, {pipeline_mode = #tpu.pipeline_mode<synchronous>, transform_indices = @transform_15, window_bounds = array<i64: 1, 32>}, {pipeline_mode = #tpu.pipeline_mode<synchronous>, transform_indices = @transform_16, window_bounds = array<i64: 1, 32>}, {transform_indices = @transform_17, window_bounds = array<i64: 1, 8, 32>}]} {
    %c0_i32 = arith.constant 0 : i32
    %0 = arith.cmpi eq, %arg1, %c0_i32 : i32
    %1 = arith.extui %0 : i1 to i32
    %c0_i32_0 = arith.constant 0 : i32
    %2 = arith.cmpi ne, %1, %c0_i32_0 : i32
    scf.if %2 {
      %c0_65 = arith.constant 0 : index
      %c0_66 = arith.constant 0 : index
      %c0_67 = arith.constant 0 : index
      %164 = vector.load %arg2[%c0_65, %c0_66, %c0_67] : memref<1x8x32xbf16, #tpu.memory_space<vmem>>, vector<1x8x32xbf16>
      %165 = vector.shape_cast %164 : vector<1x8x32xbf16> to vector<8x32xbf16>
      %c0_68 = arith.constant 0 : index
      %c0_69 = arith.constant 0 : index
      %166 = vector.load %arg5[%c0_68, %c0_69] : memref<32x32xbf16, #tpu.memory_space<vmem>>, vector<32x32xbf16>
      %cst_70 = arith.constant dense<0.000000e+00> : vector<8x32xf32>
      %167 = tpu.matmul %165, %166, %cst_70 {dimension_numbers = #tpu.dot_dimension_numbers<[1], [0], [0], [1], [0, 0, 1, 1], [], []>} : vector<8x32xbf16>, vector<32x32xbf16>, vector<8x32xf32> -> vector<8x32xf32>
      %c0_71 = arith.constant 0 : index
      %c0_72 = arith.constant 0 : index
      %168 = vector.load %arg6[%c0_71, %c0_72] : memref<1x32xf32, #tpu.memory_space<vmem>>, vector<1x32xf32>
      %169 = vector.broadcast %168 : vector<1x32xf32> to vector<8x32xf32>
      %170 = arith.addf %167, %169 : vector<8x32xf32>
      %171 = arith.truncf %170 : vector<8x32xf32> to vector<8x32xbf16>
      %c0_73 = arith.constant 0 : index
      %c0_74 = arith.constant 0 : index
      %172 = vector.load %arg20[%c0_73, %c0_74] : memref<8x32xbf16, #tpu.memory_space<vmem>>, vector<8x32xbf16>
      tpu.vector_store %arg20[%c0_73, %c0_74], %171 {strides = array<i32>} : memref<8x32xbf16, #tpu.memory_space<vmem>>, vector<8x32xbf16>,
      %c0_75 = arith.constant 0 : index
      %c0_76 = arith.constant 0 : index
      %173 = vector.load %arg7[%c0_75, %c0_76] : memref<32x32xbf16, #tpu.memory_space<vmem>>, vector<32x32xbf16>
      %cst_77 = arith.constant dense<0.000000e+00> : vector<8x32xf32>
      %174 = tpu.matmul %165, %173, %cst_77 {dimension_numbers = #tpu.dot_dimension_numbers<[1], [0], [0], [1], [0, 0, 1, 1], [], []>} : vector<8x32xbf16>, vector<32x32xbf16>, vector<8x32xf32> -> vector<8x32xf32>
      %c0_78 = arith.constant 0 : index
      %c0_79 = arith.constant 0 : index
      %175 = vector.load %arg8[%c0_78, %c0_79] : memref<1x32xf32, #tpu.memory_space<vmem>>, vector<1x32xf32>
      %176 = vector.broadcast %175 : vector<1x32xf32> to vector<8x32xf32>
      %177 = arith.addf %174, %176 : vector<8x32xf32>
      %178 = arith.truncf %177 : vector<8x32xf32> to vector<8x32xbf16>
      %c0_80 = arith.constant 0 : index
      %c0_81 = arith.constant 0 : index
      %179 = vector.load %arg21[%c0_80, %c0_81] : memref<8x32xbf16, #tpu.memory_space<vmem>>, vector<8x32xbf16>
      tpu.vector_store %arg21[%c0_80, %c0_81], %178 {strides = array<i32>} : memref<8x32xbf16, #tpu.memory_space<vmem>>, vector<8x32xbf16>,
    } else {
    }
    %c8_i32 = arith.constant 8 : i32
    %3 = arith.muli %arg1, %c8_i32 : i32
    %4 = tpu.assume_multiple %3, 8 : i32
    %c0 = arith.constant 0 : index
    %5 = arith.index_cast %4 : i32 to index
    %c0_1 = arith.constant 0 : index
    %6 = vector.load %arg2[%c0, %5, %c0_1] : memref<1x8x32xbf16, #tpu.memory_space<vmem>>, vector<1x8x32xbf16>
    %7 = vector.shape_cast %6 : vector<1x8x32xbf16> to vector<8x32xbf16>
    %c0_2 = arith.constant 0 : index
    %c0_3 = arith.constant 0 : index
    %8 = vector.load %arg3[%c0_2, %c0_3] : memref<32x32xbf16, #tpu.memory_space<vmem>>, vector<32x32xbf16>
    %cst = arith.constant dense<0.000000e+00> : vector<8x32xf32>
    %9 = tpu.matmul %7, %8, %cst {dimension_numbers = #tpu.dot_dimension_numbers<[1], [0], [0], [1], [0, 0, 1, 1], [], []>} : vector<8x32xbf16>, vector<32x32xbf16>, vector<8x32xf32> -> vector<8x32xf32>
    %c0_4 = arith.constant 0 : index
    %c0_5 = arith.constant 0 : index
    %10 = vector.load %arg4[%c0_4, %c0_5] : memref<1x32xf32, #tpu.memory_space<vmem>>, vector<1x32xf32>
    %11 = vector.broadcast %10 : vector<1x32xf32> to vector<8x32xf32>
    %12 = arith.addf %9, %11 : vector<8x32xf32>
    %c0_6 = arith.constant 0 : index
    %c0_7 = arith.constant 0 : index
    %13 = vector.load %arg20[%c0_6, %c0_7] : memref<8x32xbf16, #tpu.memory_space<vmem>>, vector<8x32xbf16>
    %c0_8 = arith.constant 0 : index
    %c0_9 = arith.constant 0 : index
    %14 = vector.load %arg21[%c0_8, %c0_9] : memref<8x32xbf16, #tpu.memory_space<vmem>>, vector<8x32xbf16>
    %15 = vector.extract_strided_slice %12 {offsets = [0, 0], sizes = [8, 8], strides = [1, 1]} : vector<8x32xf32> to vector<8x8xf32>
    %16 = arith.truncf %15 : vector<8x8xf32> to vector<8x8xbf16>
    %17 = vector.extract_strided_slice %13 {offsets = [0, 0], sizes = [8, 8], strides = [1, 1]} : vector<8x32xbf16> to vector<8x8xbf16>
    %18 = vector.extract_strided_slice %14 {offsets = [0, 0], sizes = [8, 8], strides = [1, 1]} : vector<8x32xbf16> to vector<8x8xbf16>
    %cst_10 = arith.constant dense<0.000000e+00> : vector<8x8xf32>
    %19 = tpu.matmul %16, %17, %cst_10 {dimension_numbers = #tpu.dot_dimension_numbers<[1], [1], [0], [0], [0, 0, 1, 0], [], []>} : vector<8x8xbf16>, vector<8x8xbf16>, vector<8x8xf32> -> vector<8x8xf32>
    %cst_11 = arith.constant dense<0xFF800000> : vector<8xf32>
    %20 = vector.multi_reduction <maximumf>, %19, %cst_11 [1] : vector<8x8xf32> to vector<8xf32>
    %21 = vector.shape_cast %20 : vector<8xf32> to vector<8x1xf32>
    %22 = vector.broadcast %21 : vector<8x1xf32> to vector<8x8xf32>
    %23 = arith.subf %19, %22 : vector<8x8xf32>
    %24 = math.exp %23 : vector<8x8xf32>
    %cst_12 = arith.constant dense<0.000000e+00> : vector<8xf32>
    %25 = vector.multi_reduction <add>, %24, %cst_12 [1] : vector<8x8xf32> to vector<8xf32>
    %26 = vector.shape_cast %25 : vector<8xf32> to vector<8x1xf32>
    %27 = tpu.reciprocal %26 {approx = true} : vector<8x1xf32> -> vector<8x1xf32>
    %28 = vector.broadcast %27 : vector<8x1xf32> to vector<8x8xf32>
    %29 = arith.mulf %24, %28 : vector<8x8xf32>
    %30 = arith.truncf %29 : vector<8x8xf32> to vector<8x8xbf16>
    %cst_13 = arith.constant dense<0.000000e+00> : vector<8x8xf32>
    %31 = tpu.matmul %30, %18, %cst_13 {dimension_numbers = #tpu.dot_dimension_numbers<[1], [0], [0], [1], [0, 0, 1, 1], [], []>} : vector<8x8xbf16>, vector<8x8xbf16>, vector<8x8xf32> -> vector<8x8xf32>
    %32 = vector.extract_strided_slice %12 {offsets = [0, 8], sizes = [8, 8], strides = [1, 1]} : vector<8x32xf32> to vector<8x8xf32>
    %33 = arith.truncf %32 : vector<8x8xf32> to vector<8x8xbf16>
    %34 = vector.extract_strided_slice %13 {offsets = [0, 8], sizes = [8, 8], strides = [1, 1]} : vector<8x32xbf16> to vector<8x8xbf16>
    %35 = vector.extract_strided_slice %14 {offsets = [0, 8], sizes = [8, 8], strides = [1, 1]} : vector<8x32xbf16> to vector<8x8xbf16>
    %cst_14 = arith.constant dense<0.000000e+00> : vector<8x8xf32>
    %36 = tpu.matmul %33, %34, %cst_14 {dimension_numbers = #tpu.dot_dimension_numbers<[1], [1], [0], [0], [0, 0, 1, 0], [], []>} : vector<8x8xbf16>, vector<8x8xbf16>, vector<8x8xf32> -> vector<8x8xf32>
    %cst_15 = arith.constant dense<0xFF800000> : vector<8xf32>
    %37 = vector.multi_reduction <maximumf>, %36, %cst_15 [1] : vector<8x8xf32> to vector<8xf32>
    %38 = vector.shape_cast %37 : vector<8xf32> to vector<8x1xf32>
    %39 = vector.broadcast %38 : vector<8x1xf32> to vector<8x8xf32>
    %40 = arith.subf %36, %39 : vector<8x8xf32>
    %41 = math.exp %40 : vector<8x8xf32>
    %cst_16 = arith.constant dense<0.000000e+00> : vector<8xf32>
    %42 = vector.multi_reduction <add>, %41, %cst_16 [1] : vector<8x8xf32> to vector<8xf32>
    %43 = vector.shape_cast %42 : vector<8xf32> to vector<8x1xf32>
    %44 = tpu.reciprocal %43 {approx = true} : vector<8x1xf32> -> vector<8x1xf32>
    %45 = vector.broadcast %44 : vector<8x1xf32> to vector<8x8xf32>
    %46 = arith.mulf %41, %45 : vector<8x8xf32>
    %47 = arith.truncf %46 : vector<8x8xf32> to vector<8x8xbf16>
    %cst_17 = arith.constant dense<0.000000e+00> : vector<8x8xf32>
    %48 = tpu.matmul %47, %35, %cst_17 {dimension_numbers = #tpu.dot_dimension_numbers<[1], [0], [0], [1], [0, 0, 1, 1], [], []>} : vector<8x8xbf16>, vector<8x8xbf16>, vector<8x8xf32> -> vector<8x8xf32>
    %49 = vector.extract_strided_slice %12 {offsets = [0, 16], sizes = [8, 8], strides = [1, 1]} : vector<8x32xf32> to vector<8x8xf32>
    %50 = arith.truncf %49 : vector<8x8xf32> to vector<8x8xbf16>
    %51 = vector.extract_strided_slice %13 {offsets = [0, 16], sizes = [8, 8], strides = [1, 1]} : vector<8x32xbf16> to vector<8x8xbf16>
    %52 = vector.extract_strided_slice %14 {offsets = [0, 16], sizes = [8, 8], strides = [1, 1]} : vector<8x32xbf16> to vector<8x8xbf16>
    %cst_18 = arith.constant dense<0.000000e+00> : vector<8x8xf32>
    %53 = tpu.matmul %50, %51, %cst_18 {dimension_numbers = #tpu.dot_dimension_numbers<[1], [1], [0], [0], [0, 0, 1, 0], [], []>} : vector<8x8xbf16>, vector<8x8xbf16>, vector<8x8xf32> -> vector<8x8xf32>
    %cst_19 = arith.constant dense<0xFF800000> : vector<8xf32>
    %54 = vector.multi_reduction <maximumf>, %53, %cst_19 [1] : vector<8x8xf32> to vector<8xf32>
    %55 = vector.shape_cast %54 : vector<8xf32> to vector<8x1xf32>
    %56 = vector.broadcast %55 : vector<8x1xf32> to vector<8x8xf32>
    %57 = arith.subf %53, %56 : vector<8x8xf32>
    %58 = math.exp %57 : vector<8x8xf32>
    %cst_20 = arith.constant dense<0.000000e+00> : vector<8xf32>
    %59 = vector.multi_reduction <add>, %58, %cst_20 [1] : vector<8x8xf32> to vector<8xf32>
    %60 = vector.shape_cast %59 : vector<8xf32> to vector<8x1xf32>
    %61 = tpu.reciprocal %60 {approx = true} : vector<8x1xf32> -> vector<8x1xf32>
    %62 = vector.broadcast %61 : vector<8x1xf32> to vector<8x8xf32>
    %63 = arith.mulf %58, %62 : vector<8x8xf32>
    %64 = arith.truncf %63 : vector<8x8xf32> to vector<8x8xbf16>
    %cst_21 = arith.constant dense<0.000000e+00> : vector<8x8xf32>
    %65 = tpu.matmul %64, %52, %cst_21 {dimension_numbers = #tpu.dot_dimension_numbers<[1], [0], [0], [1], [0, 0, 1, 1], [], []>} : vector<8x8xbf16>, vector<8x8xbf16>, vector<8x8xf32> -> vector<8x8xf32>
    %66 = vector.extract_strided_slice %12 {offsets = [0, 24], sizes = [8, 8], strides = [1, 1]} : vector<8x32xf32> to vector<8x8xf32>
    %67 = arith.truncf %66 : vector<8x8xf32> to vector<8x8xbf16>
    %68 = vector.extract_strided_slice %13 {offsets = [0, 24], sizes = [8, 8], strides = [1, 1]} : vector<8x32xbf16> to vector<8x8xbf16>
    %69 = vector.extract_strided_slice %14 {offsets = [0, 24], sizes = [8, 8], strides = [1, 1]} : vector<8x32xbf16> to vector<8x8xbf16>
    %cst_22 = arith.constant dense<0.000000e+00> : vector<8x8xf32>
    %70 = tpu.matmul %67, %68, %cst_22 {dimension_numbers = #tpu.dot_dimension_numbers<[1], [1], [0], [0], [0, 0, 1, 0], [], []>} : vector<8x8xbf16>, vector<8x8xbf16>, vector<8x8xf32> -> vector<8x8xf32>
    %cst_23 = arith.constant dense<0xFF800000> : vector<8xf32>
    %71 = vector.multi_reduction <maximumf>, %70, %cst_23 [1] : vector<8x8xf32> to vector<8xf32>
    %72 = vector.shape_cast %71 : vector<8xf32> to vector<8x1xf32>
    %73 = vector.broadcast %72 : vector<8x1xf32> to vector<8x8xf32>
    %74 = arith.subf %70, %73 : vector<8x8xf32>
    %75 = math.exp %74 : vector<8x8xf32>
    %cst_24 = arith.constant dense<0.000000e+00> : vector<8xf32>
    %76 = vector.multi_reduction <add>, %75, %cst_24 [1] : vector<8x8xf32> to vector<8xf32>
    %77 = vector.shape_cast %76 : vector<8xf32> to vector<8x1xf32>
    %78 = tpu.reciprocal %77 {approx = true} : vector<8x1xf32> -> vector<8x1xf32>
    %79 = vector.broadcast %78 : vector<8x1xf32> to vector<8x8xf32>
    %80 = arith.mulf %75, %79 : vector<8x8xf32>
    %81 = arith.truncf %80 : vector<8x8xf32> to vector<8x8xbf16>
    %cst_25 = arith.constant dense<0.000000e+00> : vector<8x8xf32>
    %82 = tpu.matmul %81, %69, %cst_25 {dimension_numbers = #tpu.dot_dimension_numbers<[1], [0], [0], [1], [0, 0, 1, 1], [], []>} : vector<8x8xbf16>, vector<8x8xbf16>, vector<8x8xf32> -> vector<8x8xf32>
    %83 = tpu.concatenate %31, %48, %65, %82 in 1 : vector<8x8xf32>, vector<8x8xf32>, vector<8x8xf32>, vector<8x8xf32> -> vector<8x32xf32>
    %84 = arith.truncf %83 : vector<8x32xf32> to vector<8x32xbf16>
    %c0_26 = arith.constant 0 : index
    %c0_27 = arith.constant 0 : index
    %85 = vector.load %arg9[%c0_26, %c0_27] : memref<32x32xbf16, #tpu.memory_space<vmem>>, vector<32x32xbf16>
    %cst_28 = arith.constant dense<0.000000e+00> : vector<8x32xf32>
    %86 = tpu.matmul %84, %85, %cst_28 {dimension_numbers = #tpu.dot_dimension_numbers<[1], [0], [0], [1], [0, 0, 1, 1], [], []>} : vector<8x32xbf16>, vector<32x32xbf16>, vector<8x32xf32> -> vector<8x32xf32>
    %c0_29 = arith.constant 0 : index
    %c0_30 = arith.constant 0 : index
    %87 = vector.load %arg10[%c0_29, %c0_30] : memref<1x32xf32, #tpu.memory_space<vmem>>, vector<1x32xf32>
    %88 = vector.broadcast %87 : vector<1x32xf32> to vector<8x32xf32>
    %89 = arith.addf %86, %88 : vector<8x32xf32>
    %90 = arith.extf %7 : vector<8x32xbf16> to vector<8x32xf32>
    %91 = arith.addf %90, %89 : vector<8x32xf32>
    %c0_31 = arith.constant 0 : index
    %c0_32 = arith.constant 0 : index
    %92 = vector.load %arg11[%c0_31, %c0_32] : memref<1x32xf32, #tpu.memory_space<vmem>>, vector<1x32xf32>
    %c0_33 = arith.constant 0 : index
    %c0_34 = arith.constant 0 : index
    %93 = vector.load %arg12[%c0_33, %c0_34] : memref<1x32xf32, #tpu.memory_space<vmem>>, vector<1x32xf32>
    %cst_35 = arith.constant dense<0.000000e+00> : vector<8xf32>
    %94 = vector.multi_reduction <add>, %91, %cst_35 [1] : vector<8x32xf32> to vector<8xf32>
    %95 = vector.shape_cast %94 : vector<8xf32> to vector<8x1xf32>
    %cst_36 = arith.constant 3.200000e+01 : f32
    %96 = vector.broadcast %cst_36 : f32 to vector<8x1xf32>
    %97 = arith.divf %95, %96 : vector<8x1xf32>
    %98 = vector.broadcast %97 : vector<8x1xf32> to vector<8x32xf32>
    %99 = arith.subf %91, %98 : vector<8x32xf32>
    %100 = arith.mulf %99, %99 : vector<8x32xf32>
    %cst_37 = arith.constant dense<0.000000e+00> : vector<8xf32>
    %101 = vector.multi_reduction <add>, %100, %cst_37 [1] : vector<8x32xf32> to vector<8xf32>
    %102 = vector.shape_cast %101 : vector<8xf32> to vector<8x1xf32>
    %cst_38 = arith.constant 3.200000e+01 : f32
    %103 = vector.broadcast %cst_38 : f32 to vector<8x1xf32>
    %104 = arith.divf %102, %103 : vector<8x1xf32>
    %105 = vector.broadcast %97 : vector<8x1xf32> to vector<8x32xf32>
    %106 = arith.subf %91, %105 : vector<8x32xf32>
    %cst_39 = arith.constant 9.99999974E-6 : f32
    %107 = vector.broadcast %cst_39 : f32 to vector<8x1xf32>
    %108 = arith.addf %104, %107 : vector<8x1xf32>
    %109 = math.rsqrt %108 : vector<8x1xf32>
    %110 = vector.broadcast %109 : vector<8x1xf32> to vector<8x32xf32>
    %111 = arith.mulf %106, %110 : vector<8x32xf32>
    %112 = vector.broadcast %92 : vector<1x32xf32> to vector<8x32xf32>
    %113 = arith.mulf %111, %112 : vector<8x32xf32>
    %114 = vector.broadcast %93 : vector<1x32xf32> to vector<8x32xf32>
    %115 = arith.addf %113, %114 : vector<8x32xf32>
    %116 = arith.truncf %115 : vector<8x32xf32> to vector<8x32xbf16>
    %c0_40 = arith.constant 0 : index
    %c0_41 = arith.constant 0 : index
    %117 = vector.load %arg13[%c0_40, %c0_41] : memref<32x128xbf16, #tpu.memory_space<vmem>>, vector<32x128xbf16>
    %cst_42 = arith.constant dense<0.000000e+00> : vector<8x128xf32>
    %118 = tpu.matmul %116, %117, %cst_42 {dimension_numbers = #tpu.dot_dimension_numbers<[1], [0], [0], [1], [0, 0, 1, 1], [], []>} : vector<8x32xbf16>, vector<32x128xbf16>, vector<8x128xf32> -> vector<8x128xf32>
    %c0_43 = arith.constant 0 : index
    %c0_44 = arith.constant 0 : index
    %119 = vector.load %arg14[%c0_43, %c0_44] : memref<1x128xf32, #tpu.memory_space<vmem>>, vector<1x128xf32>
    %120 = vector.broadcast %119 : vector<1x128xf32> to vector<8x128xf32>
    %121 = arith.addf %118, %120 : vector<8x128xf32>
    %cst_45 = arith.constant 5.000000e-01 : f32
    %122 = vector.broadcast %cst_45 : f32 to vector<8x128xf32>
    %123 = arith.mulf %122, %121 : vector<8x128xf32>
    %cst_46 = arith.constant 0.707106769 : f32
    %124 = vector.broadcast %cst_46 : f32 to vector<8x128xf32>
    %125 = arith.mulf %121, %124 : vector<8x128xf32>
    %126 = math.erf %125 : vector<8x128xf32>
    %cst_47 = arith.constant 1.000000e+00 : f32
    %127 = vector.broadcast %cst_47 : f32 to vector<8x128xf32>
    %128 = arith.addf %127, %126 : vector<8x128xf32>
    %129 = arith.mulf %123, %128 : vector<8x128xf32>
    %130 = arith.truncf %129 : vector<8x128xf32> to vector<8x128xbf16>
    %c0_48 = arith.constant 0 : index
    %c0_49 = arith.constant 0 : index
    %131 = vector.load %arg15[%c0_48, %c0_49] : memref<128x32xbf16, #tpu.memory_space<vmem>>, vector<128x32xbf16>
    %cst_50 = arith.constant dense<0.000000e+00> : vector<8x32xf32>
    %132 = tpu.matmul %130, %131, %cst_50 {dimension_numbers = #tpu.dot_dimension_numbers<[1], [0], [0], [1], [0, 0, 1, 1], [], []>} : vector<8x128xbf16>, vector<128x32xbf16>, vector<8x32xf32> -> vector<8x32xf32>
    %c0_51 = arith.constant 0 : index
    %c0_52 = arith.constant 0 : index
    %133 = vector.load %arg16[%c0_51, %c0_52] : memref<1x32xf32, #tpu.memory_space<vmem>>, vector<1x32xf32>
    %134 = vector.broadcast %133 : vector<1x32xf32> to vector<8x32xf32>
    %135 = arith.addf %132, %134 : vector<8x32xf32>
    %136 = arith.addf %115, %135 : vector<8x32xf32>
    %c0_53 = arith.constant 0 : index
    %c0_54 = arith.constant 0 : index
    %137 = vector.load %arg17[%c0_53, %c0_54] : memref<1x32xf32, #tpu.memory_space<vmem>>, vector<1x32xf32>
    %c0_55 = arith.constant 0 : index
    %c0_56 = arith.constant 0 : index
    %138 = vector.load %arg18[%c0_55, %c0_56] : memref<1x32xf32, #tpu.memory_space<vmem>>, vector<1x32xf32>
    %cst_57 = arith.constant dense<0.000000e+00> : vector<8xf32>
    %139 = vector.multi_reduction <add>, %136, %cst_57 [1] : vector<8x32xf32> to vector<8xf32>
    %140 = vector.shape_cast %139 : vector<8xf32> to vector<8x1xf32>
    %cst_58 = arith.constant 3.200000e+01 : f32
    %141 = vector.broadcast %cst_58 : f32 to vector<8x1xf32>
    %142 = arith.divf %140, %141 : vector<8x1xf32>
    %143 = vector.broadcast %142 : vector<8x1xf32> to vector<8x32xf32>
    %144 = arith.subf %136, %143 : vector<8x32xf32>
    %145 = arith.mulf %144, %144 : vector<8x32xf32>
    %cst_59 = arith.constant dense<0.000000e+00> : vector<8xf32>
    %146 = vector.multi_reduction <add>, %145, %cst_59 [1] : vector<8x32xf32> to vector<8xf32>
    %147 = vector.shape_cast %146 : vector<8xf32> to vector<8x1xf32>
    %cst_60 = arith.constant 3.200000e+01 : f32
    %148 = vector.broadcast %cst_60 : f32 to vector<8x1xf32>
    %149 = arith.divf %147, %148 : vector<8x1xf32>
    %150 = vector.broadcast %142 : vector<8x1xf32> to vector<8x32xf32>
    %151 = arith.subf %136, %150 : vector<8x32xf32>
    %cst_61 = arith.constant 9.99999974E-6 : f32
    %152 = vector.broadcast %cst_61 : f32 to vector<8x1xf32>
    %153 = arith.addf %149, %152 : vector<8x1xf32>
    %154 = math.rsqrt %153 : vector<8x1xf32>
    %155 = vector.broadcast %154 : vector<8x1xf32> to vector<8x32xf32>
    %156 = arith.mulf %151, %155 : vector<8x32xf32>
    %157 = vector.broadcast %137 : vector<1x32xf32> to vector<8x32xf32>
    %158 = arith.mulf %156, %157 : vector<8x32xf32>
    %159 = vector.broadcast %138 : vector<1x32xf32> to vector<8x32xf32>
    %160 = arith.addf %158, %159 : vector<8x32xf32>
    %c0_62 = arith.constant 0 : index
    %c0_63 = arith.constant 0 : index
    %c0_64 = arith.constant 0 : index
    %161 = vector.load %arg19[%c0_62, %c0_63, %c0_64] : memref<1x8x32xf32, #tpu.memory_space<vmem>>, vector<1x8x32xf32>
    %162 = vector.shape_cast %161 : vector<1x8x32xf32> to vector<8x32xf32>
    %163 = vector.shape_cast %160 : vector<8x32xf32> to vector<1x8x32xf32>
    tpu.vector_store %arg19[%c0_62, %c0_63, %c0_64], %163 {strides = array<i32>} : memref<1x8x32xf32, #tpu.memory_space<vmem>>, vector<1x8x32xf32>,
    return
  }
  func.func @transform_0(%arg0: i32, %arg1: i32) -> (i32, i32, i32) {
    %c0_i32 = arith.constant 0 : i32
    %c0_i32_0 = arith.constant 0 : i32
    %c0_i32_1 = arith.constant 0 : i32
    return %arg0, %c0_i32, %c0_i32_0 : i32, i32, i32
  }
  func.func @transform_1(%arg0: i32, %arg1: i32) -> (i32, i32) {
    %c0_i32 = arith.constant 0 : i32
    %c0_i32_0 = arith.constant 0 : i32
    %c0_i32_1 = arith.constant 0 : i32
    return %c0_i32, %c0_i32_0 : i32, i32
  }
  func.func @transform_2(%arg0: i32, %arg1: i32) -> (i32, i32) {
    %c0_i32 = arith.constant 0 : i32
    %c0_i32_0 = arith.constant 0 : i32
    %c0_i32_1 = arith.constant 0 : i32
    return %c0_i32, %c0_i32_0 : i32, i32
  }
  func.func @transform_3(%arg0: i32, %arg1: i32) -> (i32, i32) {
    %c0_i32 = arith.constant 0 : i32
    %c0_i32_0 = arith.constant 0 : i32
    %c0_i32_1 = arith.constant 0 : i32
    return %c0_i32, %c0_i32_0 : i32, i32
  }
  func.func @transform_4(%arg0: i32, %arg1: i32) -> (i32, i32) {
    %c0_i32 = arith.constant 0 : i32
    %c0_i32_0 = arith.constant 0 : i32
    %c0_i32_1 = arith.constant 0 : i32
    return %c0_i32, %c0_i32_0 : i32, i32
  }
  func.func @transform_5(%arg0: i32, %arg1: i32) -> (i32, i32) {
    %c0_i32 = arith.constant 0 : i32
    %c0_i32_0 = arith.constant 0 : i32
    %c0_i32_1 = arith.constant 0 : i32
    return %c0_i32, %c0_i32_0 : i32, i32
  }
  func.func @transform_6(%arg0: i32, %arg1: i32) -> (i32, i32) {
    %c0_i32 = arith.constant 0 : i32
    %c0_i32_0 = arith.constant 0 : i32
    %c0_i32_1 = arith.constant 0 : i32
    return %c0_i32, %c0_i32_0 : i32, i32
  }
  func.func @transform_7(%arg0: i32, %arg1: i32) -> (i32, i32) {
    %c0_i32 = arith.constant 0 : i32
    %c0_i32_0 = arith.constant 0 : i32
    %c0_i32_1 = arith.constant 0 : i32
    return %c0_i32, %c0_i32_0 : i32, i32
  }
  func.func @transform_8(%arg0: i32, %arg1: i32) -> (i32, i32) {
    %c0_i32 = arith.constant 0 : i32
    %c0_i32_0 = arith.constant 0 : i32
    %c0_i32_1 = arith.constant 0 : i32
    return %c0_i32, %c0_i32_0 : i32, i32
  }
  func.func @transform_9(%arg0: i32, %arg1: i32) -> (i32, i32) {
    %c0_i32 = arith.constant 0 : i32
    %c0_i32_0 = arith.constant 0 : i32
    %c0_i32_1 = arith.constant 0 : i32
    return %c0_i32, %c0_i32_0 : i32, i32
  }
  func.func @transform_10(%arg0: i32, %arg1: i32) -> (i32, i32) {
    %c0_i32 = arith.constant 0 : i32
    %c0_i32_0 = arith.constant 0 : i32
    %c0_i32_1 = arith.constant 0 : i32
    return %c0_i32, %c0_i32_0 : i32, i32
  }
  func.func @transform_11(%arg0: i32, %arg1: i32) -> (i32, i32) {
    %c0_i32 = arith.constant 0 : i32
    %c0_i32_0 = arith.constant 0 : i32
    %c0_i32_1 = arith.constant 0 : i32
    return %c0_i32, %c0_i32_0 : i32, i32
  }
  func.func @transform_12(%arg0: i32, %arg1: i32) -> (i32, i32) {
    %c0_i32 = arith.constant 0 : i32
    %c0_i32_0 = arith.constant 0 : i32
    %c0_i32_1 = arith.constant 0 : i32
    return %c0_i32, %c0_i32_0 : i32, i32
  }
  func.func @transform_13(%arg0: i32, %arg1: i32) -> (i32, i32) {
    %c0_i32 = arith.constant 0 : i32
    %c0_i32_0 = arith.constant 0 : i32
    %c0_i32_1 = arith.constant 0 : i32
    return %c0_i32, %c0_i32_0 : i32, i32
  }
  func.func @transform_14(%arg0: i32, %arg1: i32) -> (i32, i32) {
    %c0_i32 = arith.constant 0 : i32
    %c0_i32_0 = arith.constant 0 : i32
    %c0_i32_1 = arith.constant 0 : i32
    return %c0_i32, %c0_i32_0 : i32, i32
  }
  func.func @transform_15(%arg0: i32, %arg1: i32) -> (i32, i32) {
    %c0_i32 = arith.constant 0 : i32
    %c0_i32_0 = arith.constant 0 : i32
    %c0_i32_1 = arith.constant 0 : i32
    return %c0_i32, %c0_i32_0 : i32, i32
  }
  func.func @transform_16(%arg0: i32, %arg1: i32) -> (i32, i32) {
    %c0_i32 = arith.constant 0 : i32
    %c0_i32_0 = arith.constant 0 : i32
    %c0_i32_1 = arith.constant 0 : i32
    return %c0_i32, %c0_i32_0 : i32, i32
  }
  func.func @transform_17(%arg0: i32, %arg1: i32) -> (i32, i32, i32) {
    %c0_i32 = arith.constant 0 : i32
    %c0_i32_0 = arith.constant 0 : i32
    return %arg0, %arg1, %c0_i32 : i32, i32, i32
  }
}

module attributes {stable_mosaic.version = 11 : i64} {
  func.func @attention_block_kernel(%arg0: i32, %arg1: i32, %arg2: memref<1x8x32xbf16, #tpu.memory_space<vmem>>, %arg3: memref<32x32xbf16, #tpu.memory_space<vmem>>, %arg4: memref<1x32xf32, #tpu.memory_space<vmem>>, %arg5: memref<32x32xbf16, #tpu.memory_space<vmem>>, %arg6: memref<1x32xf32, #tpu.memory_space<vmem>>, %arg7: memref<32x32xbf16, #tpu.memory_space<vmem>>, %arg8: memref<1x32xf32, #tpu.memory_space<vmem>>, %arg9: memref<32x32xbf16, #tpu.memory_space<vmem>>, %arg10: memref<1x32xf32, #tpu.memory_space<vmem>>, %arg11: memref<1x32xf32, #tpu.memory_space<vmem>>, %arg12: memref<1x32xf32, #tpu.memory_space<vmem>>, %arg13: memref<32x128xbf16, #tpu.memory_space<vmem>>, %arg14: memref<1x128xf32, #tpu.memory_space<vmem>>, %arg15: memref<128x32xbf16, #tpu.memory_space<vmem>>, %arg16: memref<1x32xf32, #tpu.memory_space<vmem>>, %arg17: memref<1x32xf32, #tpu.memory_space<vmem>>, %arg18: memref<1x32xf32, #tpu.memory_space<vmem>>, %arg19: memref<1x8x32xf32, #tpu.memory_space<vmem>>, %arg20: memref<8x32xbf16, #tpu.memory_space<vmem>>, %arg21: memref<8x32xbf16, #tpu.memory_space<vmem>>) attributes {dimension_semantics = [#tpu.dimension_semantics<parallel>, #tpu.dimension_semantics<arbitrary>], iteration_bounds = array<i64: 2, 1>, scalar_prefetch = 0 : i64, scratch_operands = 2 : i64, tpu.core_type = #tpu.core_type<tc>, window_params = [{transform_indices = @transform_0, window_bounds = array<i64: 1, 8, 32>}, {pipeline_mode = #tpu.pipeline_mode<synchronous>, transform_indices = @transform_1, window_bounds = array<i64: 32, 32>}, {pipeline_mode = #tpu.pipeline_mode<synchronous>, transform_indices = @transform_2, window_bounds = array<i64: 1, 32>}, {pipeline_mode = #tpu.pipeline_mode<synchronous>, transform_indices = @transform_3, window_bounds = array<i64: 32, 32>}, {pipeline_mode = #tpu.pipeline_mode<synchronous>, transform_indices = @transform_4, window_bounds = array<i64: 1, 32>}, {pipeline_mode = #tpu.pipeline_mode<synchronous>, transform_indices = @transform_5, window_bounds = array<i64: 32, 32>}, {pipeline_mode = #tpu.pipeline_mode<synchronous>, transform_indices = @transform_6, window_bounds = array<i64: 1, 32>}, {pipeline_mode = #tpu.pipeline_mode<synchronous>, transform_indices = @transform_7, window_bounds = array<i64: 32, 32>}, {pipeline_mode = #tpu.pipeline_mode<synchronous>, transform_indices = @transform_8, window_bounds = array<i64: 1, 32>}, {pipeline_mode = #tpu.pipeline_mode<synchronous>, transform_indices = @transform_9, window_bounds = array<i64: 1, 32>}, {pipeline_mode = #tpu.pipeline_mode<synchronous>, transform_indices = @transform_10, window_bounds = array<i64: 1, 32>}, {pipeline_mode = #tpu.pipeline_mode<synchronous>, transform_indices = @transform_11, window_bounds = array<i64: 32, 128>}, {pipeline_mode = #tpu.pipeline_mode<synchronous>, transform_indices = @transform_12, window_bounds = array<i64: 1, 128>}, {pipeline_mode = #tpu.pipeline_mode<synchronous>, transform_indices = @transform_13, window_bounds = array<i64: 128, 32>}, {pipeline_mode = #tpu.pipeline_mode<synchronous>, transform_indices = @transform_14, window_bounds = array<i64: 1, 32>}, {pipeline_mode = #tpu.pipeline_mode<synchronous>, transform_indices = @transform_15, window_bounds = array<i64: 1, 32>}, {pipeline_mode = #tpu.pipeline_mode<synchronous>, transform_indices = @transform_16, window_bounds = array<i64: 1, 32>}, {transform_indices = @transform_17, window_bounds = array<i64: 1, 8, 32>}]} {
    %c0_i32 = arith.constant 0 : i32
    %0 = arith.cmpi eq, %arg1, %c0_i32 : i32
    %1 = arith.extui %0 : i1 to i32
    %c0_i32_0 = arith.constant 0 : i32
    %2 = arith.cmpi ne, %1, %c0_i32_0 : i32
    scf.if %2 {
      %c0_65 = arith.constant 0 : index
      %c0_66 = arith.constant 0 : index
      %c0_67 = arith.constant 0 : index
      %164 = vector.load %arg2[%c0_65, %c0_66, %c0_67] : memref<1x8x32xbf16, #tpu.memory_space<vmem>>, vector<1x8x32xbf16>
      %165 = vector.shape_cast %164 : vector<1x8x32xbf16> to vector<8x32xbf16>
      %c0_68 = arith.constant 0 : index
      %c0_69 = arith.constant 0 : index
      %166 = vector.load %arg5[%c0_68, %c0_69] : memref<32x32xbf16, #tpu.memory_space<vmem>>, vector<32x32xbf16>
      %cst_70 = arith.constant dense<0.000000e+00> : vector<8x32xf32>
      %167 = tpu.matmul %165, %166, %cst_70 {dimension_numbers = #tpu.dot_dimension_numbers<[1], [0], [0], [1], [0, 0, 1, 1], [], []>} : vector<8x32xbf16>, vector<32x32xbf16>, vector<8x32xf32> -> vector<8x32xf32>
      %c0_71 = arith.constant 0 : index
      %c0_72 = arith.constant 0 : index
      %168 = vector.load %arg6[%c0_71, %c0_72] : memref<1x32xf32, #tpu.memory_space<vmem>>, vector<1x32xf32>
      %169 = vector.broadcast %168 : vector<1x32xf32> to vector<8x32xf32>
      %170 = arith.addf %167, %169 : vector<8x32xf32>
      %171 = arith.truncf %170 : vector<8x32xf32> to vector<8x32xbf16>
      %c0_73 = arith.constant 0 : index
      %c0_74 = arith.constant 0 : index
      %172 = vector.load %arg20[%c0_73, %c0_74] : memref<8x32xbf16, #tpu.memory_space<vmem>>, vector<8x32xbf16>
      tpu.vector_store %arg20[%c0_73, %c0_74], %171 {strides = array<i32>} : memref<8x32xbf16, #tpu.memory_space<vmem>>, vector<8x32xbf16>,
      %c0_75 = arith.constant 0 : index
      %c0_76 = arith.constant 0 : index
      %173 = vector.load %arg7[%c0_75, %c0_76] : memref<32x32xbf16, #tpu.memory_space<vmem>>, vector<32x32xbf16>
      %cst_77 = arith.constant dense<0.000000e+00> : vector<8x32xf32>
      %174 = tpu.matmul %165, %173, %cst_77 {dimension_numbers = #tpu.dot_dimension_numbers<[1], [0], [0], [1], [0, 0, 1, 1], [], []>} : vector<8x32xbf16>, vector<32x32xbf16>, vector<8x32xf32> -> vector<8x32xf32>
      %c0_78 = arith.constant 0 : index
      %c0_79 = arith.constant 0 : index
      %175 = vector.load %arg8[%c0_78, %c0_79] : memref<1x32xf32, #tpu.memory_space<vmem>>, vector<1x32xf32>
      %176 = vector.broadcast %175 : vector<1x32xf32> to vector<8x32xf32>
      %177 = arith.addf %174, %176 : vector<8x32xf32>
      %178 = arith.truncf %177 : vector<8x32xf32> to vector<8x32xbf16>
      %c0_80 = arith.constant 0 : index
      %c0_81 = arith.constant 0 : index
      %179 = vector.load %arg21[%c0_80, %c0_81] : memref<8x32xbf16, #tpu.memory_space<vmem>>, vector<8x32xbf16>
      tpu.vector_store %arg21[%c0_80, %c0_81], %178 {strides = array<i32>} : memref<8x32xbf16, #tpu.memory_space<vmem>>, vector<8x32xbf16>,
    } else {
    }
    %c8_i32 = arith.constant 8 : i32
    %3 = arith.muli %arg1, %c8_i32 : i32
    %4 = tpu.assume_multiple %3, 8 : i32
    %c0 = arith.constant 0 : index
    %5 = arith.index_cast %4 : i32 to index
    %c0_1 = arith.constant 0 : index
    %6 = vector.load %arg2[%c0, %5, %c0_1] : memref<1x8x32xbf16, #tpu.memory_space<vmem>>, vector<1x8x32xbf16>
    %7 = vector.shape_cast %6 : vector<1x8x32xbf16> to vector<8x32xbf16>
    %c0_2 = arith.constant 0 : index
    %c0_3 = arith.constant 0 : index
    %8 = vector.load %arg3[%c0_2, %c0_3] : memref<32x32xbf16, #tpu.memory_space<vmem>>, vector<32x32xbf16>
    %cst = arith.constant dense<0.000000e+00> : vector<8x32xf32>
    %9 = tpu.matmul %7, %8, %cst {dimension_numbers = #tpu.dot_dimension_numbers<[1], [0], [0], [1], [0, 0, 1, 1], [], []>} : vector<8x32xbf16>, vector<32x32xbf16>, vector<8x32xf32> -> vector<8x32xf32>
    %c0_4 = arith.constant 0 : index
    %c0_5 = arith.constant 0 : index
    %10 = vector.load %arg4[%c0_4, %c0_5] : memref<1x32xf32, #tpu.memory_space<vmem>>, vector<1x32xf32>
    %11 = vector.broadcast %10 : vector<1x32xf32> to vector<8x32xf32>
    %12 = arith.addf %9, %11 : vector<8x32xf32>
    %c0_6 = arith.constant 0 : index
    %c0_7 = arith.constant 0 : index
    %13 = vector.load %arg20[%c0_6, %c0_7] : memref<8x32xbf16, #tpu.memory_space<vmem>>, vector<8x32xbf16>
    %c0_8 = arith.constant 0 : index
    %c0_9 = arith.constant 0 : index
    %14 = vector.load %arg21[%c0_8, %c0_9] : memref<8x32xbf16, #tpu.memory_space<vmem>>, vector<8x32xbf16>
    %15 = vector.extract_strided_slice %12 {offsets = [0, 0], sizes = [8, 8], strides = [1, 1]} : vector<8x32xf32> to vector<8x8xf32>
    %16 = arith.truncf %15 : vector<8x8xf32> to vector<8x8xbf16>
    %17 = vector.extract_strided_slice %13 {offsets = [0, 0], sizes = [8, 8], strides = [1, 1]} : vector<8x32xbf16> to vector<8x8xbf16>
    %18 = vector.extract_strided_slice %14 {offsets = [0, 0], sizes = [8, 8], strides = [1, 1]} : vector<8x32xbf16> to vector<8x8xbf16>
    %cst_10 = arith.constant dense<0.000000e+00> : vector<8x8xf32>
    %19 = tpu.matmul %16, %17, %cst_10 {dimension_numbers = #tpu.dot_dimension_numbers<[1], [1], [0], [0], [0, 0, 1, 0], [], []>} : vector<8x8xbf16>, vector<8x8xbf16>, vector<8x8xf32> -> vector<8x8xf32>
    %cst_11 = arith.constant dense<0xFF800000> : vector<8xf32>
    %20 = vector.multi_reduction <maximumf>, %19, %cst_11 [1] : vector<8x8xf32> to vector<8xf32>
    %21 = vector.shape_cast %20 : vector<8xf32> to vector<8x1xf32>
    %22 = vector.broadcast %21 : vector<8x1xf32> to vector<8x8xf32>
    %23 = arith.subf %19, %22 : vector<8x8xf32>
    %24 = math.exp %23 : vector<8x8xf32>
    %cst_12 = arith.constant dense<0.000000e+00> : vector<8xf32>
    %25 = vector.multi_reduction <add>, %24, %cst_12 [1] : vector<8x8xf32> to vector<8xf32>
    %26 = vector.shape_cast %25 : vector<8xf32> to vector<8x1xf32>
    %27 = tpu.reciprocal %26 {approx = true} : vector<8x1xf32> -> vector<8x1xf32>
    %28 = vector.broadcast %27 : vector<8x1xf32> to vector<8x8xf32>
    %29 = arith.mulf %24, %28 : vector<8x8xf32>
    %30 = arith.truncf %29 : vector<8x8xf32> to vector<8x8xbf16>
    %cst_13 = arith.constant dense<0.000000e+00> : vector<8x8xf32>
    %31 = tpu.matmul %30, %18, %cst_13 {dimension_numbers = #tpu.dot_dimension_numbers<[1], [0], [0], [1], [0, 0, 1, 1], [], []>} : vector<8x8xbf16>, vector<8x8xbf16>, vector<8x8xf32> -> vector<8x8xf32>
    %32 = vector.extract_strided_slice %12 {offsets = [0, 8], sizes = [8, 8], strides = [1, 1]} : vector<8x32xf32> to vector<8x8xf32>
    %33 = arith.truncf %32 : vector<8x8xf32> to vector<8x8xbf16>
    %34 = vector.extract_strided_slice %13 {offsets = [0, 8], sizes = [8, 8], strides = [1, 1]} : vector<8x32xbf16> to vector<8x8xbf16>
    %35 = vector.extract_strided_slice %14 {offsets = [0, 8], sizes = [8, 8], strides = [1, 1]} : vector<8x32xbf16> to vector<8x8xbf16>
    %cst_14 = arith.constant dense<0.000000e+00> : vector<8x8xf32>
    %36 = tpu.matmul %33, %34, %cst_14 {dimension_numbers = #tpu.dot_dimension_numbers<[1], [1], [0], [0], [0, 0, 1, 0], [], []>} : vector<8x8xbf16>, vector<8x8xbf16>, vector<8x8xf32> -> vector<8x8xf32>
    %cst_15 = arith.constant dense<0xFF800000> : vector<8xf32>
    %37 = vector.multi_reduction <maximumf>, %36, %cst_15 [1] : vector<8x8xf32> to vector<8xf32>
    %38 = vector.shape_cast %37 : vector<8xf32> to vector<8x1xf32>
    %39 = vector.broadcast %38 : vector<8x1xf32> to vector<8x8xf32>
    %40 = arith.subf %36, %39 : vector<8x8xf32>
    %41 = math.exp %40 : vector<8x8xf32>
    %cst_16 = arith.constant dense<0.000000e+00> : vector<8xf32>
    %42 = vector.multi_reduction <add>, %41, %cst_16 [1] : vector<8x8xf32> to vector<8xf32>
    %43 = vector.shape_cast %42 : vector<8xf32> to vector<8x1xf32>
    %44 = tpu.reciprocal %43 {approx = true} : vector<8x1xf32> -> vector<8x1xf32>
    %45 = vector.broadcast %44 : vector<8x1xf32> to vector<8x8xf32>
    %46 = arith.mulf %41, %45 : vector<8x8xf32>
    %47 = arith.truncf %46 : vector<8x8xf32> to vector<8x8xbf16>
    %cst_17 = arith.constant dense<0.000000e+00> : vector<8x8xf32>
    %48 = tpu.matmul %47, %35, %cst_17 {dimension_numbers = #tpu.dot_dimension_numbers<[1], [0], [0], [1], [0, 0, 1, 1], [], []>} : vector<8x8xbf16>, vector<8x8xbf16>, vector<8x8xf32> -> vector<8x8xf32>
    %49 = vector.extract_strided_slice %12 {offsets = [0, 16], sizes = [8, 8], strides = [1, 1]} : vector<8x32xf32> to vector<8x8xf32>
    %50 = arith.truncf %49 : vector<8x8xf32> to vector<8x8xbf16>
    %51 = vector.extract_strided_slice %13 {offsets = [0, 16], sizes = [8, 8], strides = [1, 1]} : vector<8x32xbf16> to vector<8x8xbf16>
    %52 = vector.extract_strided_slice %14 {offsets = [0, 16], sizes = [8, 8], strides = [1, 1]} : vector<8x32xbf16> to vector<8x8xbf16>
    %cst_18 = arith.constant dense<0.000000e+00> : vector<8x8xf32>
    %53 = tpu.matmul %50, %51, %cst_18 {dimension_numbers = #tpu.dot_dimension_numbers<[1], [1], [0], [0], [0, 0, 1, 0], [], []>} : vector<8x8xbf16>, vector<8x8xbf16>, vector<8x8xf32> -> vector<8x8xf32>
    %cst_19 = arith.constant dense<0xFF800000> : vector<8xf32>
    %54 = vector.multi_reduction <maximumf>, %53, %cst_19 [1] : vector<8x8xf32> to vector<8xf32>
    %55 = vector.shape_cast %54 : vector<8xf32> to vector<8x1xf32>
    %56 = vector.broadcast %55 : vector<8x1xf32> to vector<8x8xf32>
    %57 = arith.subf %53, %56 : vector<8x8xf32>
    %58 = math.exp %57 : vector<8x8xf32>
    %cst_20 = arith.constant dense<0.000000e+00> : vector<8xf32>
    %59 = vector.multi_reduction <add>, %58, %cst_20 [1] : vector<8x8xf32> to vector<8xf32>
    %60 = vector.shape_cast %59 : vector<8xf32> to vector<8x1xf32>
    %61 = tpu.reciprocal %60 {approx = true} : vector<8x1xf32> -> vector<8x1xf32>
    %62 = vector.broadcast %61 : vector<8x1xf32> to vector<8x8xf32>
    %63 = arith.mulf %58, %62 : vector<8x8xf32>
    %64 = arith.truncf %63 : vector<8x8xf32> to vector<8x8xbf16>
    %cst_21 = arith.constant dense<0.000000e+00> : vector<8x8xf32>
    %65 = tpu.matmul %64, %52, %cst_21 {dimension_numbers = #tpu.dot_dimension_numbers<[1], [0], [0], [1], [0, 0, 1, 1], [], []>} : vector<8x8xbf16>, vector<8x8xbf16>, vector<8x8xf32> -> vector<8x8xf32>
    %66 = vector.extract_strided_slice %12 {offsets = [0, 24], sizes = [8, 8], strides = [1, 1]} : vector<8x32xf32> to vector<8x8xf32>
    %67 = arith.truncf %66 : vector<8x8xf32> to vector<8x8xbf16>
    %68 = vector.extract_strided_slice %13 {offsets = [0, 24], sizes = [8, 8], strides = [1, 1]} : vector<8x32xbf16> to vector<8x8xbf16>
    %69 = vector.extract_strided_slice %14 {offsets = [0, 24], sizes = [8, 8], strides = [1, 1]} : vector<8x32xbf16> to vector<8x8xbf16>
    %cst_22 = arith.constant dense<0.000000e+00> : vector<8x8xf32>
    %70 = tpu.matmul %67, %68, %cst_22 {dimension_numbers = #tpu.dot_dimension_numbers<[1], [1], [0], [0], [0, 0, 1, 0], [], []>} : vector<8x8xbf16>, vector<8x8xbf16>, vector<8x8xf32> -> vector<8x8xf32>
    %cst_23 = arith.constant dense<0xFF800000> : vector<8xf32>
    %71 = vector.multi_reduction <maximumf>, %70, %cst_23 [1] : vector<8x8xf32> to vector<8xf32>
    %72 = vector.shape_cast %71 : vector<8xf32> to vector<8x1xf32>
    %73 = vector.broadcast %72 : vector<8x1xf32> to vector<8x8xf32>
    %74 = arith.subf %70, %73 : vector<8x8xf32>
    %75 = math.exp %74 : vector<8x8xf32>
    %cst_24 = arith.constant dense<0.000000e+00> : vector<8xf32>
    %76 = vector.multi_reduction <add>, %75, %cst_24 [1] : vector<8x8xf32> to vector<8xf32>
    %77 = vector.shape_cast %76 : vector<8xf32> to vector<8x1xf32>
    %78 = tpu.reciprocal %77 {approx = true} : vector<8x1xf32> -> vector<8x1xf32>
    %79 = vector.broadcast %78 : vector<8x1xf32> to vector<8x8xf32>
    %80 = arith.mulf %75, %79 : vector<8x8xf32>
    %81 = arith.truncf %80 : vector<8x8xf32> to vector<8x8xbf16>
    %cst_25 = arith.constant dense<0.000000e+00> : vector<8x8xf32>
    %82 = tpu.matmul %81, %69, %cst_25 {dimension_numbers = #tpu.dot_dimension_numbers<[1], [0], [0], [1], [0, 0, 1, 1], [], []>} : vector<8x8xbf16>, vector<8x8xbf16>, vector<8x8xf32> -> vector<8x8xf32>
    %83 = tpu.concatenate %31, %48, %65, %82 in 1 : vector<8x8xf32>, vector<8x8xf32>, vector<8x8xf32>, vector<8x8xf32> -> vector<8x32xf32>
    %84 = arith.truncf %83 : vector<8x32xf32> to vector<8x32xbf16>
    %c0_26 = arith.constant 0 : index
    %c0_27 = arith.constant 0 : index
    %85 = vector.load %arg9[%c0_26, %c0_27] : memref<32x32xbf16, #tpu.memory_space<vmem>>, vector<32x32xbf16>
    %cst_28 = arith.constant dense<0.000000e+00> : vector<8x32xf32>
    %86 = tpu.matmul %84, %85, %cst_28 {dimension_numbers = #tpu.dot_dimension_numbers<[1], [0], [0], [1], [0, 0, 1, 1], [], []>} : vector<8x32xbf16>, vector<32x32xbf16>, vector<8x32xf32> -> vector<8x32xf32>
    %c0_29 = arith.constant 0 : index
    %c0_30 = arith.constant 0 : index
    %87 = vector.load %arg10[%c0_29, %c0_30] : memref<1x32xf32, #tpu.memory_space<vmem>>, vector<1x32xf32>
    %88 = vector.broadcast %87 : vector<1x32xf32> to vector<8x32xf32>
    %89 = arith.addf %86, %88 : vector<8x32xf32>
    %90 = arith.extf %7 : vector<8x32xbf16> to vector<8x32xf32>
    %91 = arith.addf %90, %89 : vector<8x32xf32>
    %c0_31 = arith.constant 0 : index
    %c0_32 = arith.constant 0 : index
    %92 = vector.load %arg11[%c0_31, %c0_32] : memref<1x32xf32, #tpu.memory_space<vmem>>, vector<1x32xf32>
    %c0_33 = arith.constant 0 : index
    %c0_34 = arith.constant 0 : index
    %93 = vector.load %arg12[%c0_33, %c0_34] : memref<1x32xf32, #tpu.memory_space<vmem>>, vector<1x32xf32>
    %cst_35 = arith.constant dense<0.000000e+00> : vector<8xf32>
    %94 = vector.multi_reduction <add>, %91, %cst_35 [1] : vector<8x32xf32> to vector<8xf32>
    %95 = vector.shape_cast %94 : vector<8xf32> to vector<8x1xf32>
    %cst_36 = arith.constant 3.200000e+01 : f32
    %96 = vector.broadcast %cst_36 : f32 to vector<8x1xf32>
    %97 = arith.divf %95, %96 : vector<8x1xf32>
    %98 = vector.broadcast %97 : vector<8x1xf32> to vector<8x32xf32>
    %99 = arith.subf %91, %98 : vector<8x32xf32>
    %100 = arith.mulf %99, %99 : vector<8x32xf32>
    %cst_37 = arith.constant dense<0.000000e+00> : vector<8xf32>
    %101 = vector.multi_reduction <add>, %100, %cst_37 [1] : vector<8x32xf32> to vector<8xf32>
    %102 = vector.shape_cast %101 : vector<8xf32> to vector<8x1xf32>
    %cst_38 = arith.constant 3.200000e+01 : f32
    %103 = vector.broadcast %cst_38 : f32 to vector<8x1xf32>
    %104 = arith.divf %102, %103 : vector<8x1xf32>
    %105 = vector.broadcast %97 : vector<8x1xf32> to vector<8x32xf32>
    %106 = arith.subf %91, %105 : vector<8x32xf32>
    %cst_39 = arith.constant 9.99999974E-6 : f32
    %107 = vector.broadcast %cst_39 : f32 to vector<8x1xf32>
    %108 = arith.addf %104, %107 : vector<8x1xf32>
    %109 = math.rsqrt %108 : vector<8x1xf32>
    %110 = vector.broadcast %109 : vector<8x1xf32> to vector<8x32xf32>
    %111 = arith.mulf %106, %110 : vector<8x32xf32>
    %112 = vector.broadcast %92 : vector<1x32xf32> to vector<8x32xf32>
    %113 = arith.mulf %111, %112 : vector<8x32xf32>
    %114 = vector.broadcast %93 : vector<1x32xf32> to vector<8x32xf32>
    %115 = arith.addf %113, %114 : vector<8x32xf32>
    %116 = arith.truncf %115 : vector<8x32xf32> to vector<8x32xbf16>
    %c0_40 = arith.constant 0 : index
    %c0_41 = arith.constant 0 : index
    %117 = vector.load %arg13[%c0_40, %c0_41] : memref<32x128xbf16, #tpu.memory_space<vmem>>, vector<32x128xbf16>
    %cst_42 = arith.constant dense<0.000000e+00> : vector<8x128xf32>
    %118 = tpu.matmul %116, %117, %cst_42 {dimension_numbers = #tpu.dot_dimension_numbers<[1], [0], [0], [1], [0, 0, 1, 1], [], []>} : vector<8x32xbf16>, vector<32x128xbf16>, vector<8x128xf32> -> vector<8x128xf32>
    %c0_43 = arith.constant 0 : index
    %c0_44 = arith.constant 0 : index
    %119 = vector.load %arg14[%c0_43, %c0_44] : memref<1x128xf32, #tpu.memory_space<vmem>>, vector<1x128xf32>
    %120 = vector.broadcast %119 : vector<1x128xf32> to vector<8x128xf32>
    %121 = arith.addf %118, %120 : vector<8x128xf32>
    %cst_45 = arith.constant 5.000000e-01 : f32
    %122 = vector.broadcast %cst_45 : f32 to vector<8x128xf32>
    %123 = arith.mulf %122, %121 : vector<8x128xf32>
    %cst_46 = arith.constant 0.707106769 : f32
    %124 = vector.broadcast %cst_46 : f32 to vector<8x128xf32>
    %125 = arith.mulf %121, %124 : vector<8x128xf32>
    %126 = math.erf %125 : vector<8x128xf32>
    %cst_47 = arith.constant 1.000000e+00 : f32
    %127 = vector.broadcast %cst_47 : f32 to vector<8x128xf32>
    %128 = arith.addf %127, %126 : vector<8x128xf32>
    %129 = arith.mulf %123, %128 : vector<8x128xf32>
    %130 = arith.truncf %129 : vector<8x128xf32> to vector<8x128xbf16>
    %c0_48 = arith.constant 0 : index
    %c0_49 = arith.constant 0 : index
    %131 = vector.load %arg15[%c0_48, %c0_49] : memref<128x32xbf16, #tpu.memory_space<vmem>>, vector<128x32xbf16>
    %cst_50 = arith.constant dense<0.000000e+00> : vector<8x32xf32>
    %132 = tpu.matmul %130, %131, %cst_50 {dimension_numbers = #tpu.dot_dimension_numbers<[1], [0], [0], [1], [0, 0, 1, 1], [], []>} : vector<8x128xbf16>, vector<128x32xbf16>, vector<8x32xf32> -> vector<8x32xf32>
    %c0_51 = arith.constant 0 : index
    %c0_52 = arith.constant 0 : index
    %133 = vector.load %arg16[%c0_51, %c0_52] : memref<1x32xf32, #tpu.memory_space<vmem>>, vector<1x32xf32>
    %134 = vector.broadcast %133 : vector<1x32xf32> to vector<8x32xf32>
    %135 = arith.addf %132, %134 : vector<8x32xf32>
    %136 = arith.addf %115, %135 : vector<8x32xf32>
    %c0_53 = arith.constant 0 : index
    %c0_54 = arith.constant 0 : index
    %137 = vector.load %arg17[%c0_53, %c0_54] : memref<1x32xf32, #tpu.memory_space<vmem>>, vector<1x32xf32>
    %c0_55 = arith.constant 0 : index
    %c0_56 = arith.constant 0 : index
    %138 = vector.load %arg18[%c0_55, %c0_56] : memref<1x32xf32, #tpu.memory_space<vmem>>, vector<1x32xf32>
    %cst_57 = arith.constant dense<0.000000e+00> : vector<8xf32>
    %139 = vector.multi_reduction <add>, %136, %cst_57 [1] : vector<8x32xf32> to vector<8xf32>
    %140 = vector.shape_cast %139 : vector<8xf32> to vector<8x1xf32>
    %cst_58 = arith.constant 3.200000e+01 : f32
    %141 = vector.broadcast %cst_58 : f32 to vector<8x1xf32>
    %142 = arith.divf %140, %141 : vector<8x1xf32>
    %143 = vector.broadcast %142 : vector<8x1xf32> to vector<8x32xf32>
    %144 = arith.subf %136, %143 : vector<8x32xf32>
    %145 = arith.mulf %144, %144 : vector<8x32xf32>
    %cst_59 = arith.constant dense<0.000000e+00> : vector<8xf32>
    %146 = vector.multi_reduction <add>, %145, %cst_59 [1] : vector<8x32xf32> to vector<8xf32>
    %147 = vector.shape_cast %146 : vector<8xf32> to vector<8x1xf32>
    %cst_60 = arith.constant 3.200000e+01 : f32
    %148 = vector.broadcast %cst_60 : f32 to vector<8x1xf32>
    %149 = arith.divf %147, %148 : vector<8x1xf32>
    %150 = vector.broadcast %142 : vector<8x1xf32> to vector<8x32xf32>
    %151 = arith.subf %136, %150 : vector<8x32xf32>
    %cst_61 = arith.constant 9.99999974E-6 : f32
    %152 = vector.broadcast %cst_61 : f32 to vector<8x1xf32>
    %153 = arith.addf %149, %152 : vector<8x1xf32>
    %154 = math.rsqrt %153 : vector<8x1xf32>
    %155 = vector.broadcast %154 : vector<8x1xf32> to vector<8x32xf32>
    %156 = arith.mulf %151, %155 : vector<8x32xf32>
    %157 = vector.broadcast %137 : vector<1x32xf32> to vector<8x32xf32>
    %158 = arith.mulf %156, %157 : vector<8x32xf32>
    %159 = vector.broadcast %138 : vector<1x32xf32> to vector<8x32xf32>
    %160 = arith.addf %158, %159 : vector<8x32xf32>
    %c0_62 = arith.constant 0 : index
    %c0_63 = arith.constant 0 : index
    %c0_64 = arith.constant 0 : index
    %161 = vector.load %arg19[%c0_62, %c0_63, %c0_64] : memref<1x8x32xf32, #tpu.memory_space<vmem>>, vector<1x8x32xf32>
    %162 = vector.shape_cast %161 : vector<1x8x32xf32> to vector<8x32xf32>
    %163 = vector.shape_cast %160 : vector<8x32xf32> to vector<1x8x32xf32>
    tpu.vector_store %arg19[%c0_62, %c0_63, %c0_64], %163 {strides = array<i32>} : memref<1x8x32xf32, #tpu.memory_space<vmem>>, vector<1x8x32xf32>,
    return
  }
  func.func @transform_0(%arg0: i32, %arg1: i32) -> (i32, i32, i32) {
    %c0_i32 = arith.constant 0 : i32
    %c0_i32_0 = arith.constant 0 : i32
    %c0_i32_1 = arith.constant 0 : i32
    return %arg0, %c0_i32, %c0_i32_0 : i32, i32, i32
  }
  func.func @transform_1(%arg0: i32, %arg1: i32) -> (i32, i32) {
    %c0_i32 = arith.constant 0 : i32
    %c0_i32_0 = arith.constant 0 : i32
    %c0_i32_1 = arith.constant 0 : i32
    return %c0_i32, %c0_i32_0 : i32, i32
  }
  func.func @transform_2(%arg0: i32, %arg1: i32) -> (i32, i32) {
    %c0_i32 = arith.constant 0 : i32
    %c0_i32_0 = arith.constant 0 : i32
    %c0_i32_1 = arith.constant 0 : i32
    return %c0_i32, %c0_i32_0 : i32, i32
  }
  func.func @transform_3(%arg0: i32, %arg1: i32) -> (i32, i32) {
    %c0_i32 = arith.constant 0 : i32
    %c0_i32_0 = arith.constant 0 : i32
    %c0_i32_1 = arith.constant 0 : i32
    return %c0_i32, %c0_i32_0 : i32, i32
  }
  func.func @transform_4(%arg0: i32, %arg1: i32) -> (i32, i32) {
    %c0_i32 = arith.constant 0 : i32
    %c0_i32_0 = arith.constant 0 : i32
    %c0_i32_1 = arith.constant 0 : i32
    return %c0_i32, %c0_i32_0 : i32, i32
  }
  func.func @transform_5(%arg0: i32, %arg1: i32) -> (i32, i32) {
    %c0_i32 = arith.constant 0 : i32
    %c0_i32_0 = arith.constant 0 : i32
    %c0_i32_1 = arith.constant 0 : i32
    return %c0_i32, %c0_i32_0 : i32, i32
  }
  func.func @transform_6(%arg0: i32, %arg1: i32) -> (i32, i32) {
    %c0_i32 = arith.constant 0 : i32
    %c0_i32_0 = arith.constant 0 : i32
    %c0_i32_1 = arith.constant 0 : i32
    return %c0_i32, %c0_i32_0 : i32, i32
  }
  func.func @transform_7(%arg0: i32, %arg1: i32) -> (i32, i32) {
    %c0_i32 = arith.constant 0 : i32
    %c0_i32_0 = arith.constant 0 : i32
    %c0_i32_1 = arith.constant 0 : i32
    return %c0_i32, %c0_i32_0 : i32, i32
  }
  func.func @transform_8(%arg0: i32, %arg1: i32) -> (i32, i32) {
    %c0_i32 = arith.constant 0 : i32
    %c0_i32_0 = arith.constant 0 : i32
    %c0_i32_1 = arith.constant 0 : i32
    return %c0_i32, %c0_i32_0 : i32, i32
  }
  func.func @transform_9(%arg0: i32, %arg1: i32) -> (i32, i32) {
    %c0_i32 = arith.constant 0 : i32
    %c0_i32_0 = arith.constant 0 : i32
    %c0_i32_1 = arith.constant 0 : i32
    return %c0_i32, %c0_i32_0 : i32, i32
  }
  func.func @transform_10(%arg0: i32, %arg1: i32) -> (i32, i32) {
    %c0_i32 = arith.constant 0 : i32
    %c0_i32_0 = arith.constant 0 : i32
    %c0_i32_1 = arith.constant 0 : i32
    return %c0_i32, %c0_i32_0 : i32, i32
  }
  func.func @transform_11(%arg0: i32, %arg1: i32) -> (i32, i32) {
    %c0_i32 = arith.constant 0 : i32
    %c0_i32_0 = arith.constant 0 : i32
    %c0_i32_1 = arith.constant 0 : i32
    return %c0_i32, %c0_i32_0 : i32, i32
  }
  func.func @transform_12(%arg0: i32, %arg1: i32) -> (i32, i32) {
    %c0_i32 = arith.constant 0 : i32
    %c0_i32_0 = arith.constant 0 : i32
    %c0_i32_1 = arith.constant 0 : i32
    return %c0_i32, %c0_i32_0 : i32, i32
  }
  func.func @transform_13(%arg0: i32, %arg1: i32) -> (i32, i32) {
    %c0_i32 = arith.constant 0 : i32
    %c0_i32_0 = arith.constant 0 : i32
    %c0_i32_1 = arith.constant 0 : i32
    return %c0_i32, %c0_i32_0 : i32, i32
  }
  func.func @transform_14(%arg0: i32, %arg1: i32) -> (i32, i32) {
    %c0_i32 = arith.constant 0 : i32
    %c0_i32_0 = arith.constant 0 : i32
    %c0_i32_1 = arith.constant 0 : i32
    return %c0_i32, %c0_i32_0 : i32, i32
  }
  func.func @transform_15(%arg0: i32, %arg1: i32) -> (i32, i32) {
    %c0_i32 = arith.constant 0 : i32
    %c0_i32_0 = arith.constant 0 : i32
    %c0_i32_1 = arith.constant 0 : i32
    return %c0_i32, %c0_i32_0 : i32, i32
  }
  func.func @transform_16(%arg0: i32, %arg1: i32) -> (i32, i32) {
    %c0_i32 = arith.constant 0 : i32
    %c0_i32_0 = arith.constant 0 : i32
    %c0_i32_1 = arith.constant 0 : i32
    return %c0_i32, %c0_i32_0 : i32, i32
  }
  func.func @transform_17(%arg0: i32, %arg1: i32) -> (i32, i32, i32) {
    %c0_i32 = arith.constant 0 : i32
    %c0_i32_0 = arith.constant 0 : i32
    return %arg0, %arg1, %c0_i32 : i32, i32, i32
  }
}

</mosaic_0001>

<llo_original>
// kernel: tpu_custom_call.1
$region0: #{tpu_custom_call.1}
  #allocation0 [shape = 'u32[]', space=smem, size = 0x4, offset = 0x4, fixed_abs, tag = 'smem constant byte address 0x4 - core index']
  #allocation1 [shape = 'u32[144,128]{1,0:T(1,128)}', space=vmem, size = 0x12000, scoped, tag = 'internal scratch']
  #allocation2 [shape = 'bf16[8,32]{1,0:T(8,128)(2,1)}', space=vmem, size = 0x800, scoped, tag = 'scratch operand']
  #allocation3 [shape = 'bf16[8,32]{1,0:T(8,128)(2,1)}', space=vmem, size = 0x800, scoped, tag = 'scratch operand']
  %s0 = inlined_call_operand.hbm [shape: bf16[2,8,32], index: 0, kind: input, shape index: {}]
  %s1 = inlined_call_operand.vmem [shape: bf16[32,32], index: 1, kind: input, shape index: {}]
  %s2 = inlined_call_operand.vmem [shape: f32[1,32], index: 2, kind: input, shape index: {}]
  %s3 = inlined_call_operand.vmem [shape: bf16[32,32], index: 3, kind: input, shape index: {}]
  %s4 = inlined_call_operand.vmem [shape: f32[1,32], index: 4, kind: input, shape index: {}]
  %s5 = inlined_call_operand.vmem [shape: bf16[32,32], index: 5, kind: input, shape index: {}]
  %s6 = inlined_call_operand.vmem [shape: f32[1,32], index: 6, kind: input, shape index: {}]
  %s7 = inlined_call_operand.vmem [shape: bf16[32,32], index: 7, kind: input, shape index: {}]
  %s8 = inlined_call_operand.vmem [shape: f32[1,32], index: 8, kind: input, shape index: {}]
  %s9 = inlined_call_operand.vmem [shape: f32[1,32], index: 9, kind: input, shape index: {}]
  %s10 = inlined_call_operand.vmem [shape: f32[1,32], index: 10, kind: input, shape index: {}]
  %s11 = inlined_call_operand.vmem [shape: bf16[32,128], index: 11, kind: input, shape index: {}]
  %s12 = inlined_call_operand.vmem [shape: f32[1,128], index: 12, kind: input, shape index: {}]
  %s13 = inlined_call_operand.vmem [shape: bf16[128,32], index: 13, kind: input, shape index: {}]
  %s14 = inlined_call_operand.vmem [shape: f32[1,32], index: 14, kind: input, shape index: {}]
  %s15 = inlined_call_operand.vmem [shape: f32[1,32], index: 15, kind: input, shape index: {}]
  %s16 = inlined_call_operand.vmem [shape: f32[1,32], index: 16, kind: input, shape index: {}]
  %s17 = inlined_call_operand.hbm [shape: f32[2,8,32], index: 17, kind: output, shape index: {}]
  %s18 = sld [smem:[#allocation0]]
  $region109: #{tpu_custom_call.1} parent=0
    _
  %s20 = ssub.s32 1, %s18
  %s21 = scalar_select 0, %s20, %s18
  $region1: #{tpu_custom_call.1} parent=0
    #allocation4 [shape = 'u8[2048]{0}', space=vmem, size = 0x800, scoped, tag = 'input window, operand 0, single buffered']
    #allocation5 [shape = 's32[2]{0}', space=sflag, size = 0x8, scoped, tag = 'scoped memory for tpu_custom_call.1']
    #allocation6 [shape = 's32[2]{0}', space=sflag, size = 0x8, scoped, tag = 'scoped memory for tpu_custom_call.1']
    #allocation7 [shape = 'u8[8192]{0}', space=vmem, size = 0x2000, scoped, tag = 'output window, operand 0']
    %22 = vsyncpa [#allocation5], 0
    %23 = vsyncpa [#allocation6], 0
    %s24 = scalar_lea.sflag [#allocation6], 1
    %25 = vsyncpa %s24, 0
    loop: start=0, step=1, limit=4
    $region2: #{tpu_custom_call.1} parent=1 // loop_pre_header
      _
    $region3: #{tpu_custom_call.1} parent=1 // loop_header
      %s27 = sphi 0, %s31
      %p28 = scmp.ge.s32.totalorder %s27, 4
      %s34 = sphi 0, %s46
      %s35 = sphi 0, %s42
      %s36 = sphi 0, %s34
      %s37 = sphi 0, %s35
      %s38 = sphi 0, %s36
      %s39 = sphi 0, %s37
      %s49 = sphi 0, %s51
      %s52 = sphi 0, %s49
      %s53 = sphi 0, %s52
      %s69 = sphi 0, %s53
      %s73 = sphi 0, %s73
      %s75 = sphi 0, %s73
      %s76 = sphi 0, %s75
      %s90 = sphi 0, %s76
      %s94 = sphi 0, %s94
      %s96 = sphi 0, %s94
      %s97 = sphi 0, %s96
      %s111 = sphi 0, %s97
      %s115 = sphi 0, %s115
      %s117 = sphi 0, %s115
      %s118 = sphi 0, %s117
      %s132 = sphi 0, %s118
      %s136 = sphi 0, %s136
      %s138 = sphi 0, %s136
      %s139 = sphi 0, %s138
      %s153 = sphi 0, %s139
      %s157 = sphi 0, %s157
      %s159 = sphi 0, %s157
      %s160 = sphi 0, %s159
      %s174 = sphi 0, %s160
      %s178 = sphi 0, %s178
      %s180 = sphi 0, %s178
      %s181 = sphi 0, %s180
      %s195 = sphi 0, %s181
      %s199 = sphi 0, %s199
      %s201 = sphi 0, %s199
      %s202 = sphi 0, %s201
      %s216 = sphi 0, %s202
      %s220 = sphi 0, %s220
      %s222 = sphi 0, %s220
      %s223 = sphi 0, %s222
      %s237 = sphi 0, %s223
      %s241 = sphi 0, %s241
      %s243 = sphi 0, %s241
      %s244 = sphi 0, %s243
      %s258 = sphi 0, %s244
      %s262 = sphi 0, %s262
      %s264 = sphi 0, %s262
      %s265 = sphi 0, %s264
      %s279 = sphi 0, %s265
      %s283 = sphi 0, %s283
      %s285 = sphi 0, %s283
      %s286 = sphi 0, %s285
      %s300 = sphi 0, %s286
      %s304 = sphi 0, %s304
      %s306 = sphi 0, %s304
      %s307 = sphi 0, %s306
      %s321 = sphi 0, %s307
      %s325 = sphi 0, %s325
      %s327 = sphi 0, %s325
      %s328 = sphi 0, %s327
      %s342 = sphi 0, %s328
      %s346 = sphi 0, %s346
      %s348 = sphi 0, %s346
      %s349 = sphi 0, %s348
      %s363 = sphi 0, %s349
      %s367 = sphi 0, %s367
      %s369 = sphi 0, %s367
      %s370 = sphi 0, %s369
      %s384 = sphi 0, %s370
      %s388 = sphi 0, %s388
      %s390 = sphi 0, %s388
      %s391 = sphi 0, %s390
      %s405 = sphi 0, %s391
      %s413 = sphi 0, %s415
      %s416 = sphi 0, %s413
      %s417 = sphi 0, %s416
      %s433 = sphi 0, %s417
    $region4: #{tpu_custom_call.1} parent=1 // loop_header_branch
      %30 = sbr.rel (%p28) target = $region8
    $region5: #{tpu_custom_call.1} parent=1 // loop_body
      %s32 = ssub.s32 %s27, 1
      %s33 = ssub.s32 %s27, 2
      %s40 = sadd.s32 1, %s35
      %p41 = scmp.ge.s32.totalorder %s40, 1
      %s42 = scalar_select %p41, 0, %s40
      %s43 = sadd.s32 1, %s34
      %s44 = scalar_select %p41, %s43, %s34
      %p45 = scmp.ge.s32.totalorder %s44, 2
      %s46 = scalar_select %p45, 0, %s44
      %s47 = ssub.s32 %s34, %s46
      %p48 = scmp.eq.s32.totalorder %s47, 0
      %s50 = sadd.s32 %s49, 1
      %s51 = scalar_select %p48, %s49, %s50
      %p54 = pneg %p48
      %p55 = scmp.eq.s32.totalorder %s27, 1
      %p56 = por %p54, %p55
      %p57 = scmp.ne.s32.totalorder %s49, %s52
      %p58 = scmp.eq.s32.totalorder %s27, 0
      %p59 = por %p57, %p58
      %p60 = scmp.ne.s32.totalorder %s49, %s52
      %p61 = scmp.eq.s32.totalorder %s32, 1
      %p62 = por %p60, %p61
      %p63 = scmp.ne.s32.totalorder %s52, %s53
      %p64 = scmp.eq.s32.totalorder %s32, 0
      %p65 = por %p63, %p64
      %p66 = scmp.ne.s32.totalorder %s52, %s53
      %p67 = scmp.eq.s32.totalorder %s33, 1
      %p68 = por %p66, %p67
      %p70 = scmp.ne.s32.totalorder %s53, %s69
      %p71 = scmp.eq.s32.totalorder %s33, 0
      %p72 = por %p70, %p71
      %s74 = sadd.s32 %s73, 1
      %p77 = scmp.eq.s32.totalorder %s27, 1
      %p78 = scmp.ne.s32.totalorder %s73, %s75
      %p79 = scmp.eq.s32.totalorder %s27, 0
      %p80 = por %p78, %p79
      %p81 = scmp.ne.s32.totalorder %s73, %s75
      %p82 = scmp.eq.s32.totalorder %s32, 1
      %p83 = por %p81, %p82
      %p84 = scmp.ne.s32.totalorder %s75, %s76
      %p85 = scmp.eq.s32.totalorder %s32, 0
      %p86 = por %p84, %p85
      %p87 = scmp.ne.s32.totalorder %s75, %s76
      %p88 = scmp.eq.s32.totalorder %s33, 1
      %p89 = por %p87, %p88
      %p91 = scmp.ne.s32.totalorder %s76, %s90
      %p92 = scmp.eq.s32.totalorder %s33, 0
      %p93 = por %p91, %p92
      %s95 = sadd.s32 %s94, 1
      %p98 = scmp.eq.s32.totalorder %s27, 1
      %p99 = scmp.ne.s32.totalorder %s94, %s96
      %p100 = scmp.eq.s32.totalorder %s27, 0
      %p101 = por %p99, %p100
      %p102 = scmp.ne.s32.totalorder %s94, %s96
      %p103 = scmp.eq.s32.totalorder %s32, 1
      %p104 = por %p102, %p103
      %p105 = scmp.ne.s32.totalorder %s96, %s97
      %p106 = scmp.eq.s32.totalorder %s32, 0
      %p107 = por %p105, %p106
      %p108 = scmp.ne.s32.totalorder %s96, %s97
      %p109 = scmp.eq.s32.totalorder %s33, 1
      %p110 = por %p108, %p109
      %p112 = scmp.ne.s32.totalorder %s97, %s111
      %p113 = scmp.eq.s32.totalorder %s33, 0
      %p114 = por %p112, %p113
      %s116 = sadd.s32 %s115, 1
      %p119 = scmp.eq.s32.totalorder %s27, 1
      %p120 = scmp.ne.s32.totalorder %s115, %s117
      %p121 = scmp.eq.s32.totalorder %s27, 0
      %p122 = por %p120, %p121
      %p123 = scmp.ne.s32.totalorder %s115, %s117
      %p124 = scmp.eq.s32.totalorder %s32, 1
      %p125 = por %p123, %p124
      %p126 = scmp.ne.s32.totalorder %s117, %s118
      %p127 = scmp.eq.s32.totalorder %s32, 0
      %p128 = por %p126, %p127
      %p129 = scmp.ne.s32.totalorder %s117, %s118
      %p130 = scmp.eq.s32.totalorder %s33, 1
      %p131 = por %p129, %p130
      %p133 = scmp.ne.s32.totalorder %s118, %s132
      %p134 = scmp.eq.s32.totalorder %s33, 0
      %p135 = por %p133, %p134
      %s137 = sadd.s32 %s136, 1
      %p140 = scmp.eq.s32.totalorder %s27, 1
      %p141 = scmp.ne.s32.totalorder %s136, %s138
      %p142 = scmp.eq.s32.totalorder %s27, 0
      %p143 = por %p141, %p142
      %p144 = scmp.ne.s32.totalorder %s136, %s138
      %p145 = scmp.eq.s32.totalorder %s32, 1
      %p146 = por %p144, %p145
      %p147 = scmp.ne.s32.totalorder %s138, %s139
      %p148 = scmp.eq.s32.totalorder %s32, 0
      %p149 = por %p147, %p148
      %p150 = scmp.ne.s32.totalorder %s138, %s139
      %p151 = scmp.eq.s32.totalorder %s33, 1
      %p152 = por %p150, %p151
      %p154 = scmp.ne.s32.totalorder %s139, %s153
      %p155 = scmp.eq.s32.totalorder %s33, 0
      %p156 = por %p154, %p155
      %s158 = sadd.s32 %s157, 1
      %p161 = scmp.eq.s32.totalorder %s27, 1
      %p162 = scmp.ne.s32.totalorder %s157, %s159
      %p163 = scmp.eq.s32.totalorder %s27, 0
      %p164 = por %p162, %p163
      %p165 = scmp.ne.s32.totalorder %s157, %s159
      %p166 = scmp.eq.s32.totalorder %s32, 1
      %p167 = por %p165, %p166
      %p168 = scmp.ne.s32.totalorder %s159, %s160
      %p169 = scmp.eq.s32.totalorder %s32, 0
      %p170 = por %p168, %p169
      %p171 = scmp.ne.s32.totalorder %s159, %s160
      %p172 = scmp.eq.s32.totalorder %s33, 1
      %p173 = por %p171, %p172
      %p175 = scmp.ne.s32.totalorder %s160, %s174
      %p176 = scmp.eq.s32.totalorder %s33, 0
      %p177 = por %p175, %p176
      %s179 = sadd.s32 %s178, 1
      %p182 = scmp.eq.s32.totalorder %s27, 1
      %p183 = scmp.ne.s32.totalorder %s178, %s180
      %p184 = scmp.eq.s32.totalorder %s27, 0
      %p185 = por %p183, %p184
      %p186 = scmp.ne.s32.totalorder %s178, %s180
      %p187 = scmp.eq.s32.totalorder %s32, 1
      %p188 = por %p186, %p187
      %p189 = scmp.ne.s32.totalorder %s180, %s181
      %p190 = scmp.eq.s32.totalorder %s32, 0
      %p191 = por %p189, %p190
      %p192 = scmp.ne.s32.totalorder %s180, %s181
      %p193 = scmp.eq.s32.totalorder %s33, 1
      %p194 = por %p192, %p193
      %p196 = scmp.ne.s32.totalorder %s181, %s195
      %p197 = scmp.eq.s32.totalorder %s33, 0
      %p198 = por %p196, %p197
      %s200 = sadd.s32 %s199, 1
      %p203 = scmp.eq.s32.totalorder %s27, 1
      %p204 = scmp.ne.s32.totalorder %s199, %s201
      %p205 = scmp.eq.s32.totalorder %s27, 0
      %p206 = por %p204, %p205
      %p207 = scmp.ne.s32.totalorder %s199, %s201
      %p208 = scmp.eq.s32.totalorder %s32, 1
      %p209 = por %p207, %p208
      %p210 = scmp.ne.s32.totalorder %s201, %s202
      %p211 = scmp.eq.s32.totalorder %s32, 0
      %p212 = por %p210, %p211
      %p213 = scmp.ne.s32.totalorder %s201, %s202
      %p214 = scmp.eq.s32.totalorder %s33, 1
      %p215 = por %p213, %p214
      %p217 = scmp.ne.s32.totalorder %s202, %s216
      %p218 = scmp.eq.s32.totalorder %s33, 0
      %p219 = por %p217, %p218
      %s221 = sadd.s32 %s220, 1
      %p224 = scmp.eq.s32.totalorder %s27, 1
      %p225 = scmp.ne.s32.totalorder %s220, %s222
      %p226 = scmp.eq.s32.totalorder %s27, 0
      %p227 = por %p225, %p226
      %p228 = scmp.ne.s32.totalorder %s220, %s222
      %p229 = scmp.eq.s32.totalorder %s32, 1
      %p230 = por %p228, %p229
      %p231 = scmp.ne.s32.totalorder %s222, %s223
      %p232 = scmp.eq.s32.totalorder %s32, 0
      %p233 = por %p231, %p232
      %p234 = scmp.ne.s32.totalorder %s222, %s223
      %p235 = scmp.eq.s32.totalorder %s33, 1
      %p236 = por %p234, %p235
      %p238 = scmp.ne.s32.totalorder %s223, %s237
      %p239 = scmp.eq.s32.totalorder %s33, 0
      %p240 = por %p238, %p239
      %s242 = sadd.s32 %s241, 1
      %p245 = scmp.eq.s32.totalorder %s27, 1
      %p246 = scmp.ne.s32.totalorder %s241, %s243
      %p247 = scmp.eq.s32.totalorder %s27, 0
      %p248 = por %p246, %p247
      %p249 = scmp.ne.s32.totalorder %s241, %s243
      %p250 = scmp.eq.s32.totalorder %s32, 1
      %p251 = por %p249, %p250
      %p252 = scmp.ne.s32.totalorder %s243, %s244
      %p253 = scmp.eq.s32.totalorder %s32, 0
      %p254 = por %p252, %p253
      %p255 = scmp.ne.s32.totalorder %s243, %s244
      %p256 = scmp.eq.s32.totalorder %s33, 1
      %p257 = por %p255, %p256
      %p259 = scmp.ne.s32.totalorder %s244, %s258
      %p260 = scmp.eq.s32.totalorder %s33, 0
      %p261 = por %p259, %p260
      %s263 = sadd.s32 %s262, 1
      %p266 = scmp.eq.s32.totalorder %s27, 1
      %p267 = scmp.ne.s32.totalorder %s262, %s264
      %p268 = scmp.eq.s32.totalorder %s27, 0
      %p269 = por %p267, %p268
      %p270 = scmp.ne.s32.totalorder %s262, %s264
      %p271 = scmp.eq.s32.totalorder %s32, 1
      %p272 = por %p270, %p271
      %p273 = scmp.ne.s32.totalorder %s264, %s265
      %p274 = scmp.eq.s32.totalorder %s32, 0
      %p275 = por %p273, %p274
      %p276 = scmp.ne.s32.totalorder %s264, %s265
      %p277 = scmp.eq.s32.totalorder %s33, 1
      %p278 = por %p276, %p277
      %p280 = scmp.ne.s32.totalorder %s265, %s279
      %p281 = scmp.eq.s32.totalorder %s33, 0
      %p282 = por %p280, %p281
      %s284 = sadd.s32 %s283, 1
      %p287 = scmp.eq.s32.totalorder %s27, 1
      %p288 = scmp.ne.s32.totalorder %s283, %s285
      %p289 = scmp.eq.s32.totalorder %s27, 0
      %p290 = por %p288, %p289
      %p291 = scmp.ne.s32.totalorder %s283, %s285
      %p292 = scmp.eq.s32.totalorder %s32, 1
      %p293 = por %p291, %p292
      %p294 = scmp.ne.s32.totalorder %s285, %s286
      %p295 = scmp.eq.s32.totalorder %s32, 0
      %p296 = por %p294, %p295
      %p297 = scmp.ne.s32.totalorder %s285, %s286
      %p298 = scmp.eq.s32.totalorder %s33, 1
      %p299 = por %p297, %p298
      %p301 = scmp.ne.s32.totalorder %s286, %s300
      %p302 = scmp.eq.s32.totalorder %s33, 0
      %p303 = por %p301, %p302
      %s305 = sadd.s32 %s304, 1
      %p308 = scmp.eq.s32.totalorder %s27, 1
      %p309 = scmp.ne.s32.totalorder %s304, %s306
      %p310 = scmp.eq.s32.totalorder %s27, 0
      %p311 = por %p309, %p310
      %p312 = scmp.ne.s32.totalorder %s304, %s306
      %p313 = scmp.eq.s32.totalorder %s32, 1
      %p314 = por %p312, %p313
      %p315 = scmp.ne.s32.totalorder %s306, %s307
      %p316 = scmp.eq.s32.totalorder %s32, 0
      %p317 = por %p315, %p316
      %p318 = scmp.ne.s32.totalorder %s306, %s307
      %p319 = scmp.eq.s32.totalorder %s33, 1
      %p320 = por %p318, %p319
      %p322 = scmp.ne.s32.totalorder %s307, %s321
      %p323 = scmp.eq.s32.totalorder %s33, 0
      %p324 = por %p322, %p323
      %s326 = sadd.s32 %s325, 1
      %p329 = scmp.eq.s32.totalorder %s27, 1
      %p330 = scmp.ne.s32.totalorder %s325, %s327
      %p331 = scmp.eq.s32.totalorder %s27, 0
      %p332 = por %p330, %p331
      %p333 = scmp.ne.s32.totalorder %s325, %s327
      %p334 = scmp.eq.s32.totalorder %s32, 1
      %p335 = por %p333, %p334
      %p336 = scmp.ne.s32.totalorder %s327, %s328
      %p337 = scmp.eq.s32.totalorder %s32, 0
      %p338 = por %p336, %p337
      %p339 = scmp.ne.s32.totalorder %s327, %s328
      %p340 = scmp.eq.s32.totalorder %s33, 1
      %p341 = por %p339, %p340
      %p343 = scmp.ne.s32.totalorder %s328, %s342
      %p344 = scmp.eq.s32.totalorder %s33, 0
      %p345 = por %p343, %p344
      %s347 = sadd.s32 %s346, 1
      %p350 = scmp.eq.s32.totalorder %s27, 1
      %p351 = scmp.ne.s32.totalorder %s346, %s348
      %p352 = scmp.eq.s32.totalorder %s27, 0
      %p353 = por %p351, %p352
      %p354 = scmp.ne.s32.totalorder %s346, %s348
      %p355 = scmp.eq.s32.totalorder %s32, 1
      %p356 = por %p354, %p355
      %p357 = scmp.ne.s32.totalorder %s348, %s349
      %p358 = scmp.eq.s32.totalorder %s32, 0
      %p359 = por %p357, %p358
      %p360 = scmp.ne.s32.totalorder %s348, %s349
      %p361 = scmp.eq.s32.totalorder %s33, 1
      %p362 = por %p360, %p361
      %p364 = scmp.ne.s32.totalorder %s349, %s363
      %p365 = scmp.eq.s32.totalorder %s33, 0
      %p366 = por %p364, %p365
      %s368 = sadd.s32 %s367, 1
      %p371 = scmp.eq.s32.totalorder %s27, 1
      %p372 = scmp.ne.s32.totalorder %s367, %s369
      %p373 = scmp.eq.s32.totalorder %s27, 0
      %p374 = por %p372, %p373
      %p375 = scmp.ne.s32.totalorder %s367, %s369
      %p376 = scmp.eq.s32.totalorder %s32, 1
      %p377 = por %p375, %p376
      %p378 = scmp.ne.s32.totalorder %s369, %s370
      %p379 = scmp.eq.s32.totalorder %s32, 0
      %p380 = por %p378, %p379
      %p381 = scmp.ne.s32.totalorder %s369, %s370
      %p382 = scmp.eq.s32.totalorder %s33, 1
      %p383 = por %p381, %p382
      %p385 = scmp.ne.s32.totalorder %s370, %s384
      %p386 = scmp.eq.s32.totalorder %s33, 0
      %p387 = por %p385, %p386
      %s389 = sadd.s32 %s388, 1
      %p392 = scmp.eq.s32.totalorder %s27, 1
      %p393 = scmp.ne.s32.totalorder %s388, %s390
      %p394 = scmp.eq.s32.totalorder %s27, 0
      %p395 = por %p393, %p394
      %p396 = scmp.ne.s32.totalorder %s388, %s390
      %p397 = scmp.eq.s32.totalorder %s32, 1
      %p398 = por %p396, %p397
      %p399 = scmp.ne.s32.totalorder %s390, %s391
      %p400 = scmp.eq.s32.totalorder %s32, 0
      %p401 = por %p399, %p400
      %p402 = scmp.ne.s32.totalorder %s390, %s391
      %p403 = scmp.eq.s32.totalorder %s33, 1
      %p404 = por %p402, %p403
      %p406 = scmp.ne.s32.totalorder %s391, %s405
      %p407 = scmp.eq.s32.totalorder %s33, 0
      %p408 = por %p406, %p407
      %s409 = ssub.s32 %s34, %s46
      %s410 = ssub.s32 %s35, %s42
      %s411 = sor.u32 %s409, %s410
      %p412 = scmp.eq.s32.totalorder %s411, 0
      %s414 = sadd.s32 %s413, 1
      %s415 = scalar_select %p412, %s413, %s414
      %p418 = pneg %p412
      %p419 = scmp.eq.s32.totalorder %s27, 1
      %p420 = por %p418, %p419
      %p421 = scmp.ne.s32.totalorder %s413, %s416
      %p422 = scmp.eq.s32.totalorder %s27, 0
      %p423 = por %p421, %p422
      %p424 = scmp.ne.s32.totalorder %s413, %s416
      %p425 = scmp.eq.s32.totalorder %s32, 1
      %p426 = por %p424, %p425
      %p427 = scmp.ne.s32.totalorder %s416, %s417
      %p428 = scmp.eq.s32.totalorder %s32, 0
      %p429 = por %p427, %p428
      %p430 = scmp.ne.s32.totalorder %s416, %s417
      %p431 = scmp.eq.s32.totalorder %s33, 1
      %p432 = por %p430, %p431
      %p434 = scmp.ne.s32.totalorder %s417, %s433
      %p435 = scmp.eq.s32.totalorder %s33, 0
      %p436 = por %p434, %p435
      %p437 = scmp.le.s32.totalorder 1, %s27
      %p438 = scmp.lt.s32.totalorder %s27, 3
      %p439 = pnand %p437, %p438
      %p440 = pneg %p439
      // Predicated region
      $region9: #{tpu_custom_call.1} parent=5 // pred_check
        _
      $region10: #{tpu_custom_call.1} parent=5 // pred_check_branch
        %442 = sbr.rel (%p439) target = $region12
      $region11: #{tpu_custom_call.1} parent=5 // pred_region
        %s443 = ssub.s32 %s27, 1
        // Predicated region
        $region13: #{tpu_custom_call.1} parent=11 // pred_check
          %p444 = pneg %p65
        $region14: #{tpu_custom_call.1} parent=11 // pred_check_branch
          %446 = sbr.rel (%p444) target = $region16
        $region15: #{tpu_custom_call.1} parent=11 // pred_region
          %s448 = ssub.s32 64, 64
          %449 = vsyncadd [#allocation5], %s448
          %s450 = smul.addr %s36, 64
          %s451 = scalar_lea.hbm %s0, %s450
          %s453 = sshll.u32 [#allocation4], 4
          %s454 = int_to_ptr.vmem [resolvable:$true] %s453
          %456 = dma.hbm_to_vmem [thread:$0]  %s451, 64, %s454, [#allocation5]
        $region16: #{tpu_custom_call.1} parent=11 // pred_fallthru
          _
        // Predicated region
        $region17: #{tpu_custom_call.1} parent=11 // pred_check
          %p457 = pneg %p86
        $region18: #{tpu_custom_call.1} parent=11 // pred_check_branch
          %459 = sbr.rel (%p457) target = $region20
        $region19: #{tpu_custom_call.1} parent=11 // pred_region
          _
        $region20: #{tpu_custom_call.1} parent=11 // pred_fallthru
          _
        // Predicated region
        $region21: #{tpu_custom_call.1} parent=11 // pred_check
          %p460 = pneg %p107
        $region22: #{tpu_custom_call.1} parent=11 // pred_check_branch
          %462 = sbr.rel (%p460) target = $region24
        $region23: #{tpu_custom_call.1} parent=11 // pred_region
          _
        $region24: #{tpu_custom_call.1} parent=11 // pred_fallthru
          _
        // Predicated region
        $region25: #{tpu_custom_call.1} parent=11 // pred_check
          %p463 = pneg %p128
        $region26: #{tpu_custom_call.1} parent=11 // pred_check_branch
          %465 = sbr.rel (%p463) target = $region28
        $region27: #{tpu_custom_call.1} parent=11 // pred_region
          _
        $region28: #{tpu_custom_call.1} parent=11 // pred_fallthru
          _
        // Predicated region
        $region29: #{tpu_custom_call.1} parent=11 // pred_check
          %p466 = pneg %p149
        $region30: #{tpu_custom_call.1} parent=11 // pred_check_branch
          %468 = sbr.rel (%p466) target = $region32
        $region31: #{tpu_custom_call.1} parent=11 // pred_region
          _
        $region32: #{tpu_custom_call.1} parent=11 // pred_fallthru
          _
        // Predicated region
        $region33: #{tpu_custom_call.1} parent=11 // pred_check
          %p469 = pneg %p170
        $region34: #{tpu_custom_call.1} parent=11 // pred_check_branch
          %471 = sbr.rel (%p469) target = $region36
        $region35: #{tpu_custom_call.1} parent=11 // pred_region
          _
        $region36: #{tpu_custom_call.1} parent=11 // pred_fallthru
          _
        // Predicated region
        $region37: #{tpu_custom_call.1} parent=11 // pred_check
          %p472 = pneg %p191
        $region38: #{tpu_custom_call.1} parent=11 // pred_check_branch
          %474 = sbr.rel (%p472) target = $region40
        $region39: #{tpu_custom_call.1} parent=11 // pred_region
          _
        $region40: #{tpu_custom_call.1} parent=11 // pred_fallthru
          _
        // Predicated region
        $region41: #{tpu_custom_call.1} parent=11 // pred_check
          %p475 = pneg %p212
        $region42: #{tpu_custom_call.1} parent=11 // pred_check_branch
          %477 = sbr.rel (%p475) target = $region44
        $region43: #{tpu_custom_call.1} parent=11 // pred_region
          _
        $region44: #{tpu_custom_call.1} parent=11 // pred_fallthru
          _
        // Predicated region
        $region45: #{tpu_custom_call.1} parent=11 // pred_check
          %p478 = pneg %p233
        $region46: #{tpu_custom_call.1} parent=11 // pred_check_branch
          %480 = sbr.rel (%p478) target = $region48
        $region47: #{tpu_custom_call.1} parent=11 // pred_region
          _
        $region48: #{tpu_custom_call.1} parent=11 // pred_fallthru
          _
        // Predicated region
        $region49: #{tpu_custom_call.1} parent=11 // pred_check
          %p481 = pneg %p254
        $region50: #{tpu_custom_call.1} parent=11 // pred_check_branch
          %483 = sbr.rel (%p481) target = $region52
        $region51: #{tpu_custom_call.1} parent=11 // pred_region
          _
        $region52: #{tpu_custom_call.1} parent=11 // pred_fallthru
          _
        // Predicated region
        $region53: #{tpu_custom_call.1} parent=11 // pred_check
          %p484 = pneg %p275
        $region54: #{tpu_custom_call.1} parent=11 // pred_check_branch
          %486 = sbr.rel (%p484) target = $region56
        $region55: #{tpu_custom_call.1} parent=11 // pred_region
          _
        $region56: #{tpu_custom_call.1} parent=11 // pred_fallthru
          _
        // Predicated region
        $region57: #{tpu_custom_call.1} parent=11 // pred_check
          %p487 = pneg %p296
        $region58: #{tpu_custom_call.1} parent=11 // pred_check_branch
          %489 = sbr.rel (%p487) target = $region60
        $region59: #{tpu_custom_call.1} parent=11 // pred_region
          _
        $region60: #{tpu_custom_call.1} parent=11 // pred_fallthru
          _
        // Predicated region
        $region61: #{tpu_custom_call.1} parent=11 // pred_check
          %p490 = pneg %p317
        $region62: #{tpu_custom_call.1} parent=11 // pred_check_branch
          %492 = sbr.rel (%p490) target = $region64
        $region63: #{tpu_custom_call.1} parent=11 // pred_region
          _
        $region64: #{tpu_custom_call.1} parent=11 // pred_fallthru
          _
        // Predicated region
        $region65: #{tpu_custom_call.1} parent=11 // pred_check
          %p493 = pneg %p338
        $region66: #{tpu_custom_call.1} parent=11 // pred_check_branch
          %495 = sbr.rel (%p493) target = $region68
        $region67: #{tpu_custom_call.1} parent=11 // pred_region
          _
        $region68: #{tpu_custom_call.1} parent=11 // pred_fallthru
          _
        // Predicated region
        $region69: #{tpu_custom_call.1} parent=11 // pred_check
          %p496 = pneg %p359
        $region70: #{tpu_custom_call.1} parent=11 // pred_check_branch
          %498 = sbr.rel (%p496) target = $region72
        $region71: #{tpu_custom_call.1} parent=11 // pred_region
          _
        $region72: #{tpu_custom_call.1} parent=11 // pred_fallthru
          _
        // Predicated region
        $region73: #{tpu_custom_call.1} parent=11 // pred_check
          %p499 = pneg %p380
        $region74: #{tpu_custom_call.1} parent=11 // pred_check_branch
          %501 = sbr.rel (%p499) target = $region76
        $region75: #{tpu_custom_call.1} parent=11 // pred_region
          _
        $region76: #{tpu_custom_call.1} parent=11 // pred_fallthru
          _
        // Predicated region
        $region77: #{tpu_custom_call.1} parent=11 // pred_check
          %p502 = pneg %p401
        $region78: #{tpu_custom_call.1} parent=11 // pred_check_branch
          %504 = sbr.rel (%p502) target = $region80
        $region79: #{tpu_custom_call.1} parent=11 // pred_region
          _
        $region80: #{tpu_custom_call.1} parent=11 // pred_fallthru
          _
      $region12: #{tpu_custom_call.1} parent=5 // pred_fallthru
        _
      %p505 = scmp.lt.s32.totalorder %s27, 2
      // Predicated region
      $region81: #{tpu_custom_call.1} parent=5 // pred_check
        %p506 = pneg %p505
      $region82: #{tpu_custom_call.1} parent=5 // pred_check_branch
        %508 = sbr.rel (%p506) target = $region84
      $region83: #{tpu_custom_call.1} parent=5 // pred_region
        _
      $region84: #{tpu_custom_call.1} parent=5 // pred_fallthru
        _
      %p509 = scmp.le.s32.totalorder 1, %s27
      %p510 = scmp.lt.s32.totalorder %s27, 3
      %p511 = pnand %p509, %p510
      %p512 = pneg %p511
      // Predicated region
      $region85: #{tpu_custom_call.1} parent=5 // pred_check
        _
      $region86: #{tpu_custom_call.1} parent=5 // pred_check_branch
        %514 = sbr.rel (%p511) target = $region88
      $region87: #{tpu_custom_call.1} parent=5 // pred_region
        %s515 = ssub.s32 %s27, 1
        // Predicated region
        $region89: #{tpu_custom_call.1} parent=87 // pred_check
          %p516 = pneg %p65
        $region90: #{tpu_custom_call.1} parent=87 // pred_check_branch
          %518 = sbr.rel (%p516) target = $region92
        $region91: #{tpu_custom_call.1} parent=87 // pred_region
          %519 = dma.done [#allocation5], 64
        $region92: #{tpu_custom_call.1} parent=87 // pred_fallthru
          _
        %p520 = pneg %p65
        %p521 = pneg %p62
        %p522 = pneg %p86
        %p523 = pneg %p83
        %p524 = pneg %p107
        %p525 = pneg %p104
        %p526 = pneg %p128
        %p527 = pneg %p125
        %p528 = pneg %p149
        %p529 = pneg %p146
        %p530 = pneg %p170
        %p531 = pneg %p167
        %p532 = pneg %p191
        %p533 = pneg %p188
        %p534 = pneg %p212
        %p535 = pneg %p209
        %p536 = pneg %p233
        %p537 = pneg %p230
        %p538 = pneg %p254
        %p539 = pneg %p251
        %p540 = pneg %p275
        %p541 = pneg %p272
        %p542 = pneg %p296
        %p543 = pneg %p293
        %p544 = pneg %p317
        %p545 = pneg %p314
        %p546 = pneg %p338
        %p547 = pneg %p335
        %p548 = pneg %p359
        %p549 = pneg %p356
        %p550 = pneg %p380
        %p551 = pneg %p377
        %p552 = pneg %p401
        %p553 = pneg %p398
        %p554 = pneg %p429
        %p555 = pneg %p426
        %s556 = sand.u32 %s416, 1
        %s557 = scalar_lea.sflag [#allocation6], %s556
        %s558 = sand.u32 %s416, 1
        %s559 = smul.addr %s558, 8
        %s560 = scalar_lea.vmem [#allocation7], %s559
        %p562 = scmp.eq.s32.totalorder %s37, 0
        // Predicated region
        $region93: #{tpu_custom_call.1} parent=87 // pred_check
          %p563 = pneg %p562
        $region94: #{tpu_custom_call.1} parent=87 // pred_check_branch
          %565 = sbr.rel (%p563) target = $region96
        $region95: #{tpu_custom_call.1} parent=87 // pred_region
          %v566 = vld [vmem:[#allocation4] sm:$0xf]
          %v567 = vld [vmem:[%s3] sm:$0xf]
          %v568 = vld [vmem:[%s3 + $0x4] sm:$0xf]
          %v569 = vld [vmem:[%s3 + $0x8] sm:$0xf]
          %v570 = vld [vmem:[%s3 + $0xc] sm:$0xf]
          %v571 = vld [vmem:[%s4] sm:$0x1]
          %v573 = vlaneseq
          %v574 = vshrl.u32 %v573, 7
          %v575 = vsub.s32 0, %v574
          %v576 = vrot.slane %v571, %v575
          %v582 = vunpack.c.l.b16 %v567
          %v583 = vunpack.c.l.b16 %v568
          %v584 = vunpack.c.l.b16 %v569
          %v585 = vunpack.c.l.b16 %v570
          %v586 = vpack.c.b16 %v583, %v582
          %v587 = vpack.c.b16 %v585, %v584
          %vm590 = vcmask 261120
          %v592 = vsel %vm590, %v566, 0
          %594 = vmatprep.subr.bf16.mxu0 0
          %595 = vmatpush1.bf16.msra.mxu0 %v586
          %596 = vmatprep.subr.bf16.mxu0 0
          %597 = vmatpush1.bf16.msra.mxu0 %v587
          %598 = vmatprep.subr.bf16.mxu0 0
          %599 = vmatpush1.bf16.msra.mxu0 0
          %600 = vmatprep.subr.bf16.mxu0 0
          %601 = vmatpush1.bf16.msra.mxu0 0
          %602 = vmatprep.subr.bf16.mxu0 0
          %603 = vmatpush1.bf16.msra.mxu0 0
          %604 = vmatprep.subr.bf16.mxu0 0
          %605 = vmatpush1.bf16.msra.mxu0 0
          %606 = vmatprep.subr.bf16.mxu0 0
          %607 = vmatpush1.bf16.msra.mxu0 0
          %608 = vmatprep.subr.bf16.mxu0 0
          %609 = vmatpush1.bf16.msra.mxu0 0
          %610 = vmatprep.subr.bf16.mxu0 0
          %611 = vmatpush1.bf16.msra.mxu0 0
          %612 = vmatprep.subr.bf16.mxu0 0
          %613 = vmatpush1.bf16.msra.mxu0 0
          %614 = vmatprep.subr.bf16.mxu0 0
          %615 = vmatpush1.bf16.msra.mxu0 0
          %616 = vmatprep.subr.bf16.mxu0 0
          %617 = vmatpush1.bf16.msra.mxu0 0
          %618 = vmatprep.subr.bf16.mxu0 0
          %619 = vmatpush1.bf16.msra.mxu0 0
          %620 = vmatprep.subr.bf16.mxu0 0
          %621 = vmatpush1.bf16.msra.mxu0 0
          %622 = vmatprep.subr.bf16.mxu0 0
          %623 = vmatpush1.bf16.msra.mxu0 0
          %624 = vmatprep.subr.bf16.mxu0 0
          %625 = vmatpush1.bf16.msra.mxu0 0
          %626 = vmatprep.mubr.bf16.mxu0 0
          %627 = vmatmul.mubr.bf16.gmra.mrb[0].mxu0 %v592
          %v628 = vpop.f32.mrb[0].mxu0
          %v629 = vadd.f32 %v576, %v628
          %v630 = vpop.f32.mrb[0].mxu0
          %v631 = vpop.f32.mrb[0].mxu0
          %v632 = vpop.f32.mrb[0].mxu0
          %633 = vdwg.mxu0
          %v634 = vpack.c.bf16 %v629, %v629
          %vm635 = vcmask 257024
          %636 = vst.msk [vmem:[#allocation2] sm:$0xf] %vm635, %v634
          %v637 = vld [vmem:[%s5] sm:$0xf]
          %v638 = vld [vmem:[%s5 + $0x4] sm:$0xf]
          %v639 = vld [vmem:[%s5 + $0x8] sm:$0xf]
          %v640 = vld [vmem:[%s5 + $0xc] sm:$0xf]
          %v641 = vld [vmem:[%s6] sm:$0x1]
          %v643 = vlaneseq
          %v644 = vshrl.u32 %v643, 7
          %v645 = vsub.s32 0, %v644
          %v646 = vrot.slane %v641, %v645
          %v652 = vunpack.c.l.b16 %v637
          %v653 = vunpack.c.l.b16 %v638
          %v654 = vunpack.c.l.b16 %v639
          %v655 = vunpack.c.l.b16 %v640
          %v656 = vpack.c.b16 %v653, %v652
          %v657 = vpack.c.b16 %v655, %v654
          %660 = vmatprep.subr.bf16.mxu0 0
          %661 = vmatpush1.bf16.msra.mxu0 %v656
          %662 = vmatprep.subr.bf16.mxu0 0
          %663 = vmatpush1.bf16.msra.mxu0 %v657
          %664 = vmatprep.subr.bf16.mxu0 0
          %665 = vmatpush1.bf16.msra.mxu0 0
          %666 = vmatprep.subr.bf16.mxu0 0
          %667 = vmatpush1.bf16.msra.mxu0 0
          %668 = vmatprep.subr.bf16.mxu0 0
          %669 = vmatpush1.bf16.msra.mxu0 0
          %670 = vmatprep.subr.bf16.mxu0 0
          %671 = vmatpush1.bf16.msra.mxu0 0
          %672 = vmatprep.subr.bf16.mxu0 0
          %673 = vmatpush1.bf16.msra.mxu0 0
          %674 = vmatprep.subr.bf16.mxu0 0
          %675 = vmatpush1.bf16.msra.mxu0 0
          %676 = vmatprep.subr.bf16.mxu0 0
          %677 = vmatpush1.bf16.msra.mxu0 0
          %678 = vmatprep.subr.bf16.mxu0 0
          %679 = vmatpush1.bf16.msra.mxu0 0
          %680 = vmatprep.subr.bf16.mxu0 0
          %681 = vmatpush1.bf16.msra.mxu0 0
          %682 = vmatprep.subr.bf16.mxu0 0
          %683 = vmatpush1.bf16.msra.mxu0 0
          %684 = vmatprep.subr.bf16.mxu0 0
          %685 = vmatpush1.bf16.msra.mxu0 0
          %686 = vmatprep.subr.bf16.mxu0 0
          %687 = vmatpush1.bf16.msra.mxu0 0
          %688 = vmatprep.subr.bf16.mxu0 0
          %689 = vmatpush1.bf16.msra.mxu0 0
          %690 = vmatprep.subr.bf16.mxu0 0
          %691 = vmatpush1.bf16.msra.mxu0 0
          %692 = vmatprep.mubr.bf16.mxu0 0
          %693 = vmatmul.mubr.bf16.gmra.mrb[0].mxu0 %v592
          %v694 = vpop.f32.mrb[0].mxu0
          %v695 = vadd.f32 %v646, %v694
          %v696 = vpop.f32.mrb[0].mxu0
          %v697 = vpop.f32.mrb[0].mxu0
          %v698 = vpop.f32.mrb[0].mxu0
          %699 = vdwg.mxu0
          %v700 = vpack.c.bf16 %v695, %v695
          %701 = vst.msk [vmem:[#allocation3] sm:$0xf] %vm635, %v700
        $region96: #{tpu_custom_call.1} parent=87 // pred_fallthru
          _
        %s702 = smul.u32 %s37, 8
        %s703 = sshra.s32 %s702, 3
        %s704 = sand.u32 %s702, 7
        %s705 = smul.addr %s703, 4
        %s706 = scalar_lea.vmem [#allocation4], %s705
        %v707 = vld [vmem:[%s706] sm:$0xf]
        %v708 = vld [vmem:[%s1] sm:$0xf]
        %v709 = vld [vmem:[%s1 + $0x4] sm:$0xf]
        %v710 = vld [vmem:[%s1 + $0x8] sm:$0xf]
        %v711 = vld [vmem:[%s1 + $0xc] sm:$0xf]
        %v712 = vld [vmem:[%s2] sm:$0x1]
        %v714 = vlaneseq
        %v715 = vshrl.u32 %v714, 7
        %v716 = vsub.s32 0, %v715
        %v717 = vrot.slane %v712, %v716
        %v723 = vunpack.c.l.b16 %v708
        %v724 = vunpack.c.l.b16 %v709
        %v725 = vunpack.c.l.b16 %v710
        %v726 = vunpack.c.l.b16 %v711
        %v727 = vpack.c.b16 %v724, %v723
        %v728 = vpack.c.b16 %v726, %v725
        %vm731 = vcmask 261120
        %v733 = vsel %vm731, %v707, 0
        %735 = vmatprep.subr.bf16.mxu0 0
        %736 = vmatpush1.bf16.msra.mxu0 %v727
        %737 = vmatprep.subr.bf16.mxu0 0
        %738 = vmatpush1.bf16.msra.mxu0 %v728
        %739 = vmatprep.subr.bf16.mxu0 0
        %740 = vmatpush1.bf16.msra.mxu0 0
        %741 = vmatprep.subr.bf16.mxu0 0
        %742 = vmatpush1.bf16.msra.mxu0 0
        %743 = vmatprep.subr.bf16.mxu0 0
        %744 = vmatpush1.bf16.msra.mxu0 0
        %745 = vmatprep.subr.bf16.mxu0 0
        %746 = vmatpush1.bf16.msra.mxu0 0
        %747 = vmatprep.subr.bf16.mxu0 0
        %748 = vmatpush1.bf16.msra.mxu0 0
        %749 = vmatprep.subr.bf16.mxu0 0
        %750 = vmatpush1.bf16.msra.mxu0 0
        %751 = vmatprep.subr.bf16.mxu0 0
        %752 = vmatpush1.bf16.msra.mxu0 0
        %753 = vmatprep.subr.bf16.mxu0 0
        %754 = vmatpush1.bf16.msra.mxu0 0
        %755 = vmatprep.subr.bf16.mxu0 0
        %756 = vmatpush1.bf16.msra.mxu0 0
        %757 = vmatprep.subr.bf16.mxu0 0
        %758 = vmatpush1.bf16.msra.mxu0 0
        %759 = vmatprep.subr.bf16.mxu0 0
        %760 = vmatpush1.bf16.msra.mxu0 0
        %761 = vmatprep.subr.bf16.mxu0 0
        %762 = vmatpush1.bf16.msra.mxu0 0
        %763 = vmatprep.subr.bf16.mxu0 0
        %764 = vmatpush1.bf16.msra.mxu0 0
        %765 = vmatprep.subr.bf16.mxu0 0
        %766 = vmatpush1.bf16.msra.mxu0 0
        %767 = vmatprep.mubr.bf16.mxu0 0
        %768 = vmatmul.mubr.bf16.gmra.mrb[0].mxu0 %v733
        %v769 = vpop.f32.mrb[0].mxu0
        %v770 = vadd.f32 %v717, %v769
        %v771 = vpop.f32.mrb[0].mxu0
        %v772 = vpop.f32.mrb[0].mxu0
        %v773 = vpop.f32.mrb[0].mxu0
        %774 = vdwg.mxu0
        %v775 = vld [vmem:[#allocation2] sm:$0xf]
        %v776 = vld [vmem:[#allocation3] sm:$0xf]
        %v777 = vpack.c.bf16 %v770, %v770
        %vm778 = vcmask 64512
        %v780 = vsel %vm778, %v777, 0
        %v783 = vsel %vm778, %v775, 0
        %785 = vmatprep.subr.bf16.mxu0 0
        %786 = vmatpush1.bf16.xpose.msra.mxu0 %v783
        %787 = vmatprep.subr.bf16.mxu0 0
        %788 = vmatpush1.bf16.xpose.msra.mxu0 0
        %789 = vmatprep.subr.bf16.mxu0 0
        %790 = vmatpush1.bf16.xpose.msra.mxu0 0
        %791 = vmatprep.subr.bf16.mxu0 0
        %792 = vmatpush1.bf16.xpose.msra.mxu0 0
        %793 = vmatprep.subr.bf16.mxu0 0
        %794 = vmatpush1.bf16.xpose.msra.mxu0 0
        %795 = vmatprep.subr.bf16.mxu0 0
        %796 = vmatpush1.bf16.xpose.msra.mxu0 0
        %797 = vmatprep.subr.bf16.mxu0 0
        %798 = vmatpush1.bf16.xpose.msra.mxu0 0
        %799 = vmatprep.subr.bf16.mxu0 0
        %800 = vmatpush1.bf16.xpose.msra.mxu0 0
        %801 = vmatprep.subr.bf16.mxu0 0
        %802 = vmatpush1.bf16.xpose.msra.mxu0 0
        %803 = vmatprep.subr.bf16.mxu0 0
        %804 = vmatpush1.bf16.xpose.msra.mxu0 0
        %805 = vmatprep.subr.bf16.mxu0 0
        %806 = vmatpush1.bf16.xpose.msra.mxu0 0
        %807 = vmatprep.subr.bf16.mxu0 0
        %808 = vmatpush1.bf16.xpose.msra.mxu0 0
        %809 = vmatprep.subr.bf16.mxu0 0
        %810 = vmatpush1.bf16.xpose.msra.mxu0 0
        %811 = vmatprep.subr.bf16.mxu0 0
        %812 = vmatpush1.bf16.xpose.msra.mxu0 0
        %813 = vmatprep.subr.bf16.mxu0 0
        %814 = vmatpush1.bf16.xpose.msra.mxu0 0
        %815 = vmatprep.subr.bf16.mxu0 0
        %816 = vmatpush1.bf16.xpose.msra.mxu0 0
        %817 = vmatprep.mubr.bf16.mxu0 0
        %818 = vmatmul.mubr.bf16.gmra.mrb[0].mxu0 %v780
        %v819 = vpop.f32.mrb[0].mxu0
        %v820 = vadd.f32 0.0, %v819
        %v821 = vpop.f32.mrb[0].mxu0
        %v822 = vpop.f32.mrb[0].mxu0
        %v823 = vpop.f32.mrb[0].mxu0
        %824 = vdwg.mxu0
        %v825 = vsel %vm778, %v820, -inf
        %826 = vmax.xlane.f32.xlu0 %v825
        %v827 = vpop.xlane.xlu0 %826
        %v828 = vsub.f32 %v820, %v827
        %v829 = vmul.f32 %v828, 1.442695
        %v830 = vpow.pop %v829
        %v831 = vsel %vm778, %v830, 0.0
        %832 = vadd.xlane.f32.xlu0 %v831
        %v833 = vpop.xlane.xlu0 %832
        %v834 = vrcp.pop %v833
        %v835 = vmul.f32 %v830, %v834
        %v836 = vpack.c.bf16 %v835, %v835
        %v838 = vsel %vm778, %v836, 0
        %vm840 = vcmask 1043456
        %v842 = vsel %vm840, %v776, 0
        %844 = vmatprep.subr.bf16.mxu0 0
        %845 = vmatpush1.bf16.msra.mxu0 %v842
        %846 = vmatprep.subr.bf16.mxu0 0
        %847 = vmatpush1.bf16.msra.mxu0 0
        %848 = vmatprep.subr.bf16.mxu0 0
        %849 = vmatpush1.bf16.msra.mxu0 0
        %850 = vmatprep.subr.bf16.mxu0 0
        %851 = vmatpush1.bf16.msra.mxu0 0
        %852 = vmatprep.subr.bf16.mxu0 0
        %853 = vmatpush1.bf16.msra.mxu0 0
        %854 = vmatprep.subr.bf16.mxu0 0
        %855 = vmatpush1.bf16.msra.mxu0 0
        %856 = vmatprep.subr.bf16.mxu0 0
        %857 = vmatpush1.bf16.msra.mxu0 0
        %858 = vmatprep.subr.bf16.mxu0 0
        %859 = vmatpush1.bf16.msra.mxu0 0
        %860 = vmatprep.subr.bf16.mxu0 0
        %861 = vmatpush1.bf16.msra.mxu0 0
        %862 = vmatprep.subr.bf16.mxu0 0
        %863 = vmatpush1.bf16.msra.mxu0 0
        %864 = vmatprep.subr.bf16.mxu0 0
        %865 = vmatpush1.bf16.msra.mxu0 0
        %866 = vmatprep.subr.bf16.mxu0 0
        %867 = vmatpush1.bf16.msra.mxu0 0
        %868 = vmatprep.subr.bf16.mxu0 0
        %869 = vmatpush1.bf16.msra.mxu0 0
        %870 = vmatprep.subr.bf16.mxu0 0
        %871 = vmatpush1.bf16.msra.mxu0 0
        %872 = vmatprep.subr.bf16.mxu0 0
        %873 = vmatpush1.bf16.msra.mxu0 0
        %874 = vmatprep.subr.bf16.mxu0 0
        %875 = vmatpush1.bf16.msra.mxu0 0
        %876 = vmatprep.mubr.bf16.mxu0 0
        %877 = vmatmul.mubr.bf16.gmra.mrb[0].mxu0 %v838
        %v878 = vpop.f32.mrb[0].mxu0
        %v879 = vadd.f32 0.0, %v878
        %v880 = vpop.f32.mrb[0].mxu0
        %v881 = vpop.f32.mrb[0].mxu0
        %v882 = vpop.f32.mrb[0].mxu0
        %883 = vdwg.mxu0
        %885 = vrot.lane.b32.xlu0 %v777, 120
        %v886 = vpop.permute.xlu0 %885
        %v888 = vunpack.c.l.b16 %v775
        %v889 = vpack.c.b16 %v888, %v888
        %890 = vrot.lane.b32.xlu0 %v889, 120
        %v891 = vpop.permute.xlu0 %890
        %v893 = vsel %vm778, %v886, 0
        %v896 = vsel %vm778, %v891, 0
        %898 = vmatprep.subr.bf16.mxu0 0
        %899 = vmatpush1.bf16.xpose.msra.mxu0 %v896
        %900 = vmatprep.subr.bf16.mxu0 0
        %901 = vmatpush1.bf16.xpose.msra.mxu0 0
        %902 = vmatprep.subr.bf16.mxu0 0
        %903 = vmatpush1.bf16.xpose.msra.mxu0 0
        %904 = vmatprep.subr.bf16.mxu0 0
        %905 = vmatpush1.bf16.xpose.msra.mxu0 0
        %906 = vmatprep.subr.bf16.mxu0 0
        %907 = vmatpush1.bf16.xpose.msra.mxu0 0
        %908 = vmatprep.subr.bf16.mxu0 0
        %909 = vmatpush1.bf16.xpose.msra.mxu0 0
        %910 = vmatprep.subr.bf16.mxu0 0
        %911 = vmatpush1.bf16.xpose.msra.mxu0 0
        %912 = vmatprep.subr.bf16.mxu0 0
        %913 = vmatpush1.bf16.xpose.msra.mxu0 0
        %914 = vmatprep.subr.bf16.mxu0 0
        %915 = vmatpush1.bf16.xpose.msra.mxu0 0
        %916 = vmatprep.subr.bf16.mxu0 0
        %917 = vmatpush1.bf16.xpose.msra.mxu0 0
        %918 = vmatprep.subr.bf16.mxu0 0
        %919 = vmatpush1.bf16.xpose.msra.mxu0 0
        %920 = vmatprep.subr.bf16.mxu0 0
        %921 = vmatpush1.bf16.xpose.msra.mxu0 0
        %922 = vmatprep.subr.bf16.mxu0 0
        %923 = vmatpush1.bf16.xpose.msra.mxu0 0
        %924 = vmatprep.subr.bf16.mxu0 0
        %925 = vmatpush1.bf16.xpose.msra.mxu0 0
        %926 = vmatprep.subr.bf16.mxu0 0
        %927 = vmatpush1.bf16.xpose.msra.mxu0 0
        %928 = vmatprep.subr.bf16.mxu0 0
        %929 = vmatpush1.bf16.xpose.msra.mxu0 0
        %930 = vmatprep.mubr.bf16.mxu0 0
        %931 = vmatmul.mubr.bf16.gmra.mrb[0].mxu0 %v893
        %v932 = vpop.f32.mrb[0].mxu0
        %v933 = vadd.f32 0.0, %v932
        %v934 = vpop.f32.mrb[0].mxu0
        %v935 = vpop.f32.mrb[0].mxu0
        %v936 = vpop.f32.mrb[0].mxu0
        %937 = vdwg.mxu0
        %v938 = vsel %vm778, %v933, -inf
        %939 = vmax.xlane.f32.xlu0 %v938
        %v940 = vpop.xlane.xlu0 %939
        %v941 = vsub.f32 %v933, %v940
        %v942 = vmul.f32 %v941, 1.442695
        %v943 = vpow.pop %v942
        %v944 = vsel %vm778, %v943, 0.0
        %945 = vadd.xlane.f32.xlu0 %v944
        %v946 = vpop.xlane.xlu0 %945
        %v947 = vrcp.pop %v946
        %v948 = vmul.f32 %v943, %v947
        %v949 = vpack.c.bf16 %v948, %v948
        %v951 = vunpack.c.l.b16 %v776
        %v952 = vpack.c.b16 %v951, %v951
        %953 = vrot.lane.b32.xlu0 %v952, 120
        %v954 = vpop.permute.xlu0 %953
        %v956 = vsel %vm778, %v949, 0
        %v959 = vsel %vm840, %v954, 0
        %961 = vmatprep.subr.bf16.mxu0 0
        %962 = vmatpush1.bf16.msra.mxu0 %v959
        %963 = vmatprep.subr.bf16.mxu0 0
        %964 = vmatpush1.bf16.msra.mxu0 0
        %965 = vmatprep.subr.bf16.mxu0 0
        %966 = vmatpush1.bf16.msra.mxu0 0
        %967 = vmatprep.subr.bf16.mxu0 0
        %968 = vmatpush1.bf16.msra.mxu0 0
        %969 = vmatprep.subr.bf16.mxu0 0
        %970 = vmatpush1.bf16.msra.mxu0 0
        %971 = vmatprep.subr.bf16.mxu0 0
        %972 = vmatpush1.bf16.msra.mxu0 0
        %973 = vmatprep.subr.bf16.mxu0 0
        %974 = vmatpush1.bf16.msra.mxu0 0
        %975 = vmatprep.subr.bf16.mxu0 0
        %976 = vmatpush1.bf16.msra.mxu0 0
        %977 = vmatprep.subr.bf16.mxu0 0
        %978 = vmatpush1.bf16.msra.mxu0 0
        %979 = vmatprep.subr.bf16.mxu0 0
        %980 = vmatpush1.bf16.msra.mxu0 0
        %981 = vmatprep.subr.bf16.mxu0 0
        %982 = vmatpush1.bf16.msra.mxu0 0
        %983 = vmatprep.subr.bf16.mxu0 0
        %984 = vmatpush1.bf16.msra.mxu0 0
        %985 = vmatprep.subr.bf16.mxu0 0
        %986 = vmatpush1.bf16.msra.mxu0 0
        %987 = vmatprep.subr.bf16.mxu0 0
        %988 = vmatpush1.bf16.msra.mxu0 0
        %989 = vmatprep.subr.bf16.mxu0 0
        %990 = vmatpush1.bf16.msra.mxu0 0
        %991 = vmatprep.subr.bf16.mxu0 0
        %992 = vmatpush1.bf16.msra.mxu0 0
        %993 = vmatprep.mubr.bf16.mxu0 0
        %994 = vmatmul.mubr.bf16.gmra.mrb[0].mxu0 %v956
        %v995 = vpop.f32.mrb[0].mxu0
        %v996 = vadd.f32 0.0, %v995
        %v997 = vpop.f32.mrb[0].mxu0
        %v998 = vpop.f32.mrb[0].mxu0
        %v999 = vpop.f32.mrb[0].mxu0
        %1000 = vdwg.mxu0
        %1001 = vrot.lane.b32.xlu0 %v777, 112
        %v1002 = vpop.permute.xlu0 %1001
        %1003 = vrot.lane.b32.xlu0 %v889, 112
        %v1004 = vpop.permute.xlu0 %1003
        %v1006 = vsel %vm778, %v1002, 0
        %v1009 = vsel %vm778, %v1004, 0
        %1011 = vmatprep.subr.bf16.mxu0 0
        %1012 = vmatpush1.bf16.xpose.msra.mxu0 %v1009
        %1013 = vmatprep.subr.bf16.mxu0 0
        %1014 = vmatpush1.bf16.xpose.msra.mxu0 0
        %1015 = vmatprep.subr.bf16.mxu0 0
        %1016 = vmatpush1.bf16.xpose.msra.mxu0 0
        %1017 = vmatprep.subr.bf16.mxu0 0
        %1018 = vmatpush1.bf16.xpose.msra.mxu0 0
        %1019 = vmatprep.subr.bf16.mxu0 0
        %1020 = vmatpush1.bf16.xpose.msra.mxu0 0
        %1021 = vmatprep.subr.bf16.mxu0 0
        %1022 = vmatpush1.bf16.xpose.msra.mxu0 0
        %1023 = vmatprep.subr.bf16.mxu0 0
        %1024 = vmatpush1.bf16.xpose.msra.mxu0 0
        %1025 = vmatprep.subr.bf16.mxu0 0
        %1026 = vmatpush1.bf16.xpose.msra.mxu0 0
        %1027 = vmatprep.subr.bf16.mxu0 0
        %1028 = vmatpush1.bf16.xpose.msra.mxu0 0
        %1029 = vmatprep.subr.bf16.mxu0 0
        %1030 = vmatpush1.bf16.xpose.msra.mxu0 0
        %1031 = vmatprep.subr.bf16.mxu0 0
        %1032 = vmatpush1.bf16.xpose.msra.mxu0 0
        %1033 = vmatprep.subr.bf16.mxu0 0
        %1034 = vmatpush1.bf16.xpose.msra.mxu0 0
        %1035 = vmatprep.subr.bf16.mxu0 0
        %1036 = vmatpush1.bf16.xpose.msra.mxu0 0
        %1037 = vmatprep.subr.bf16.mxu0 0
        %1038 = vmatpush1.bf16.xpose.msra.mxu0 0
        %1039 = vmatprep.subr.bf16.mxu0 0
        %1040 = vmatpush1.bf16.xpose.msra.mxu0 0
        %1041 = vmatprep.subr.bf16.mxu0 0
        %1042 = vmatpush1.bf16.xpose.msra.mxu0 0
        %1043 = vmatprep.mubr.bf16.mxu0 0
        %1044 = vmatmul.mubr.bf16.gmra.mrb[0].mxu0 %v1006
        %v1045 = vpop.f32.mrb[0].mxu0
        %v1046 = vadd.f32 0.0, %v1045
        %v1047 = vpop.f32.mrb[0].mxu0
        %v1048 = vpop.f32.mrb[0].mxu0
        %v1049 = vpop.f32.mrb[0].mxu0
        %1050 = vdwg.mxu0
        %v1051 = vsel %vm778, %v1046, -inf
        %1052 = vmax.xlane.f32.xlu0 %v1051
        %v1053 = vpop.xlane.xlu0 %1052
        %v1054 = vsub.f32 %v1046, %v1053
        %v1055 = vmul.f32 %v1054, 1.442695
        %v1056 = vpow.pop %v1055
        %v1057 = vsel %vm778, %v1056, 0.0
        %1058 = vadd.xlane.f32.xlu0 %v1057
        %v1059 = vpop.xlane.xlu0 %1058
        %v1060 = vrcp.pop %v1059
        %v1061 = vmul.f32 %v1056, %v1060
        %v1062 = vpack.c.bf16 %v1061, %v1061
        %1063 = vrot.lane.b32.xlu0 %v952, 112
        %v1064 = vpop.permute.xlu0 %1063
        %v1066 = vsel %vm778, %v1062, 0
        %v1069 = vsel %vm840, %v1064, 0
        %1071 = vmatprep.subr.bf16.mxu0 0
        %1072 = vmatpush1.bf16.msra.mxu0 %v1069
        %1073 = vmatprep.subr.bf16.mxu0 0
        %1074 = vmatpush1.bf16.msra.mxu0 0
        %1075 = vmatprep.subr.bf16.mxu0 0
        %1076 = vmatpush1.bf16.msra.mxu0 0
        %1077 = vmatprep.subr.bf16.mxu0 0
        %1078 = vmatpush1.bf16.msra.mxu0 0
        %1079 = vmatprep.subr.bf16.mxu0 0
        %1080 = vmatpush1.bf16.msra.mxu0 0
        %1081 = vmatprep.subr.bf16.mxu0 0
        %1082 = vmatpush1.bf16.msra.mxu0 0
        %1083 = vmatprep.subr.bf16.mxu0 0
        %1084 = vmatpush1.bf16.msra.mxu0 0
        %1085 = vmatprep.subr.bf16.mxu0 0
        %1086 = vmatpush1.bf16.msra.mxu0 0
        %1087 = vmatprep.subr.bf16.mxu0 0
        %1088 = vmatpush1.bf16.msra.mxu0 0
        %1089 = vmatprep.subr.bf16.mxu0 0
        %1090 = vmatpush1.bf16.msra.mxu0 0
        %1091 = vmatprep.subr.bf16.mxu0 0
        %1092 = vmatpush1.bf16.msra.mxu0 0
        %1093 = vmatprep.subr.bf16.mxu0 0
        %1094 = vmatpush1.bf16.msra.mxu0 0
        %1095 = vmatprep.subr.bf16.mxu0 0
        %1096 = vmatpush1.bf16.msra.mxu0 0
        %1097 = vmatprep.subr.bf16.mxu0 0
        %1098 = vmatpush1.bf16.msra.mxu0 0
        %1099 = vmatprep.subr.bf16.mxu0 0
        %1100 = vmatpush1.bf16.msra.mxu0 0
        %1101 = vmatprep.subr.bf16.mxu0 0
        %1102 = vmatpush1.bf16.msra.mxu0 0
        %1103 = vmatprep.mubr.bf16.mxu0 0
        %1104 = vmatmul.mubr.bf16.gmra.mrb[0].mxu0 %v1066
        %v1105 = vpop.f32.mrb[0].mxu0
        %v1106 = vadd.f32 0.0, %v1105
        %v1107 = vpop.f32.mrb[0].mxu0
        %v1108 = vpop.f32.mrb[0].mxu0
        %v1109 = vpop.f32.mrb[0].mxu0
        %1110 = vdwg.mxu0
        %1111 = vrot.lane.b32.xlu0 %v777, 104
        %v1112 = vpop.permute.xlu0 %1111
        %1113 = vrot.lane.b32.xlu0 %v889, 104
        %v1114 = vpop.permute.xlu0 %1113
        %v1116 = vsel %vm778, %v1112, 0
        %v1119 = vsel %vm778, %v1114, 0
        %1121 = vmatprep.subr.bf16.mxu0 0
        %1122 = vmatpush1.bf16.xpose.msra.mxu0 %v1119
        %1123 = vmatprep.subr.bf16.mxu0 0
        %1124 = vmatpush1.bf16.xpose.msra.mxu0 0
        %1125 = vmatprep.subr.bf16.mxu0 0
        %1126 = vmatpush1.bf16.xpose.msra.mxu0 0
        %1127 = vmatprep.subr.bf16.mxu0 0
        %1128 = vmatpush1.bf16.xpose.msra.mxu0 0
        %1129 = vmatprep.subr.bf16.mxu0 0
        %1130 = vmatpush1.bf16.xpose.msra.mxu0 0
        %1131 = vmatprep.subr.bf16.mxu0 0
        %1132 = vmatpush1.bf16.xpose.msra.mxu0 0
        %1133 = vmatprep.subr.bf16.mxu0 0
        %1134 = vmatpush1.bf16.xpose.msra.mxu0 0
        %1135 = vmatprep.subr.bf16.mxu0 0
        %1136 = vmatpush1.bf16.xpose.msra.mxu0 0
        %1137 = vmatprep.subr.bf16.mxu0 0
        %1138 = vmatpush1.bf16.xpose.msra.mxu0 0
        %1139 = vmatprep.subr.bf16.mxu0 0
        %1140 = vmatpush1.bf16.xpose.msra.mxu0 0
        %1141 = vmatprep.subr.bf16.mxu0 0
        %1142 = vmatpush1.bf16.xpose.msra.mxu0 0
        %1143 = vmatprep.subr.bf16.mxu0 0
        %1144 = vmatpush1.bf16.xpose.msra.mxu0 0
        %1145 = vmatprep.subr.bf16.mxu0 0
        %1146 = vmatpush1.bf16.xpose.msra.mxu0 0
        %1147 = vmatprep.subr.bf16.mxu0 0
        %1148 = vmatpush1.bf16.xpose.msra.mxu0 0
        %1149 = vmatprep.subr.bf16.mxu0 0
        %1150 = vmatpush1.bf16.xpose.msra.mxu0 0
        %1151 = vmatprep.subr.bf16.mxu0 0
        %1152 = vmatpush1.bf16.xpose.msra.mxu0 0
        %1153 = vmatprep.mubr.bf16.mxu0 0
        %1154 = vmatmul.mubr.bf16.gmra.mrb[0].mxu0 %v1116
        %v1155 = vpop.f32.mrb[0].mxu0
        %v1156 = vadd.f32 0.0, %v1155
        %v1157 = vpop.f32.mrb[0].mxu0
        %v1158 = vpop.f32.mrb[0].mxu0
        %v1159 = vpop.f32.mrb[0].mxu0
        %1160 = vdwg.mxu0
        %v1161 = vsel %vm778, %v1156, -inf
        %1162 = vmax.xlane.f32.xlu0 %v1161
        %v1163 = vpop.xlane.xlu0 %1162
        %v1164 = vsub.f32 %v1156, %v1163
        %v1165 = vmul.f32 %v1164, 1.442695
        %v1166 = vpow.pop %v1165
        %v1167 = vsel %vm778, %v1166, 0.0
        %1168 = vadd.xlane.f32.xlu0 %v1167
        %v1169 = vpop.xlane.xlu0 %1168
        %v1170 = vrcp.pop %v1169
        %v1171 = vmul.f32 %v1166, %v1170
        %v1172 = vpack.c.bf16 %v1171, %v1171
        %1173 = vrot.lane.b32.xlu0 %v952, 104
        %v1174 = vpop.permute.xlu0 %1173
        %v1176 = vsel %vm778, %v1172, 0
        %v1179 = vsel %vm840, %v1174, 0
        %1181 = vmatprep.subr.bf16.mxu0 0
        %1182 = vmatpush1.bf16.msra.mxu0 %v1179
        %1183 = vmatprep.subr.bf16.mxu0 0
        %1184 = vmatpush1.bf16.msra.mxu0 0
        %1185 = vmatprep.subr.bf16.mxu0 0
        %1186 = vmatpush1.bf16.msra.mxu0 0
        %1187 = vmatprep.subr.bf16.mxu0 0
        %1188 = vmatpush1.bf16.msra.mxu0 0
        %1189 = vmatprep.subr.bf16.mxu0 0
        %1190 = vmatpush1.bf16.msra.mxu0 0
        %1191 = vmatprep.subr.bf16.mxu0 0
        %1192 = vmatpush1.bf16.msra.mxu0 0
        %1193 = vmatprep.subr.bf16.mxu0 0
        %1194 = vmatpush1.bf16.msra.mxu0 0
        %1195 = vmatprep.subr.bf16.mxu0 0
        %1196 = vmatpush1.bf16.msra.mxu0 0
        %1197 = vmatprep.subr.bf16.mxu0 0
        %1198 = vmatpush1.bf16.msra.mxu0 0
        %1199 = vmatprep.subr.bf16.mxu0 0
        %1200 = vmatpush1.bf16.msra.mxu0 0
        %1201 = vmatprep.subr.bf16.mxu0 0
        %1202 = vmatpush1.bf16.msra.mxu0 0
        %1203 = vmatprep.subr.bf16.mxu0 0
        %1204 = vmatpush1.bf16.msra.mxu0 0
        %1205 = vmatprep.subr.bf16.mxu0 0
        %1206 = vmatpush1.bf16.msra.mxu0 0
        %1207 = vmatprep.subr.bf16.mxu0 0
        %1208 = vmatpush1.bf16.msra.mxu0 0
        %1209 = vmatprep.subr.bf16.mxu0 0
        %1210 = vmatpush1.bf16.msra.mxu0 0
        %1211 = vmatprep.subr.bf16.mxu0 0
        %1212 = vmatpush1.bf16.msra.mxu0 0
        %1213 = vmatprep.mubr.bf16.mxu0 0
        %1214 = vmatmul.mubr.bf16.gmra.mrb[0].mxu0 %v1176
        %v1215 = vpop.f32.mrb[0].mxu0
        %v1216 = vadd.f32 0.0, %v1215
        %v1217 = vpop.f32.mrb[0].mxu0
        %v1218 = vpop.f32.mrb[0].mxu0
        %v1219 = vpop.f32.mrb[0].mxu0
        %1220 = vdwg.mxu0
        %1222 = vrot.lane.b32.xlu0 %v996, 8
        %v1223 = vpop.permute.xlu0 %1222
        %1226 = vrot.lane.b32.xlu0 %v1106, 16
        %v1227 = vpop.permute.xlu0 %1226
        %1230 = vrot.lane.b32.xlu0 %v1216, 24
        %v1231 = vpop.permute.xlu0 %1230
        %v1233 = vsel %vm778, %v879, %v1223
        %vm1234 = vcmask 130048
        %v1235 = vsel %vm1234, %v1233, %v1227
        %vm1236 = vcmask 195584
        %v1237 = vsel %vm1236, %v1235, %v1231
        %v1238 = vpack.c.bf16 %v1237, %v1237
        %v1239 = vld [vmem:[%s7] sm:$0xf]
        %v1240 = vld [vmem:[%s7 + $0x4] sm:$0xf]
        %v1241 = vld [vmem:[%s7 + $0x8] sm:$0xf]
        %v1242 = vld [vmem:[%s7 + $0xc] sm:$0xf]
        %v1243 = vld [vmem:[%s8] sm:$0x1]
        %v1245 = vlaneseq
        %v1246 = vshrl.u32 %v1245, 7
        %v1247 = vsub.s32 0, %v1246
        %v1248 = vrot.slane %v1243, %v1247
        %v1254 = vunpack.c.l.b16 %v1239
        %v1255 = vunpack.c.l.b16 %v1240
        %v1256 = vunpack.c.l.b16 %v1241
        %v1257 = vunpack.c.l.b16 %v1242
        %v1258 = vpack.c.b16 %v1255, %v1254
        %v1259 = vpack.c.b16 %v1257, %v1256
        %v1263 = vsel %vm731, %v1238, 0
        %1265 = vmatprep.subr.bf16.mxu0 0
        %1266 = vmatpush1.bf16.msra.mxu0 %v1258
        %1267 = vmatprep.subr.bf16.mxu0 0
        %1268 = vmatpush1.bf16.msra.mxu0 %v1259
        %1269 = vmatprep.subr.bf16.mxu0 0
        %1270 = vmatpush1.bf16.msra.mxu0 0
        %1271 = vmatprep.subr.bf16.mxu0 0
        %1272 = vmatpush1.bf16.msra.mxu0 0
        %1273 = vmatprep.subr.bf16.mxu0 0
        %1274 = vmatpush1.bf16.msra.mxu0 0
        %1275 = vmatprep.subr.bf16.mxu0 0
        %1276 = vmatpush1.bf16.msra.mxu0 0
        %1277 = vmatprep.subr.bf16.mxu0 0
        %1278 = vmatpush1.bf16.msra.mxu0 0
        %1279 = vmatprep.subr.bf16.mxu0 0
        %1280 = vmatpush1.bf16.msra.mxu0 0
        %1281 = vmatprep.subr.bf16.mxu0 0
        %1282 = vmatpush1.bf16.msra.mxu0 0
        %1283 = vmatprep.subr.bf16.mxu0 0
        %1284 = vmatpush1.bf16.msra.mxu0 0
        %1285 = vmatprep.subr.bf16.mxu0 0
        %1286 = vmatpush1.bf16.msra.mxu0 0
        %1287 = vmatprep.subr.bf16.mxu0 0
        %1288 = vmatpush1.bf16.msra.mxu0 0
        %1289 = vmatprep.subr.bf16.mxu0 0
        %1290 = vmatpush1.bf16.msra.mxu0 0
        %1291 = vmatprep.subr.bf16.mxu0 0
        %1292 = vmatpush1.bf16.msra.mxu0 0
        %1293 = vmatprep.subr.bf16.mxu0 0
        %1294 = vmatpush1.bf16.msra.mxu0 0
        %1295 = vmatprep.subr.bf16.mxu0 0
        %1296 = vmatpush1.bf16.msra.mxu0 0
        %1297 = vmatprep.mubr.bf16.mxu0 0
        %1298 = vmatmul.mubr.bf16.gmra.mrb[0].mxu0 %v1263
        %v1299 = vpop.f32.mrb[0].mxu0
        %v1300 = vadd.f32 %v1248, %v1299
        %v1301 = vpop.f32.mrb[0].mxu0
        %v1302 = vpop.f32.mrb[0].mxu0
        %v1303 = vpop.f32.mrb[0].mxu0
        %1304 = vdwg.mxu0
        %v1305 = vunpack.c.l.bf16 %v707
        %v1306 = vadd.f32 %v1305, %v1300
        %v1307 = vld [vmem:[%s9] sm:$0x1]
        %v1308 = vld [vmem:[%s10] sm:$0x1]
        %v1309 = vsel %vm731, %v1306, 0.0
        %1310 = vadd.xlane.f32.xlu0 %v1309
        %v1311 = vpop.xlane.xlu0 %1310
        %v1312 = vrcp.pop 32.0
        %v1313 = vmul.f32 %v1311, %v1312
        %v1314 = vsub.f32 %v1306, %v1313
        %v1315 = vmul.f32 %v1314, %v1314
        %v1316 = vsel %vm731, %v1315, 0.0
        %1317 = vadd.xlane.f32.xlu0 %v1316
        %v1318 = vpop.xlane.xlu0 %1317
        %v1319 = vmul.f32 %v1318, %v1312
        %v1320 = vadd.f32 %v1319, 1e-05
        %v1321 = vrsqrt.pop %v1320
        %v1322 = vmul.f32 %v1314, %v1321
        %v1324 = vlaneseq
        %v1325 = vshrl.u32 %v1324, 7
        %v1326 = vsub.s32 0, %v1325
        %v1327 = vrot.slane %v1307, %v1326
        %v1329 = vmul.f32 %v1322, %v1327
        %v1331 = vlaneseq
        %v1332 = vshrl.u32 %v1331, 7
        %v1333 = vsub.s32 0, %v1332
        %v1334 = vrot.slane %v1308, %v1333
        %v1336 = vadd.f32 %v1329, %v1334
        %v1337 = vpack.c.bf16 %v1336, %v1336
        %v1338 = vld [vmem:[%s11] sm:$0xf]
        %v1339 = vld [vmem:[%s11 + $0x4] sm:$0xf]
        %v1340 = vld [vmem:[%s11 + $0x8] sm:$0xf]
        %v1341 = vld [vmem:[%s11 + $0xc] sm:$0xf]
        %v1342 = vld [vmem:[%s12] sm:$0x1]
        %v1344 = vlaneseq
        %v1345 = vshrl.u32 %v1344, 7
        %v1346 = vsub.s32 0, %v1345
        %v1347 = vrot.slane %v1342, %v1346
        %v1353 = vunpack.c.l.b16 %v1338
        %v1354 = vunpack.c.l.b16 %v1339
        %v1355 = vunpack.c.l.b16 %v1340
        %v1356 = vunpack.c.l.b16 %v1341
        %v1357 = vpack.c.b16 %v1354, %v1353
        %v1358 = vpack.c.b16 %v1356, %v1355
        %v1362 = vsel %vm731, %v1337, 0
        %1364 = vmatprep.subr.bf16.mxu0 0
        %1365 = vmatpush1.bf16.msra.mxu0 %v1357
        %1366 = vmatprep.subr.bf16.mxu0 0
        %1367 = vmatpush1.bf16.msra.mxu0 %v1358
        %1368 = vmatprep.subr.bf16.mxu0 0
        %1369 = vmatpush1.bf16.msra.mxu0 0
        %1370 = vmatprep.subr.bf16.mxu0 0
        %1371 = vmatpush1.bf16.msra.mxu0 0
        %1372 = vmatprep.subr.bf16.mxu0 0
        %1373 = vmatpush1.bf16.msra.mxu0 0
        %1374 = vmatprep.subr.bf16.mxu0 0
        %1375 = vmatpush1.bf16.msra.mxu0 0
        %1376 = vmatprep.subr.bf16.mxu0 0
        %1377 = vmatpush1.bf16.msra.mxu0 0
        %1378 = vmatprep.subr.bf16.mxu0 0
        %1379 = vmatpush1.bf16.msra.mxu0 0
        %1380 = vmatprep.subr.bf16.mxu0 0
        %1381 = vmatpush1.bf16.msra.mxu0 0
        %1382 = vmatprep.subr.bf16.mxu0 0
        %1383 = vmatpush1.bf16.msra.mxu0 0
        %1384 = vmatprep.subr.bf16.mxu0 0
        %1385 = vmatpush1.bf16.msra.mxu0 0
        %1386 = vmatprep.subr.bf16.mxu0 0
        %1387 = vmatpush1.bf16.msra.mxu0 0
        %1388 = vmatprep.subr.bf16.mxu0 0
        %1389 = vmatpush1.bf16.msra.mxu0 0
        %1390 = vmatprep.subr.bf16.mxu0 0
        %1391 = vmatpush1.bf16.msra.mxu0 0
        %1392 = vmatprep.subr.bf16.mxu0 0
        %1393 = vmatpush1.bf16.msra.mxu0 0
        %1394 = vmatprep.subr.bf16.mxu0 0
        %1395 = vmatpush1.bf16.msra.mxu0 0
        %1396 = vmatprep.mubr.bf16.mxu0 0
        %1397 = vmatmul.mubr.bf16.gmra.mrb[0].mxu0 %v1362
        %v1398 = vpop.f32.mrb[0].mxu0
        %v1399 = vadd.f32 %v1347, %v1398
        %v1400 = vpop.f32.mrb[0].mxu0
        %v1401 = vpop.f32.mrb[0].mxu0
        %v1402 = vpop.f32.mrb[0].mxu0
        %1403 = vdwg.mxu0
        %v1404 = vmul.f32 %v1399, 0.5
        %v1405 = vmul.f32 %v1399, 0.70710677
        %v1406 = verf.f32.pop %v1405
        %v1407 = vadd.f32 %v1406, 1.0
        %v1408 = vmul.f32 %v1404, %v1407
        %v1409 = vpack.c.bf16 %v1408, %v1408
        %v1410 = vld [vmem:[%s13] sm:$0xf]
        %v1411 = vld [vmem:[%s13 + $0x4] sm:$0xf]
        %v1412 = vld [vmem:[%s13 + $0x8] sm:$0xf]
        %v1413 = vld [vmem:[%s13 + $0xc] sm:$0xf]
        %v1414 = vld [vmem:[%s13 + $0x10] sm:$0xf]
        %v1415 = vld [vmem:[%s13 + $0x14] sm:$0xf]
        %v1416 = vld [vmem:[%s13 + $0x18] sm:$0xf]
        %v1417 = vld [vmem:[%s13 + $0x1c] sm:$0xf]
        %v1418 = vld [vmem:[%s13 + $0x20] sm:$0xf]
        %v1419 = vld [vmem:[%s13 + $0x24] sm:$0xf]
        %v1420 = vld [vmem:[%s13 + $0x28] sm:$0xf]
        %v1421 = vld [vmem:[%s13 + $0x2c] sm:$0xf]
        %v1422 = vld [vmem:[%s13 + $0x30] sm:$0xf]
        %v1423 = vld [vmem:[%s13 + $0x34] sm:$0xf]
        %v1424 = vld [vmem:[%s13 + $0x38] sm:$0xf]
        %v1425 = vld [vmem:[%s13 + $0x3c] sm:$0xf]
        %v1426 = vld [vmem:[%s14] sm:$0x1]
        %v1428 = vlaneseq
        %v1429 = vshrl.u32 %v1428, 7
        %v1430 = vsub.s32 0, %v1429
        %v1431 = vrot.slane %v1426, %v1430
        %v1449 = vunpack.c.l.b16 %v1410
        %v1450 = vunpack.c.l.b16 %v1411
        %v1451 = vunpack.c.l.b16 %v1412
        %v1452 = vunpack.c.l.b16 %v1413
        %v1453 = vunpack.c.l.b16 %v1414
        %v1454 = vunpack.c.l.b16 %v1415
        %v1455 = vunpack.c.l.b16 %v1416
        %v1456 = vunpack.c.l.b16 %v1417
        %v1457 = vunpack.c.l.b16 %v1418
        %v1458 = vunpack.c.l.b16 %v1419
        %v1459 = vunpack.c.l.b16 %v1420
        %v1460 = vunpack.c.l.b16 %v1421
        %v1461 = vunpack.c.l.b16 %v1422
        %v1462 = vunpack.c.l.b16 %v1423
        %v1463 = vunpack.c.l.b16 %v1424
        %v1464 = vunpack.c.l.b16 %v1425
        %v1465 = vpack.c.b16 %v1450, %v1449
        %v1466 = vpack.c.b16 %v1452, %v1451
        %v1467 = vpack.c.b16 %v1454, %v1453
        %v1468 = vpack.c.b16 %v1456, %v1455
        %v1469 = vpack.c.b16 %v1458, %v1457
        %v1470 = vpack.c.b16 %v1460, %v1459
        %v1471 = vpack.c.b16 %v1462, %v1461
        %v1472 = vpack.c.b16 %v1464, %v1463
        %1481 = vmatprep.subr.bf16.mxu0 0
        %1482 = vmatpush1.bf16.msra.mxu0 %v1465
        %1483 = vmatprep.subr.bf16.mxu0 0
        %1484 = vmatpush1.bf16.msra.mxu0 %v1466
        %1485 = vmatprep.subr.bf16.mxu0 0
        %1486 = vmatpush1.bf16.msra.mxu0 %v1467
        %1487 = vmatprep.subr.bf16.mxu0 0
        %1488 = vmatpush1.bf16.msra.mxu0 %v1468
        %1489 = vmatprep.subr.bf16.mxu0 0
        %1490 = vmatpush1.bf16.msra.mxu0 %v1469
        %1491 = vmatprep.subr.bf16.mxu0 0
        %1492 = vmatpush1.bf16.msra.mxu0 %v1470
        %1493 = vmatprep.subr.bf16.mxu0 0
        %1494 = vmatpush1.bf16.msra.mxu0 %v1471
        %1495 = vmatprep.subr.bf16.mxu0 0
        %1496 = vmatpush1.bf16.msra.mxu0 %v1472
        %1497 = vmatprep.subr.bf16.mxu0 0
        %1498 = vmatpush1.bf16.msra.mxu0 0
        %1499 = vmatprep.subr.bf16.mxu0 0
        %1500 = vmatpush1.bf16.msra.mxu0 0
        %1501 = vmatprep.subr.bf16.mxu0 0
        %1502 = vmatpush1.bf16.msra.mxu0 0
        %1503 = vmatprep.subr.bf16.mxu0 0
        %1504 = vmatpush1.bf16.msra.mxu0 0
        %1505 = vmatprep.subr.bf16.mxu0 0
        %1506 = vmatpush1.bf16.msra.mxu0 0
        %1507 = vmatprep.subr.bf16.mxu0 0
        %1508 = vmatpush1.bf16.msra.mxu0 0
        %1509 = vmatprep.subr.bf16.mxu0 0
        %1510 = vmatpush1.bf16.msra.mxu0 0
        %1511 = vmatprep.subr.bf16.mxu0 0
        %1512 = vmatpush1.bf16.msra.mxu0 0
        %1513 = vmatprep.mubr.bf16.mxu0 0
        %1514 = vmatmul.mubr.bf16.gmra.mrb[0].mxu0 %v1409
        %v1515 = vpop.f32.mrb[0].mxu0
        %v1516 = vadd.f32 %v1431, %v1515
        %v1517 = vpop.f32.mrb[0].mxu0
        %v1518 = vpop.f32.mrb[0].mxu0
        %v1519 = vpop.f32.mrb[0].mxu0
        %1520 = vdwg.mxu0
        %v1521 = vadd.f32 %v1336, %v1516
        %v1522 = vld [vmem:[%s15] sm:$0x1]
        %v1523 = vld [vmem:[%s16] sm:$0x1]
        %v1524 = vsel %vm731, %v1521, 0.0
        %1525 = vadd.xlane.f32.xlu0 %v1524
        %v1526 = vpop.xlane.xlu0 %1525
        %v1527 = vmul.f32 %v1526, %v1312
        %v1528 = vsub.f32 %v1521, %v1527
        %v1529 = vmul.f32 %v1528, %v1528
        %v1530 = vsel %vm731, %v1529, 0.0
        %1531 = vadd.xlane.f32.xlu0 %v1530
        %v1532 = vpop.xlane.xlu0 %1531
        %v1533 = vmul.f32 %v1532, %v1312
        %v1534 = vadd.f32 %v1533, 1e-05
        %v1535 = vrsqrt.pop %v1534
        %v1536 = vmul.f32 %v1528, %v1535
        %v1538 = vlaneseq
        %v1539 = vshrl.u32 %v1538, 7
        %v1540 = vsub.s32 0, %v1539
        %v1541 = vrot.slane %v1522, %v1540
        %v1543 = vmul.f32 %v1536, %v1541
        %v1545 = vlaneseq
        %v1546 = vshrl.u32 %v1545, 7
        %v1547 = vsub.s32 0, %v1546
        %v1548 = vrot.slane %v1523, %v1547
        %v1550 = vadd.f32 %v1543, %v1548
        %1551 = vst.msk [vmem:[%s560] sm:$0xff] %vm731, %v1550
        %s1552 = sand.u32 %s416, 1
        %s1553 = scalar_lea.sflag [#allocation6], %s1552
        %s1554 = sand.u32 %s416, 1
        %s1555 = smul.addr %s1554, 8
        %s1556 = scalar_lea.vmem [#allocation7], %s1555
        // Predicated region
        $region97: #{tpu_custom_call.1} parent=87 // pred_check
          %p1557 = pneg %p426
        $region98: #{tpu_custom_call.1} parent=87 // pred_check_branch
          %1559 = sbr.rel (%p1557) target = $region100
        $region99: #{tpu_custom_call.1} parent=87 // pred_region
          %s1561 = ssub.s32 128, 128
          %1562 = vsyncadd %s1553, %s1561
          %s1563 = sadd.s32 %s37, %s36
          %s1564 = smul.addr %s1563, 128
          %s1565 = scalar_lea.hbm %s17, %s1564
          %s1567 = sshll.u32 %s1556, 4
          %s1568 = int_to_ptr.vmem [resolvable:$true] %s1567
          %1570 = dma.vmem_to_hbm [thread:$0]  %s1568, 128, %s1565, %s1553
        $region100: #{tpu_custom_call.1} parent=87 // pred_fallthru
          _
      $region88: #{tpu_custom_call.1} parent=5 // pred_fallthru
        _
      %p1571 = scmp.le.s32.totalorder 2, %s27
      // Predicated region
      $region101: #{tpu_custom_call.1} parent=5 // pred_check
        %p1572 = pneg %p1571
      $region102: #{tpu_custom_call.1} parent=5 // pred_check_branch
        %1574 = sbr.rel (%p1572) target = $region104
      $region103: #{tpu_custom_call.1} parent=5 // pred_region
        %s1575 = ssub.s32 %s27, 2
        // Predicated region
        $region105: #{tpu_custom_call.1} parent=103 // pred_check
          %p1576 = pneg %p432
        $region106: #{tpu_custom_call.1} parent=103 // pred_check_branch
          %1578 = sbr.rel (%p1576) target = $region108
        $region107: #{tpu_custom_call.1} parent=103 // pred_region
          %s1579 = sand.u32 %s417, 1
          %s1580 = scalar_lea.sflag [#allocation6], %s1579
          %s1581 = sand.u32 %s417, 1
          %s1582 = smul.addr %s1581, 8
          %s1583 = scalar_lea.vmem [#allocation7], %s1582
          %1584 = dma.done %s1580, 128
        $region108: #{tpu_custom_call.1} parent=103 // pred_fallthru
          _
      $region104: #{tpu_custom_call.1} parent=5 // pred_fallthru
        _
    $region6: #{tpu_custom_call.1} parent=1 // loop_footer
      %s31 = sadd.s32 1, %s27
    $region7: #{tpu_custom_call.1} parent=1 // loop_footer_branch
      %26 = sbr.rel target = $region3
    $region8: #{tpu_custom_call.1} parent=1 // loop_exit
      _
    %1585 = vsyncpa [#allocation5], 1
    %s1586 = scalar_lea.sflag [#allocation5], 1
    %1587 = vsyncpa %s1586, 1
    %1588 = vsyncpa [#allocation6], 1
    %s1589 = scalar_lea.sflag [#allocation6], 1
    %1590 = vsyncpa %s1589, 1

// kernel: tpu_custom_call.1
$region0: #{tpu_custom_call.1}
  #allocation0 [shape = 'u32[]', space=smem, size = 0x4, offset = 0x4, fixed_abs, tag = 'smem constant byte address 0x4 - core index']
  #allocation1 [shape = 'u32[144,128]{1,0:T(1,128)}', space=vmem, size = 0x12000, scoped, tag = 'internal scratch']
  #allocation2 [shape = 'bf16[8,32]{1,0:T(8,128)(2,1)}', space=vmem, size = 0x800, scoped, tag = 'scratch operand']
  #allocation3 [shape = 'bf16[8,32]{1,0:T(8,128)(2,1)}', space=vmem, size = 0x800, scoped, tag = 'scratch operand']
  %s0 = inlined_call_operand.hbm [shape: bf16[2,8,32], index: 0, kind: input, shape index: {}]
  %s1 = inlined_call_operand.vmem [shape: bf16[32,32], index: 1, kind: input, shape index: {}]
  %s2 = inlined_call_operand.vmem [shape: f32[1,32], index: 2, kind: input, shape index: {}]
  %s3 = inlined_call_operand.vmem [shape: bf16[32,32], index: 3, kind: input, shape index: {}]
  %s4 = inlined_call_operand.vmem [shape: f32[1,32], index: 4, kind: input, shape index: {}]
  %s5 = inlined_call_operand.vmem [shape: bf16[32,32], index: 5, kind: input, shape index: {}]
  %s6 = inlined_call_operand.vmem [shape: f32[1,32], index: 6, kind: input, shape index: {}]
  %s7 = inlined_call_operand.vmem [shape: bf16[32,32], index: 7, kind: input, shape index: {}]
  %s8 = inlined_call_operand.vmem [shape: f32[1,32], index: 8, kind: input, shape index: {}]
  %s9 = inlined_call_operand.vmem [shape: f32[1,32], index: 9, kind: input, shape index: {}]
  %s10 = inlined_call_operand.vmem [shape: f32[1,32], index: 10, kind: input, shape index: {}]
  %s11 = inlined_call_operand.vmem [shape: bf16[32,128], index: 11, kind: input, shape index: {}]
  %s12 = inlined_call_operand.vmem [shape: f32[1,128], index: 12, kind: input, shape index: {}]
  %s13 = inlined_call_operand.vmem [shape: bf16[128,32], index: 13, kind: input, shape index: {}]
  %s14 = inlined_call_operand.vmem [shape: f32[1,32], index: 14, kind: input, shape index: {}]
  %s15 = inlined_call_operand.vmem [shape: f32[1,32], index: 15, kind: input, shape index: {}]
  %s16 = inlined_call_operand.vmem [shape: f32[1,32], index: 16, kind: input, shape index: {}]
  %s17 = inlined_call_operand.hbm [shape: f32[2,8,32], index: 17, kind: output, shape index: {}]
  %s18 = sld [smem:[#allocation0]]
  $region109: #{tpu_custom_call.1} parent=0
    _
  %s20 = ssub.s32 1, %s18
  %s21 = scalar_select 0, %s20, %s18
  $region1: #{tpu_custom_call.1} parent=0
    #allocation4 [shape = 'u8[4096]{0}', space=vmem, size = 0x1000, scoped, tag = 'input window, operand 0']
    #allocation5 [shape = 's32[2]{0}', space=sflag, size = 0x8, scoped, tag = 'scoped memory for tpu_custom_call.1']
    #allocation6 [shape = 's32[2]{0}', space=sflag, size = 0x8, scoped, tag = 'scoped memory for tpu_custom_call.1']
    #allocation7 [shape = 'u8[8192]{0}', space=vmem, size = 0x2000, scoped, tag = 'output window, operand 0']
    %22 = vsyncpa [#allocation5], 0
    %s23 = scalar_lea.sflag [#allocation5], 1
    %24 = vsyncpa %s23, 0
    %25 = vsyncpa [#allocation6], 0
    %s26 = scalar_lea.sflag [#allocation6], 1
    %27 = vsyncpa %s26, 0
    loop: start=0, step=1, limit=4
    $region2: #{tpu_custom_call.1} parent=1 // loop_pre_header
      _
    $region3: #{tpu_custom_call.1} parent=1 // loop_header
      %s29 = sphi 0, %s33
      %p30 = scmp.ge.s32.totalorder %s29, 4
      %s36 = sphi 0, %s48
      %s37 = sphi 0, %s44
      %s38 = sphi 0, %s36
      %s39 = sphi 0, %s37
      %s40 = sphi 0, %s38
      %s41 = sphi 0, %s39
      %s51 = sphi 0, %s53
      %s54 = sphi 0, %s51
      %s55 = sphi 0, %s54
      %s71 = sphi 0, %s55
      %s75 = sphi 0, %s75
      %s77 = sphi 0, %s75
      %s78 = sphi 0, %s77
      %s92 = sphi 0, %s78
      %s96 = sphi 0, %s96
      %s98 = sphi 0, %s96
      %s99 = sphi 0, %s98
      %s113 = sphi 0, %s99
      %s117 = sphi 0, %s117
      %s119 = sphi 0, %s117
      %s120 = sphi 0, %s119
      %s134 = sphi 0, %s120
      %s138 = sphi 0, %s138
      %s140 = sphi 0, %s138
      %s141 = sphi 0, %s140
      %s155 = sphi 0, %s141
      %s159 = sphi 0, %s159
      %s161 = sphi 0, %s159
      %s162 = sphi 0, %s161
      %s176 = sphi 0, %s162
      %s180 = sphi 0, %s180
      %s182 = sphi 0, %s180
      %s183 = sphi 0, %s182
      %s197 = sphi 0, %s183
      %s201 = sphi 0, %s201
      %s203 = sphi 0, %s201
      %s204 = sphi 0, %s203
      %s218 = sphi 0, %s204
      %s222 = sphi 0, %s222
      %s224 = sphi 0, %s222
      %s225 = sphi 0, %s224
      %s239 = sphi 0, %s225
      %s243 = sphi 0, %s243
      %s245 = sphi 0, %s243
      %s246 = sphi 0, %s245
      %s260 = sphi 0, %s246
      %s264 = sphi 0, %s264
      %s266 = sphi 0, %s264
      %s267 = sphi 0, %s266
      %s281 = sphi 0, %s267
      %s285 = sphi 0, %s285
      %s287 = sphi 0, %s285
      %s288 = sphi 0, %s287
      %s302 = sphi 0, %s288
      %s306 = sphi 0, %s306
      %s308 = sphi 0, %s306
      %s309 = sphi 0, %s308
      %s323 = sphi 0, %s309
      %s327 = sphi 0, %s327
      %s329 = sphi 0, %s327
      %s330 = sphi 0, %s329
      %s344 = sphi 0, %s330
      %s348 = sphi 0, %s348
      %s350 = sphi 0, %s348
      %s351 = sphi 0, %s350
      %s365 = sphi 0, %s351
      %s369 = sphi 0, %s369
      %s371 = sphi 0, %s369
      %s372 = sphi 0, %s371
      %s386 = sphi 0, %s372
      %s390 = sphi 0, %s390
      %s392 = sphi 0, %s390
      %s393 = sphi 0, %s392
      %s407 = sphi 0, %s393
      %s415 = sphi 0, %s417
      %s418 = sphi 0, %s415
      %s419 = sphi 0, %s418
      %s435 = sphi 0, %s419
    $region4: #{tpu_custom_call.1} parent=1 // loop_header_branch
      %32 = sbr.rel (%p30) target = $region8
    $region5: #{tpu_custom_call.1} parent=1 // loop_body
      %s34 = ssub.s32 %s29, 1
      %s35 = ssub.s32 %s29, 2
      %s42 = sadd.s32 1, %s37
      %p43 = scmp.ge.s32.totalorder %s42, 1
      %s44 = scalar_select %p43, 0, %s42
      %s45 = sadd.s32 1, %s36
      %s46 = scalar_select %p43, %s45, %s36
      %p47 = scmp.ge.s32.totalorder %s46, 2
      %s48 = scalar_select %p47, 0, %s46
      %s49 = ssub.s32 %s36, %s48
      %p50 = scmp.eq.s32.totalorder %s49, 0
      %s52 = sadd.s32 %s51, 1
      %s53 = scalar_select %p50, %s51, %s52
      %p56 = pneg %p50
      %p57 = scmp.eq.s32.totalorder %s29, 1
      %p58 = por %p56, %p57
      %p59 = scmp.ne.s32.totalorder %s51, %s54
      %p60 = scmp.eq.s32.totalorder %s29, 0
      %p61 = por %p59, %p60
      %p62 = scmp.ne.s32.totalorder %s51, %s54
      %p63 = scmp.eq.s32.totalorder %s34, 1
      %p64 = por %p62, %p63
      %p65 = scmp.ne.s32.totalorder %s54, %s55
      %p66 = scmp.eq.s32.totalorder %s34, 0
      %p67 = por %p65, %p66
      %p68 = scmp.ne.s32.totalorder %s54, %s55
      %p69 = scmp.eq.s32.totalorder %s35, 1
      %p70 = por %p68, %p69
      %p72 = scmp.ne.s32.totalorder %s55, %s71
      %p73 = scmp.eq.s32.totalorder %s35, 0
      %p74 = por %p72, %p73
      %s76 = sadd.s32 %s75, 1
      %p79 = scmp.eq.s32.totalorder %s29, 1
      %p80 = scmp.ne.s32.totalorder %s75, %s77
      %p81 = scmp.eq.s32.totalorder %s29, 0
      %p82 = por %p80, %p81
      %p83 = scmp.ne.s32.totalorder %s75, %s77
      %p84 = scmp.eq.s32.totalorder %s34, 1
      %p85 = por %p83, %p84
      %p86 = scmp.ne.s32.totalorder %s77, %s78
      %p87 = scmp.eq.s32.totalorder %s34, 0
      %p88 = por %p86, %p87
      %p89 = scmp.ne.s32.totalorder %s77, %s78
      %p90 = scmp.eq.s32.totalorder %s35, 1
      %p91 = por %p89, %p90
      %p93 = scmp.ne.s32.totalorder %s78, %s92
      %p94 = scmp.eq.s32.totalorder %s35, 0
      %p95 = por %p93, %p94
      %s97 = sadd.s32 %s96, 1
      %p100 = scmp.eq.s32.totalorder %s29, 1
      %p101 = scmp.ne.s32.totalorder %s96, %s98
      %p102 = scmp.eq.s32.totalorder %s29, 0
      %p103 = por %p101, %p102
      %p104 = scmp.ne.s32.totalorder %s96, %s98
      %p105 = scmp.eq.s32.totalorder %s34, 1
      %p106 = por %p104, %p105
      %p107 = scmp.ne.s32.totalorder %s98, %s99
      %p108 = scmp.eq.s32.totalorder %s34, 0
      %p109 = por %p107, %p108
      %p110 = scmp.ne.s32.totalorder %s98, %s99
      %p111 = scmp.eq.s32.totalorder %s35, 1
      %p112 = por %p110, %p111
      %p114 = scmp.ne.s32.totalorder %s99, %s113
      %p115 = scmp.eq.s32.totalorder %s35, 0
      %p116 = por %p114, %p115
      %s118 = sadd.s32 %s117, 1
      %p121 = scmp.eq.s32.totalorder %s29, 1
      %p122 = scmp.ne.s32.totalorder %s117, %s119
      %p123 = scmp.eq.s32.totalorder %s29, 0
      %p124 = por %p122, %p123
      %p125 = scmp.ne.s32.totalorder %s117, %s119
      %p126 = scmp.eq.s32.totalorder %s34, 1
      %p127 = por %p125, %p126
      %p128 = scmp.ne.s32.totalorder %s119, %s120
      %p129 = scmp.eq.s32.totalorder %s34, 0
      %p130 = por %p128, %p129
      %p131 = scmp.ne.s32.totalorder %s119, %s120
      %p132 = scmp.eq.s32.totalorder %s35, 1
      %p133 = por %p131, %p132
      %p135 = scmp.ne.s32.totalorder %s120, %s134
      %p136 = scmp.eq.s32.totalorder %s35, 0
      %p137 = por %p135, %p136
      %s139 = sadd.s32 %s138, 1
      %p142 = scmp.eq.s32.totalorder %s29, 1
      %p143 = scmp.ne.s32.totalorder %s138, %s140
      %p144 = scmp.eq.s32.totalorder %s29, 0
      %p145 = por %p143, %p144
      %p146 = scmp.ne.s32.totalorder %s138, %s140
      %p147 = scmp.eq.s32.totalorder %s34, 1
      %p148 = por %p146, %p147
      %p149 = scmp.ne.s32.totalorder %s140, %s141
      %p150 = scmp.eq.s32.totalorder %s34, 0
      %p151 = por %p149, %p150
      %p152 = scmp.ne.s32.totalorder %s140, %s141
      %p153 = scmp.eq.s32.totalorder %s35, 1
      %p154 = por %p152, %p153
      %p156 = scmp.ne.s32.totalorder %s141, %s155
      %p157 = scmp.eq.s32.totalorder %s35, 0
      %p158 = por %p156, %p157
      %s160 = sadd.s32 %s159, 1
      %p163 = scmp.eq.s32.totalorder %s29, 1
      %p164 = scmp.ne.s32.totalorder %s159, %s161
      %p165 = scmp.eq.s32.totalorder %s29, 0
      %p166 = por %p164, %p165
      %p167 = scmp.ne.s32.totalorder %s159, %s161
      %p168 = scmp.eq.s32.totalorder %s34, 1
      %p169 = por %p167, %p168
      %p170 = scmp.ne.s32.totalorder %s161, %s162
      %p171 = scmp.eq.s32.totalorder %s34, 0
      %p172 = por %p170, %p171
      %p173 = scmp.ne.s32.totalorder %s161, %s162
      %p174 = scmp.eq.s32.totalorder %s35, 1
      %p175 = por %p173, %p174
      %p177 = scmp.ne.s32.totalorder %s162, %s176
      %p178 = scmp.eq.s32.totalorder %s35, 0
      %p179 = por %p177, %p178
      %s181 = sadd.s32 %s180, 1
      %p184 = scmp.eq.s32.totalorder %s29, 1
      %p185 = scmp.ne.s32.totalorder %s180, %s182
      %p186 = scmp.eq.s32.totalorder %s29, 0
      %p187 = por %p185, %p186
      %p188 = scmp.ne.s32.totalorder %s180, %s182
      %p189 = scmp.eq.s32.totalorder %s34, 1
      %p190 = por %p188, %p189
      %p191 = scmp.ne.s32.totalorder %s182, %s183
      %p192 = scmp.eq.s32.totalorder %s34, 0
      %p193 = por %p191, %p192
      %p194 = scmp.ne.s32.totalorder %s182, %s183
      %p195 = scmp.eq.s32.totalorder %s35, 1
      %p196 = por %p194, %p195
      %p198 = scmp.ne.s32.totalorder %s183, %s197
      %p199 = scmp.eq.s32.totalorder %s35, 0
      %p200 = por %p198, %p199
      %s202 = sadd.s32 %s201, 1
      %p205 = scmp.eq.s32.totalorder %s29, 1
      %p206 = scmp.ne.s32.totalorder %s201, %s203
      %p207 = scmp.eq.s32.totalorder %s29, 0
      %p208 = por %p206, %p207
      %p209 = scmp.ne.s32.totalorder %s201, %s203
      %p210 = scmp.eq.s32.totalorder %s34, 1
      %p211 = por %p209, %p210
      %p212 = scmp.ne.s32.totalorder %s203, %s204
      %p213 = scmp.eq.s32.totalorder %s34, 0
      %p214 = por %p212, %p213
      %p215 = scmp.ne.s32.totalorder %s203, %s204
      %p216 = scmp.eq.s32.totalorder %s35, 1
      %p217 = por %p215, %p216
      %p219 = scmp.ne.s32.totalorder %s204, %s218
      %p220 = scmp.eq.s32.totalorder %s35, 0
      %p221 = por %p219, %p220
      %s223 = sadd.s32 %s222, 1
      %p226 = scmp.eq.s32.totalorder %s29, 1
      %p227 = scmp.ne.s32.totalorder %s222, %s224
      %p228 = scmp.eq.s32.totalorder %s29, 0
      %p229 = por %p227, %p228
      %p230 = scmp.ne.s32.totalorder %s222, %s224
      %p231 = scmp.eq.s32.totalorder %s34, 1
      %p232 = por %p230, %p231
      %p233 = scmp.ne.s32.totalorder %s224, %s225
      %p234 = scmp.eq.s32.totalorder %s34, 0
      %p235 = por %p233, %p234
      %p236 = scmp.ne.s32.totalorder %s224, %s225
      %p237 = scmp.eq.s32.totalorder %s35, 1
      %p238 = por %p236, %p237
      %p240 = scmp.ne.s32.totalorder %s225, %s239
      %p241 = scmp.eq.s32.totalorder %s35, 0
      %p242 = por %p240, %p241
      %s244 = sadd.s32 %s243, 1
      %p247 = scmp.eq.s32.totalorder %s29, 1
      %p248 = scmp.ne.s32.totalorder %s243, %s245
      %p249 = scmp.eq.s32.totalorder %s29, 0
      %p250 = por %p248, %p249
      %p251 = scmp.ne.s32.totalorder %s243, %s245
      %p252 = scmp.eq.s32.totalorder %s34, 1
      %p253 = por %p251, %p252
      %p254 = scmp.ne.s32.totalorder %s245, %s246
      %p255 = scmp.eq.s32.totalorder %s34, 0
      %p256 = por %p254, %p255
      %p257 = scmp.ne.s32.totalorder %s245, %s246
      %p258 = scmp.eq.s32.totalorder %s35, 1
      %p259 = por %p257, %p258
      %p261 = scmp.ne.s32.totalorder %s246, %s260
      %p262 = scmp.eq.s32.totalorder %s35, 0
      %p263 = por %p261, %p262
      %s265 = sadd.s32 %s264, 1
      %p268 = scmp.eq.s32.totalorder %s29, 1
      %p269 = scmp.ne.s32.totalorder %s264, %s266
      %p270 = scmp.eq.s32.totalorder %s29, 0
      %p271 = por %p269, %p270
      %p272 = scmp.ne.s32.totalorder %s264, %s266
      %p273 = scmp.eq.s32.totalorder %s34, 1
      %p274 = por %p272, %p273
      %p275 = scmp.ne.s32.totalorder %s266, %s267
      %p276 = scmp.eq.s32.totalorder %s34, 0
      %p277 = por %p275, %p276
      %p278 = scmp.ne.s32.totalorder %s266, %s267
      %p279 = scmp.eq.s32.totalorder %s35, 1
      %p280 = por %p278, %p279
      %p282 = scmp.ne.s32.totalorder %s267, %s281
      %p283 = scmp.eq.s32.totalorder %s35, 0
      %p284 = por %p282, %p283
      %s286 = sadd.s32 %s285, 1
      %p289 = scmp.eq.s32.totalorder %s29, 1
      %p290 = scmp.ne.s32.totalorder %s285, %s287
      %p291 = scmp.eq.s32.totalorder %s29, 0
      %p292 = por %p290, %p291
      %p293 = scmp.ne.s32.totalorder %s285, %s287
      %p294 = scmp.eq.s32.totalorder %s34, 1
      %p295 = por %p293, %p294
      %p296 = scmp.ne.s32.totalorder %s287, %s288
      %p297 = scmp.eq.s32.totalorder %s34, 0
      %p298 = por %p296, %p297
      %p299 = scmp.ne.s32.totalorder %s287, %s288
      %p300 = scmp.eq.s32.totalorder %s35, 1
      %p301 = por %p299, %p300
      %p303 = scmp.ne.s32.totalorder %s288, %s302
      %p304 = scmp.eq.s32.totalorder %s35, 0
      %p305 = por %p303, %p304
      %s307 = sadd.s32 %s306, 1
      %p310 = scmp.eq.s32.totalorder %s29, 1
      %p311 = scmp.ne.s32.totalorder %s306, %s308
      %p312 = scmp.eq.s32.totalorder %s29, 0
      %p313 = por %p311, %p312
      %p314 = scmp.ne.s32.totalorder %s306, %s308
      %p315 = scmp.eq.s32.totalorder %s34, 1
      %p316 = por %p314, %p315
      %p317 = scmp.ne.s32.totalorder %s308, %s309
      %p318 = scmp.eq.s32.totalorder %s34, 0
      %p319 = por %p317, %p318
      %p320 = scmp.ne.s32.totalorder %s308, %s309
      %p321 = scmp.eq.s32.totalorder %s35, 1
      %p322 = por %p320, %p321
      %p324 = scmp.ne.s32.totalorder %s309, %s323
      %p325 = scmp.eq.s32.totalorder %s35, 0
      %p326 = por %p324, %p325
      %s328 = sadd.s32 %s327, 1
      %p331 = scmp.eq.s32.totalorder %s29, 1
      %p332 = scmp.ne.s32.totalorder %s327, %s329
      %p333 = scmp.eq.s32.totalorder %s29, 0
      %p334 = por %p332, %p333
      %p335 = scmp.ne.s32.totalorder %s327, %s329
      %p336 = scmp.eq.s32.totalorder %s34, 1
      %p337 = por %p335, %p336
      %p338 = scmp.ne.s32.totalorder %s329, %s330
      %p339 = scmp.eq.s32.totalorder %s34, 0
      %p340 = por %p338, %p339
      %p341 = scmp.ne.s32.totalorder %s329, %s330
      %p342 = scmp.eq.s32.totalorder %s35, 1
      %p343 = por %p341, %p342
      %p345 = scmp.ne.s32.totalorder %s330, %s344
      %p346 = scmp.eq.s32.totalorder %s35, 0
      %p347 = por %p345, %p346
      %s349 = sadd.s32 %s348, 1
      %p352 = scmp.eq.s32.totalorder %s29, 1
      %p353 = scmp.ne.s32.totalorder %s348, %s350
      %p354 = scmp.eq.s32.totalorder %s29, 0
      %p355 = por %p353, %p354
      %p356 = scmp.ne.s32.totalorder %s348, %s350
      %p357 = scmp.eq.s32.totalorder %s34, 1
      %p358 = por %p356, %p357
      %p359 = scmp.ne.s32.totalorder %s350, %s351
      %p360 = scmp.eq.s32.totalorder %s34, 0
      %p361 = por %p359, %p360
      %p362 = scmp.ne.s32.totalorder %s350, %s351
      %p363 = scmp.eq.s32.totalorder %s35, 1
      %p364 = por %p362, %p363
      %p366 = scmp.ne.s32.totalorder %s351, %s365
      %p367 = scmp.eq.s32.totalorder %s35, 0
      %p368 = por %p366, %p367
      %s370 = sadd.s32 %s369, 1
      %p373 = scmp.eq.s32.totalorder %s29, 1
      %p374 = scmp.ne.s32.totalorder %s369, %s371
      %p375 = scmp.eq.s32.totalorder %s29, 0
      %p376 = por %p374, %p375
      %p377 = scmp.ne.s32.totalorder %s369, %s371
      %p378 = scmp.eq.s32.totalorder %s34, 1
      %p379 = por %p377, %p378
      %p380 = scmp.ne.s32.totalorder %s371, %s372
      %p381 = scmp.eq.s32.totalorder %s34, 0
      %p382 = por %p380, %p381
      %p383 = scmp.ne.s32.totalorder %s371, %s372
      %p384 = scmp.eq.s32.totalorder %s35, 1
      %p385 = por %p383, %p384
      %p387 = scmp.ne.s32.totalorder %s372, %s386
      %p388 = scmp.eq.s32.totalorder %s35, 0
      %p389 = por %p387, %p388
      %s391 = sadd.s32 %s390, 1
      %p394 = scmp.eq.s32.totalorder %s29, 1
      %p395 = scmp.ne.s32.totalorder %s390, %s392
      %p396 = scmp.eq.s32.totalorder %s29, 0
      %p397 = por %p395, %p396
      %p398 = scmp.ne.s32.totalorder %s390, %s392
      %p399 = scmp.eq.s32.totalorder %s34, 1
      %p400 = por %p398, %p399
      %p401 = scmp.ne.s32.totalorder %s392, %s393
      %p402 = scmp.eq.s32.totalorder %s34, 0
      %p403 = por %p401, %p402
      %p404 = scmp.ne.s32.totalorder %s392, %s393
      %p405 = scmp.eq.s32.totalorder %s35, 1
      %p406 = por %p404, %p405
      %p408 = scmp.ne.s32.totalorder %s393, %s407
      %p409 = scmp.eq.s32.totalorder %s35, 0
      %p410 = por %p408, %p409
      %s411 = ssub.s32 %s36, %s48
      %s412 = ssub.s32 %s37, %s44
      %s413 = sor.u32 %s411, %s412
      %p414 = scmp.eq.s32.totalorder %s413, 0
      %s416 = sadd.s32 %s415, 1
      %s417 = scalar_select %p414, %s415, %s416
      %p420 = pneg %p414
      %p421 = scmp.eq.s32.totalorder %s29, 1
      %p422 = por %p420, %p421
      %p423 = scmp.ne.s32.totalorder %s415, %s418
      %p424 = scmp.eq.s32.totalorder %s29, 0
      %p425 = por %p423, %p424
      %p426 = scmp.ne.s32.totalorder %s415, %s418
      %p427 = scmp.eq.s32.totalorder %s34, 1
      %p428 = por %p426, %p427
      %p429 = scmp.ne.s32.totalorder %s418, %s419
      %p430 = scmp.eq.s32.totalorder %s34, 0
      %p431 = por %p429, %p430
      %p432 = scmp.ne.s32.totalorder %s418, %s419
      %p433 = scmp.eq.s32.totalorder %s35, 1
      %p434 = por %p432, %p433
      %p436 = scmp.ne.s32.totalorder %s419, %s435
      %p437 = scmp.eq.s32.totalorder %s35, 0
      %p438 = por %p436, %p437
      %p439 = scmp.le.s32.totalorder 1, %s29
      %p440 = scmp.lt.s32.totalorder %s29, 3
      %p441 = pnand %p439, %p440
      %p442 = pneg %p441
      // Predicated region
      $region9: #{tpu_custom_call.1} parent=5 // pred_check
        _
      $region10: #{tpu_custom_call.1} parent=5 // pred_check_branch
        %444 = sbr.rel (%p441) target = $region12
      $region11: #{tpu_custom_call.1} parent=5 // pred_region
        %s445 = ssub.s32 %s29, 1
        // Predicated region
        $region13: #{tpu_custom_call.1} parent=11 // pred_check
          %p446 = pneg %p88
        $region14: #{tpu_custom_call.1} parent=11 // pred_check_branch
          %448 = sbr.rel (%p446) target = $region16
        $region15: #{tpu_custom_call.1} parent=11 // pred_region
          _
        $region16: #{tpu_custom_call.1} parent=11 // pred_fallthru
          _
        // Predicated region
        $region17: #{tpu_custom_call.1} parent=11 // pred_check
          %p449 = pneg %p109
        $region18: #{tpu_custom_call.1} parent=11 // pred_check_branch
          %451 = sbr.rel (%p449) target = $region20
        $region19: #{tpu_custom_call.1} parent=11 // pred_region
          _
        $region20: #{tpu_custom_call.1} parent=11 // pred_fallthru
          _
        // Predicated region
        $region21: #{tpu_custom_call.1} parent=11 // pred_check
          %p452 = pneg %p130
        $region22: #{tpu_custom_call.1} parent=11 // pred_check_branch
          %454 = sbr.rel (%p452) target = $region24
        $region23: #{tpu_custom_call.1} parent=11 // pred_region
          _
        $region24: #{tpu_custom_call.1} parent=11 // pred_fallthru
          _
        // Predicated region
        $region25: #{tpu_custom_call.1} parent=11 // pred_check
          %p455 = pneg %p151
        $region26: #{tpu_custom_call.1} parent=11 // pred_check_branch
          %457 = sbr.rel (%p455) target = $region28
        $region27: #{tpu_custom_call.1} parent=11 // pred_region
          _
        $region28: #{tpu_custom_call.1} parent=11 // pred_fallthru
          _
        // Predicated region
        $region29: #{tpu_custom_call.1} parent=11 // pred_check
          %p458 = pneg %p172
        $region30: #{tpu_custom_call.1} parent=11 // pred_check_branch
          %460 = sbr.rel (%p458) target = $region32
        $region31: #{tpu_custom_call.1} parent=11 // pred_region
          _
        $region32: #{tpu_custom_call.1} parent=11 // pred_fallthru
          _
        // Predicated region
        $region33: #{tpu_custom_call.1} parent=11 // pred_check
          %p461 = pneg %p193
        $region34: #{tpu_custom_call.1} parent=11 // pred_check_branch
          %463 = sbr.rel (%p461) target = $region36
        $region35: #{tpu_custom_call.1} parent=11 // pred_region
          _
        $region36: #{tpu_custom_call.1} parent=11 // pred_fallthru
          _
        // Predicated region
        $region37: #{tpu_custom_call.1} parent=11 // pred_check
          %p464 = pneg %p214
        $region38: #{tpu_custom_call.1} parent=11 // pred_check_branch
          %466 = sbr.rel (%p464) target = $region40
        $region39: #{tpu_custom_call.1} parent=11 // pred_region
          _
        $region40: #{tpu_custom_call.1} parent=11 // pred_fallthru
          _
        // Predicated region
        $region41: #{tpu_custom_call.1} parent=11 // pred_check
          %p467 = pneg %p235
        $region42: #{tpu_custom_call.1} parent=11 // pred_check_branch
          %469 = sbr.rel (%p467) target = $region44
        $region43: #{tpu_custom_call.1} parent=11 // pred_region
          _
        $region44: #{tpu_custom_call.1} parent=11 // pred_fallthru
          _
        // Predicated region
        $region45: #{tpu_custom_call.1} parent=11 // pred_check
          %p470 = pneg %p256
        $region46: #{tpu_custom_call.1} parent=11 // pred_check_branch
          %472 = sbr.rel (%p470) target = $region48
        $region47: #{tpu_custom_call.1} parent=11 // pred_region
          _
        $region48: #{tpu_custom_call.1} parent=11 // pred_fallthru
          _
        // Predicated region
        $region49: #{tpu_custom_call.1} parent=11 // pred_check
          %p473 = pneg %p277
        $region50: #{tpu_custom_call.1} parent=11 // pred_check_branch
          %475 = sbr.rel (%p473) target = $region52
        $region51: #{tpu_custom_call.1} parent=11 // pred_region
          _
        $region52: #{tpu_custom_call.1} parent=11 // pred_fallthru
          _
        // Predicated region
        $region53: #{tpu_custom_call.1} parent=11 // pred_check
          %p476 = pneg %p298
        $region54: #{tpu_custom_call.1} parent=11 // pred_check_branch
          %478 = sbr.rel (%p476) target = $region56
        $region55: #{tpu_custom_call.1} parent=11 // pred_region
          _
        $region56: #{tpu_custom_call.1} parent=11 // pred_fallthru
          _
        // Predicated region
        $region57: #{tpu_custom_call.1} parent=11 // pred_check
          %p479 = pneg %p319
        $region58: #{tpu_custom_call.1} parent=11 // pred_check_branch
          %481 = sbr.rel (%p479) target = $region60
        $region59: #{tpu_custom_call.1} parent=11 // pred_region
          _
        $region60: #{tpu_custom_call.1} parent=11 // pred_fallthru
          _
        // Predicated region
        $region61: #{tpu_custom_call.1} parent=11 // pred_check
          %p482 = pneg %p340
        $region62: #{tpu_custom_call.1} parent=11 // pred_check_branch
          %484 = sbr.rel (%p482) target = $region64
        $region63: #{tpu_custom_call.1} parent=11 // pred_region
          _
        $region64: #{tpu_custom_call.1} parent=11 // pred_fallthru
          _
        // Predicated region
        $region65: #{tpu_custom_call.1} parent=11 // pred_check
          %p485 = pneg %p361
        $region66: #{tpu_custom_call.1} parent=11 // pred_check_branch
          %487 = sbr.rel (%p485) target = $region68
        $region67: #{tpu_custom_call.1} parent=11 // pred_region
          _
        $region68: #{tpu_custom_call.1} parent=11 // pred_fallthru
          _
        // Predicated region
        $region69: #{tpu_custom_call.1} parent=11 // pred_check
          %p488 = pneg %p382
        $region70: #{tpu_custom_call.1} parent=11 // pred_check_branch
          %490 = sbr.rel (%p488) target = $region72
        $region71: #{tpu_custom_call.1} parent=11 // pred_region
          _
        $region72: #{tpu_custom_call.1} parent=11 // pred_fallthru
          _
        // Predicated region
        $region73: #{tpu_custom_call.1} parent=11 // pred_check
          %p491 = pneg %p403
        $region74: #{tpu_custom_call.1} parent=11 // pred_check_branch
          %493 = sbr.rel (%p491) target = $region76
        $region75: #{tpu_custom_call.1} parent=11 // pred_region
          _
        $region76: #{tpu_custom_call.1} parent=11 // pred_fallthru
          _
      $region12: #{tpu_custom_call.1} parent=5 // pred_fallthru
        _
      %p494 = scmp.lt.s32.totalorder %s29, 2
      // Predicated region
      $region77: #{tpu_custom_call.1} parent=5 // pred_check
        %p495 = pneg %p494
      $region78: #{tpu_custom_call.1} parent=5 // pred_check_branch
        %497 = sbr.rel (%p495) target = $region80
      $region79: #{tpu_custom_call.1} parent=5 // pred_region
        // Predicated region
        $region81: #{tpu_custom_call.1} parent=79 // pred_check
          %p498 = pneg %p61
        $region82: #{tpu_custom_call.1} parent=79 // pred_check_branch
          %500 = sbr.rel (%p498) target = $region84
        $region83: #{tpu_custom_call.1} parent=79 // pred_region
          %s501 = sand.u32 %s51, 1
          %s502 = scalar_lea.sflag [#allocation5], %s501
          %s503 = sand.u32 %s51, 1
          %s504 = smul.addr %s503, 4
          %s505 = scalar_lea.vmem [#allocation4], %s504
          %s507 = ssub.s32 64, 64
          %508 = vsyncadd %s502, %s507
          %s509 = smul.addr %s36, 64
          %s510 = scalar_lea.hbm %s0, %s509
          %s512 = sshll.u32 %s505, 4
          %s513 = int_to_ptr.vmem [resolvable:$true] %s512
          %515 = dma.hbm_to_vmem [thread:$0]  %s510, 64, %s513, %s502
        $region84: #{tpu_custom_call.1} parent=79 // pred_fallthru
          _
      $region80: #{tpu_custom_call.1} parent=5 // pred_fallthru
        _
      %p516 = scmp.le.s32.totalorder 1, %s29
      %p517 = scmp.lt.s32.totalorder %s29, 3
      %p518 = pnand %p516, %p517
      %p519 = pneg %p518
      // Predicated region
      $region85: #{tpu_custom_call.1} parent=5 // pred_check
        _
      $region86: #{tpu_custom_call.1} parent=5 // pred_check_branch
        %521 = sbr.rel (%p518) target = $region88
      $region87: #{tpu_custom_call.1} parent=5 // pred_region
        %s522 = ssub.s32 %s29, 1
        %s523 = sand.u32 %s54, 1
        %s524 = scalar_lea.sflag [#allocation5], %s523
        %s525 = sand.u32 %s54, 1
        %s526 = smul.addr %s525, 4
        %s527 = scalar_lea.vmem [#allocation4], %s526
        // Predicated region
        $region89: #{tpu_custom_call.1} parent=87 // pred_check
          %p528 = pneg %p67
        $region90: #{tpu_custom_call.1} parent=87 // pred_check_branch
          %530 = sbr.rel (%p528) target = $region92
        $region91: #{tpu_custom_call.1} parent=87 // pred_region
          %531 = dma.done %s524, 64
        $region92: #{tpu_custom_call.1} parent=87 // pred_fallthru
          _
        %s532 = sand.u32 %s54, 1
        %s533 = scalar_lea.sflag [#allocation5], %s532
        %s534 = sand.u32 %s54, 1
        %s535 = smul.addr %s534, 4
        %s536 = scalar_lea.vmem [#allocation4], %s535
        %p537 = pneg %p67
        %p538 = pneg %p64
        %p539 = pneg %p88
        %p540 = pneg %p85
        %p541 = pneg %p109
        %p542 = pneg %p106
        %p543 = pneg %p130
        %p544 = pneg %p127
        %p545 = pneg %p151
        %p546 = pneg %p148
        %p547 = pneg %p172
        %p548 = pneg %p169
        %p549 = pneg %p193
        %p550 = pneg %p190
        %p551 = pneg %p214
        %p552 = pneg %p211
        %p553 = pneg %p235
        %p554 = pneg %p232
        %p555 = pneg %p256
        %p556 = pneg %p253
        %p557 = pneg %p277
        %p558 = pneg %p274
        %p559 = pneg %p298
        %p560 = pneg %p295
        %p561 = pneg %p319
        %p562 = pneg %p316
        %p563 = pneg %p340
        %p564 = pneg %p337
        %p565 = pneg %p361
        %p566 = pneg %p358
        %p567 = pneg %p382
        %p568 = pneg %p379
        %p569 = pneg %p403
        %p570 = pneg %p400
        %p571 = pneg %p431
        %p572 = pneg %p428
        %s573 = sand.u32 %s418, 1
        %s574 = scalar_lea.sflag [#allocation6], %s573
        %s575 = sand.u32 %s418, 1
        %s576 = smul.addr %s575, 8
        %s577 = scalar_lea.vmem [#allocation7], %s576
        %p579 = scmp.eq.s32.totalorder %s39, 0
        // Predicated region
        $region93: #{tpu_custom_call.1} parent=87 // pred_check
          %p580 = pneg %p579
        $region94: #{tpu_custom_call.1} parent=87 // pred_check_branch
          %582 = sbr.rel (%p580) target = $region96
        $region95: #{tpu_custom_call.1} parent=87 // pred_region
          %v583 = vld [vmem:[%s527] sm:$0xf]
          %v584 = vld [vmem:[%s3] sm:$0xf]
          %v585 = vld [vmem:[%s3 + $0x4] sm:$0xf]
          %v586 = vld [vmem:[%s3 + $0x8] sm:$0xf]
          %v587 = vld [vmem:[%s3 + $0xc] sm:$0xf]
          %v588 = vld [vmem:[%s4] sm:$0x1]
          %v590 = vlaneseq
          %v591 = vshrl.u32 %v590, 7
          %v592 = vsub.s32 0, %v591
          %v593 = vrot.slane %v588, %v592
          %v599 = vunpack.c.l.b16 %v584
          %v600 = vunpack.c.l.b16 %v585
          %v601 = vunpack.c.l.b16 %v586
          %v602 = vunpack.c.l.b16 %v587
          %v603 = vpack.c.b16 %v600, %v599
          %v604 = vpack.c.b16 %v602, %v601
          %vm607 = vcmask 261120
          %v609 = vsel %vm607, %v583, 0
          %611 = vmatprep.subr.bf16.mxu0 0
          %612 = vmatpush1.bf16.msra.mxu0 %v603
          %613 = vmatprep.subr.bf16.mxu0 0
          %614 = vmatpush1.bf16.msra.mxu0 %v604
          %615 = vmatprep.subr.bf16.mxu0 0
          %616 = vmatpush1.bf16.msra.mxu0 0
          %617 = vmatprep.subr.bf16.mxu0 0
          %618 = vmatpush1.bf16.msra.mxu0 0
          %619 = vmatprep.subr.bf16.mxu0 0
          %620 = vmatpush1.bf16.msra.mxu0 0
          %621 = vmatprep.subr.bf16.mxu0 0
          %622 = vmatpush1.bf16.msra.mxu0 0
          %623 = vmatprep.subr.bf16.mxu0 0
          %624 = vmatpush1.bf16.msra.mxu0 0
          %625 = vmatprep.subr.bf16.mxu0 0
          %626 = vmatpush1.bf16.msra.mxu0 0
          %627 = vmatprep.subr.bf16.mxu0 0
          %628 = vmatpush1.bf16.msra.mxu0 0
          %629 = vmatprep.subr.bf16.mxu0 0
          %630 = vmatpush1.bf16.msra.mxu0 0
          %631 = vmatprep.subr.bf16.mxu0 0
          %632 = vmatpush1.bf16.msra.mxu0 0
          %633 = vmatprep.subr.bf16.mxu0 0
          %634 = vmatpush1.bf16.msra.mxu0 0
          %635 = vmatprep.subr.bf16.mxu0 0
          %636 = vmatpush1.bf16.msra.mxu0 0
          %637 = vmatprep.subr.bf16.mxu0 0
          %638 = vmatpush1.bf16.msra.mxu0 0
          %639 = vmatprep.subr.bf16.mxu0 0
          %640 = vmatpush1.bf16.msra.mxu0 0
          %641 = vmatprep.subr.bf16.mxu0 0
          %642 = vmatpush1.bf16.msra.mxu0 0
          %643 = vmatprep.mubr.bf16.mxu0 0
          %644 = vmatmul.mubr.bf16.gmra.mrb[0].mxu0 %v609
          %v645 = vpop.f32.mrb[0].mxu0
          %v646 = vadd.f32 %v593, %v645
          %v647 = vpop.f32.mrb[0].mxu0
          %v648 = vpop.f32.mrb[0].mxu0
          %v649 = vpop.f32.mrb[0].mxu0
          %650 = vdwg.mxu0
          %v651 = vpack.c.bf16 %v646, %v646
          %vm652 = vcmask 257024
          %653 = vst.msk [vmem:[#allocation2] sm:$0xf] %vm652, %v651
          %v654 = vld [vmem:[%s5] sm:$0xf]
          %v655 = vld [vmem:[%s5 + $0x4] sm:$0xf]
          %v656 = vld [vmem:[%s5 + $0x8] sm:$0xf]
          %v657 = vld [vmem:[%s5 + $0xc] sm:$0xf]
          %v658 = vld [vmem:[%s6] sm:$0x1]
          %v660 = vlaneseq
          %v661 = vshrl.u32 %v660, 7
          %v662 = vsub.s32 0, %v661
          %v663 = vrot.slane %v658, %v662
          %v669 = vunpack.c.l.b16 %v654
          %v670 = vunpack.c.l.b16 %v655
          %v671 = vunpack.c.l.b16 %v656
          %v672 = vunpack.c.l.b16 %v657
          %v673 = vpack.c.b16 %v670, %v669
          %v674 = vpack.c.b16 %v672, %v671
          %677 = vmatprep.subr.bf16.mxu0 0
          %678 = vmatpush1.bf16.msra.mxu0 %v673
          %679 = vmatprep.subr.bf16.mxu0 0
          %680 = vmatpush1.bf16.msra.mxu0 %v674
          %681 = vmatprep.subr.bf16.mxu0 0
          %682 = vmatpush1.bf16.msra.mxu0 0
          %683 = vmatprep.subr.bf16.mxu0 0
          %684 = vmatpush1.bf16.msra.mxu0 0
          %685 = vmatprep.subr.bf16.mxu0 0
          %686 = vmatpush1.bf16.msra.mxu0 0
          %687 = vmatprep.subr.bf16.mxu0 0
          %688 = vmatpush1.bf16.msra.mxu0 0
          %689 = vmatprep.subr.bf16.mxu0 0
          %690 = vmatpush1.bf16.msra.mxu0 0
          %691 = vmatprep.subr.bf16.mxu0 0
          %692 = vmatpush1.bf16.msra.mxu0 0
          %693 = vmatprep.subr.bf16.mxu0 0
          %694 = vmatpush1.bf16.msra.mxu0 0
          %695 = vmatprep.subr.bf16.mxu0 0
          %696 = vmatpush1.bf16.msra.mxu0 0
          %697 = vmatprep.subr.bf16.mxu0 0
          %698 = vmatpush1.bf16.msra.mxu0 0
          %699 = vmatprep.subr.bf16.mxu0 0
          %700 = vmatpush1.bf16.msra.mxu0 0
          %701 = vmatprep.subr.bf16.mxu0 0
          %702 = vmatpush1.bf16.msra.mxu0 0
          %703 = vmatprep.subr.bf16.mxu0 0
          %704 = vmatpush1.bf16.msra.mxu0 0
          %705 = vmatprep.subr.bf16.mxu0 0
          %706 = vmatpush1.bf16.msra.mxu0 0
          %707 = vmatprep.subr.bf16.mxu0 0
          %708 = vmatpush1.bf16.msra.mxu0 0
          %709 = vmatprep.mubr.bf16.mxu0 0
          %710 = vmatmul.mubr.bf16.gmra.mrb[0].mxu0 %v609
          %v711 = vpop.f32.mrb[0].mxu0
          %v712 = vadd.f32 %v663, %v711
          %v713 = vpop.f32.mrb[0].mxu0
          %v714 = vpop.f32.mrb[0].mxu0
          %v715 = vpop.f32.mrb[0].mxu0
          %716 = vdwg.mxu0
          %v717 = vpack.c.bf16 %v712, %v712
          %718 = vst.msk [vmem:[#allocation3] sm:$0xf] %vm652, %v717
        $region96: #{tpu_custom_call.1} parent=87 // pred_fallthru
          _
        %s719 = smul.u32 %s39, 8
        %s720 = sshra.s32 %s719, 3
        %s721 = sand.u32 %s719, 7
        %s722 = smul.addr %s720, 4
        %s723 = scalar_lea.vmem %s527, %s722 [#allocation4]
        %v724 = vld [vmem:[%s723] sm:$0xf]
        %v725 = vld [vmem:[%s1] sm:$0xf]
        %v726 = vld [vmem:[%s1 + $0x4] sm:$0xf]
        %v727 = vld [vmem:[%s1 + $0x8] sm:$0xf]
        %v728 = vld [vmem:[%s1 + $0xc] sm:$0xf]
        %v729 = vld [vmem:[%s2] sm:$0x1]
        %v731 = vlaneseq
        %v732 = vshrl.u32 %v731, 7
        %v733 = vsub.s32 0, %v732
        %v734 = vrot.slane %v729, %v733
        %v740 = vunpack.c.l.b16 %v725
        %v741 = vunpack.c.l.b16 %v726
        %v742 = vunpack.c.l.b16 %v727
        %v743 = vunpack.c.l.b16 %v728
        %v744 = vpack.c.b16 %v741, %v740
        %v745 = vpack.c.b16 %v743, %v742
        %vm748 = vcmask 261120
        %v750 = vsel %vm748, %v724, 0
        %752 = vmatprep.subr.bf16.mxu0 0
        %753 = vmatpush1.bf16.msra.mxu0 %v744
        %754 = vmatprep.subr.bf16.mxu0 0
        %755 = vmatpush1.bf16.msra.mxu0 %v745
        %756 = vmatprep.subr.bf16.mxu0 0
        %757 = vmatpush1.bf16.msra.mxu0 0
        %758 = vmatprep.subr.bf16.mxu0 0
        %759 = vmatpush1.bf16.msra.mxu0 0
        %760 = vmatprep.subr.bf16.mxu0 0
        %761 = vmatpush1.bf16.msra.mxu0 0
        %762 = vmatprep.subr.bf16.mxu0 0
        %763 = vmatpush1.bf16.msra.mxu0 0
        %764 = vmatprep.subr.bf16.mxu0 0
        %765 = vmatpush1.bf16.msra.mxu0 0
        %766 = vmatprep.subr.bf16.mxu0 0
        %767 = vmatpush1.bf16.msra.mxu0 0
        %768 = vmatprep.subr.bf16.mxu0 0
        %769 = vmatpush1.bf16.msra.mxu0 0
        %770 = vmatprep.subr.bf16.mxu0 0
        %771 = vmatpush1.bf16.msra.mxu0 0
        %772 = vmatprep.subr.bf16.mxu0 0
        %773 = vmatpush1.bf16.msra.mxu0 0
        %774 = vmatprep.subr.bf16.mxu0 0
        %775 = vmatpush1.bf16.msra.mxu0 0
        %776 = vmatprep.subr.bf16.mxu0 0
        %777 = vmatpush1.bf16.msra.mxu0 0
        %778 = vmatprep.subr.bf16.mxu0 0
        %779 = vmatpush1.bf16.msra.mxu0 0
        %780 = vmatprep.subr.bf16.mxu0 0
        %781 = vmatpush1.bf16.msra.mxu0 0
        %782 = vmatprep.subr.bf16.mxu0 0
        %783 = vmatpush1.bf16.msra.mxu0 0
        %784 = vmatprep.mubr.bf16.mxu0 0
        %785 = vmatmul.mubr.bf16.gmra.mrb[0].mxu0 %v750
        %v786 = vpop.f32.mrb[0].mxu0
        %v787 = vadd.f32 %v734, %v786
        %v788 = vpop.f32.mrb[0].mxu0
        %v789 = vpop.f32.mrb[0].mxu0
        %v790 = vpop.f32.mrb[0].mxu0
        %791 = vdwg.mxu0
        %v792 = vld [vmem:[#allocation2] sm:$0xf]
        %v793 = vld [vmem:[#allocation3] sm:$0xf]
        %v794 = vpack.c.bf16 %v787, %v787
        %vm795 = vcmask 64512
        %v797 = vsel %vm795, %v794, 0
        %v800 = vsel %vm795, %v792, 0
        %802 = vmatprep.subr.bf16.mxu0 0
        %803 = vmatpush1.bf16.xpose.msra.mxu0 %v800
        %804 = vmatprep.subr.bf16.mxu0 0
        %805 = vmatpush1.bf16.xpose.msra.mxu0 0
        %806 = vmatprep.subr.bf16.mxu0 0
        %807 = vmatpush1.bf16.xpose.msra.mxu0 0
        %808 = vmatprep.subr.bf16.mxu0 0
        %809 = vmatpush1.bf16.xpose.msra.mxu0 0
        %810 = vmatprep.subr.bf16.mxu0 0
        %811 = vmatpush1.bf16.xpose.msra.mxu0 0
        %812 = vmatprep.subr.bf16.mxu0 0
        %813 = vmatpush1.bf16.xpose.msra.mxu0 0
        %814 = vmatprep.subr.bf16.mxu0 0
        %815 = vmatpush1.bf16.xpose.msra.mxu0 0
        %816 = vmatprep.subr.bf16.mxu0 0
        %817 = vmatpush1.bf16.xpose.msra.mxu0 0
        %818 = vmatprep.subr.bf16.mxu0 0
        %819 = vmatpush1.bf16.xpose.msra.mxu0 0
        %820 = vmatprep.subr.bf16.mxu0 0
        %821 = vmatpush1.bf16.xpose.msra.mxu0 0
        %822 = vmatprep.subr.bf16.mxu0 0
        %823 = vmatpush1.bf16.xpose.msra.mxu0 0
        %824 = vmatprep.subr.bf16.mxu0 0
        %825 = vmatpush1.bf16.xpose.msra.mxu0 0
        %826 = vmatprep.subr.bf16.mxu0 0
        %827 = vmatpush1.bf16.xpose.msra.mxu0 0
        %828 = vmatprep.subr.bf16.mxu0 0
        %829 = vmatpush1.bf16.xpose.msra.mxu0 0
        %830 = vmatprep.subr.bf16.mxu0 0
        %831 = vmatpush1.bf16.xpose.msra.mxu0 0
        %832 = vmatprep.subr.bf16.mxu0 0
        %833 = vmatpush1.bf16.xpose.msra.mxu0 0
        %834 = vmatprep.mubr.bf16.mxu0 0
        %835 = vmatmul.mubr.bf16.gmra.mrb[0].mxu0 %v797
        %v836 = vpop.f32.mrb[0].mxu0
        %v837 = vadd.f32 0.0, %v836
        %v838 = vpop.f32.mrb[0].mxu0
        %v839 = vpop.f32.mrb[0].mxu0
        %v840 = vpop.f32.mrb[0].mxu0
        %841 = vdwg.mxu0
        %v842 = vsel %vm795, %v837, -inf
        %843 = vmax.xlane.f32.xlu0 %v842
        %v844 = vpop.xlane.xlu0 %843
        %v845 = vsub.f32 %v837, %v844
        %v846 = vmul.f32 %v845, 1.442695
        %v847 = vpow.pop %v846
        %v848 = vsel %vm795, %v847, 0.0
        %849 = vadd.xlane.f32.xlu0 %v848
        %v850 = vpop.xlane.xlu0 %849
        %v851 = vrcp.pop %v850
        %v852 = vmul.f32 %v847, %v851
        %v853 = vpack.c.bf16 %v852, %v852
        %v855 = vsel %vm795, %v853, 0
        %vm857 = vcmask 1043456
        %v859 = vsel %vm857, %v793, 0
        %861 = vmatprep.subr.bf16.mxu0 0
        %862 = vmatpush1.bf16.msra.mxu0 %v859
        %863 = vmatprep.subr.bf16.mxu0 0
        %864 = vmatpush1.bf16.msra.mxu0 0
        %865 = vmatprep.subr.bf16.mxu0 0
        %866 = vmatpush1.bf16.msra.mxu0 0
        %867 = vmatprep.subr.bf16.mxu0 0
        %868 = vmatpush1.bf16.msra.mxu0 0
        %869 = vmatprep.subr.bf16.mxu0 0
        %870 = vmatpush1.bf16.msra.mxu0 0
        %871 = vmatprep.subr.bf16.mxu0 0
        %872 = vmatpush1.bf16.msra.mxu0 0
        %873 = vmatprep.subr.bf16.mxu0 0
        %874 = vmatpush1.bf16.msra.mxu0 0
        %875 = vmatprep.subr.bf16.mxu0 0
        %876 = vmatpush1.bf16.msra.mxu0 0
        %877 = vmatprep.subr.bf16.mxu0 0
        %878 = vmatpush1.bf16.msra.mxu0 0
        %879 = vmatprep.subr.bf16.mxu0 0
        %880 = vmatpush1.bf16.msra.mxu0 0
        %881 = vmatprep.subr.bf16.mxu0 0
        %882 = vmatpush1.bf16.msra.mxu0 0
        %883 = vmatprep.subr.bf16.mxu0 0
        %884 = vmatpush1.bf16.msra.mxu0 0
        %885 = vmatprep.subr.bf16.mxu0 0
        %886 = vmatpush1.bf16.msra.mxu0 0
        %887 = vmatprep.subr.bf16.mxu0 0
        %888 = vmatpush1.bf16.msra.mxu0 0
        %889 = vmatprep.subr.bf16.mxu0 0
        %890 = vmatpush1.bf16.msra.mxu0 0
        %891 = vmatprep.subr.bf16.mxu0 0
        %892 = vmatpush1.bf16.msra.mxu0 0
        %893 = vmatprep.mubr.bf16.mxu0 0
        %894 = vmatmul.mubr.bf16.gmra.mrb[0].mxu0 %v855
        %v895 = vpop.f32.mrb[0].mxu0
        %v896 = vadd.f32 0.0, %v895
        %v897 = vpop.f32.mrb[0].mxu0
        %v898 = vpop.f32.mrb[0].mxu0
        %v899 = vpop.f32.mrb[0].mxu0
        %900 = vdwg.mxu0
        %902 = vrot.lane.b32.xlu0 %v794, 120
        %v903 = vpop.permute.xlu0 %902
        %v905 = vunpack.c.l.b16 %v792
        %v906 = vpack.c.b16 %v905, %v905
        %907 = vrot.lane.b32.xlu0 %v906, 120
        %v908 = vpop.permute.xlu0 %907
        %v910 = vsel %vm795, %v903, 0
        %v913 = vsel %vm795, %v908, 0
        %915 = vmatprep.subr.bf16.mxu0 0
        %916 = vmatpush1.bf16.xpose.msra.mxu0 %v913
        %917 = vmatprep.subr.bf16.mxu0 0
        %918 = vmatpush1.bf16.xpose.msra.mxu0 0
        %919 = vmatprep.subr.bf16.mxu0 0
        %920 = vmatpush1.bf16.xpose.msra.mxu0 0
        %921 = vmatprep.subr.bf16.mxu0 0
        %922 = vmatpush1.bf16.xpose.msra.mxu0 0
        %923 = vmatprep.subr.bf16.mxu0 0
        %924 = vmatpush1.bf16.xpose.msra.mxu0 0
        %925 = vmatprep.subr.bf16.mxu0 0
        %926 = vmatpush1.bf16.xpose.msra.mxu0 0
        %927 = vmatprep.subr.bf16.mxu0 0
        %928 = vmatpush1.bf16.xpose.msra.mxu0 0
        %929 = vmatprep.subr.bf16.mxu0 0
        %930 = vmatpush1.bf16.xpose.msra.mxu0 0
        %931 = vmatprep.subr.bf16.mxu0 0
        %932 = vmatpush1.bf16.xpose.msra.mxu0 0
        %933 = vmatprep.subr.bf16.mxu0 0
        %934 = vmatpush1.bf16.xpose.msra.mxu0 0
        %935 = vmatprep.subr.bf16.mxu0 0
        %936 = vmatpush1.bf16.xpose.msra.mxu0 0
        %937 = vmatprep.subr.bf16.mxu0 0
        %938 = vmatpush1.bf16.xpose.msra.mxu0 0
        %939 = vmatprep.subr.bf16.mxu0 0
        %940 = vmatpush1.bf16.xpose.msra.mxu0 0
        %941 = vmatprep.subr.bf16.mxu0 0
        %942 = vmatpush1.bf16.xpose.msra.mxu0 0
        %943 = vmatprep.subr.bf16.mxu0 0
        %944 = vmatpush1.bf16.xpose.msra.mxu0 0
        %945 = vmatprep.subr.bf16.mxu0 0
        %946 = vmatpush1.bf16.xpose.msra.mxu0 0
        %947 = vmatprep.mubr.bf16.mxu0 0
        %948 = vmatmul.mubr.bf16.gmra.mrb[0].mxu0 %v910
        %v949 = vpop.f32.mrb[0].mxu0
        %v950 = vadd.f32 0.0, %v949
        %v951 = vpop.f32.mrb[0].mxu0
        %v952 = vpop.f32.mrb[0].mxu0
        %v953 = vpop.f32.mrb[0].mxu0
        %954 = vdwg.mxu0
        %v955 = vsel %vm795, %v950, -inf
        %956 = vmax.xlane.f32.xlu0 %v955
        %v957 = vpop.xlane.xlu0 %956
        %v958 = vsub.f32 %v950, %v957
        %v959 = vmul.f32 %v958, 1.442695
        %v960 = vpow.pop %v959
        %v961 = vsel %vm795, %v960, 0.0
        %962 = vadd.xlane.f32.xlu0 %v961
        %v963 = vpop.xlane.xlu0 %962
        %v964 = vrcp.pop %v963
        %v965 = vmul.f32 %v960, %v964
        %v966 = vpack.c.bf16 %v965, %v965
        %v968 = vunpack.c.l.b16 %v793
        %v969 = vpack.c.b16 %v968, %v968
        %970 = vrot.lane.b32.xlu0 %v969, 120
        %v971 = vpop.permute.xlu0 %970
        %v973 = vsel %vm795, %v966, 0
        %v976 = vsel %vm857, %v971, 0
        %978 = vmatprep.subr.bf16.mxu0 0
        %979 = vmatpush1.bf16.msra.mxu0 %v976
        %980 = vmatprep.subr.bf16.mxu0 0
        %981 = vmatpush1.bf16.msra.mxu0 0
        %982 = vmatprep.subr.bf16.mxu0 0
        %983 = vmatpush1.bf16.msra.mxu0 0
        %984 = vmatprep.subr.bf16.mxu0 0
        %985 = vmatpush1.bf16.msra.mxu0 0
        %986 = vmatprep.subr.bf16.mxu0 0
        %987 = vmatpush1.bf16.msra.mxu0 0
        %988 = vmatprep.subr.bf16.mxu0 0
        %989 = vmatpush1.bf16.msra.mxu0 0
        %990 = vmatprep.subr.bf16.mxu0 0
        %991 = vmatpush1.bf16.msra.mxu0 0
        %992 = vmatprep.subr.bf16.mxu0 0
        %993 = vmatpush1.bf16.msra.mxu0 0
        %994 = vmatprep.subr.bf16.mxu0 0
        %995 = vmatpush1.bf16.msra.mxu0 0
        %996 = vmatprep.subr.bf16.mxu0 0
        %997 = vmatpush1.bf16.msra.mxu0 0
        %998 = vmatprep.subr.bf16.mxu0 0
        %999 = vmatpush1.bf16.msra.mxu0 0
        %1000 = vmatprep.subr.bf16.mxu0 0
        %1001 = vmatpush1.bf16.msra.mxu0 0
        %1002 = vmatprep.subr.bf16.mxu0 0
        %1003 = vmatpush1.bf16.msra.mxu0 0
        %1004 = vmatprep.subr.bf16.mxu0 0
        %1005 = vmatpush1.bf16.msra.mxu0 0
        %1006 = vmatprep.subr.bf16.mxu0 0
        %1007 = vmatpush1.bf16.msra.mxu0 0
        %1008 = vmatprep.subr.bf16.mxu0 0
        %1009 = vmatpush1.bf16.msra.mxu0 0
        %1010 = vmatprep.mubr.bf16.mxu0 0
        %1011 = vmatmul.mubr.bf16.gmra.mrb[0].mxu0 %v973
        %v1012 = vpop.f32.mrb[0].mxu0
        %v1013 = vadd.f32 0.0, %v1012
        %v1014 = vpop.f32.mrb[0].mxu0
        %v1015 = vpop.f32.mrb[0].mxu0
        %v1016 = vpop.f32.mrb[0].mxu0
        %1017 = vdwg.mxu0
        %1018 = vrot.lane.b32.xlu0 %v794, 112
        %v1019 = vpop.permute.xlu0 %1018
        %1020 = vrot.lane.b32.xlu0 %v906, 112
        %v1021 = vpop.permute.xlu0 %1020
        %v1023 = vsel %vm795, %v1019, 0
        %v1026 = vsel %vm795, %v1021, 0
        %1028 = vmatprep.subr.bf16.mxu0 0
        %1029 = vmatpush1.bf16.xpose.msra.mxu0 %v1026
        %1030 = vmatprep.subr.bf16.mxu0 0
        %1031 = vmatpush1.bf16.xpose.msra.mxu0 0
        %1032 = vmatprep.subr.bf16.mxu0 0
        %1033 = vmatpush1.bf16.xpose.msra.mxu0 0
        %1034 = vmatprep.subr.bf16.mxu0 0
        %1035 = vmatpush1.bf16.xpose.msra.mxu0 0
        %1036 = vmatprep.subr.bf16.mxu0 0
        %1037 = vmatpush1.bf16.xpose.msra.mxu0 0
        %1038 = vmatprep.subr.bf16.mxu0 0
        %1039 = vmatpush1.bf16.xpose.msra.mxu0 0
        %1040 = vmatprep.subr.bf16.mxu0 0
        %1041 = vmatpush1.bf16.xpose.msra.mxu0 0
        %1042 = vmatprep.subr.bf16.mxu0 0
        %1043 = vmatpush1.bf16.xpose.msra.mxu0 0
        %1044 = vmatprep.subr.bf16.mxu0 0
        %1045 = vmatpush1.bf16.xpose.msra.mxu0 0
        %1046 = vmatprep.subr.bf16.mxu0 0
        %1047 = vmatpush1.bf16.xpose.msra.mxu0 0
        %1048 = vmatprep.subr.bf16.mxu0 0
        %1049 = vmatpush1.bf16.xpose.msra.mxu0 0
        %1050 = vmatprep.subr.bf16.mxu0 0
        %1051 = vmatpush1.bf16.xpose.msra.mxu0 0
        %1052 = vmatprep.subr.bf16.mxu0 0
        %1053 = vmatpush1.bf16.xpose.msra.mxu0 0
        %1054 = vmatprep.subr.bf16.mxu0 0
        %1055 = vmatpush1.bf16.xpose.msra.mxu0 0
        %1056 = vmatprep.subr.bf16.mxu0 0
        %1057 = vmatpush1.bf16.xpose.msra.mxu0 0
        %1058 = vmatprep.subr.bf16.mxu0 0
        %1059 = vmatpush1.bf16.xpose.msra.mxu0 0
        %1060 = vmatprep.mubr.bf16.mxu0 0
        %1061 = vmatmul.mubr.bf16.gmra.mrb[0].mxu0 %v1023
        %v1062 = vpop.f32.mrb[0].mxu0
        %v1063 = vadd.f32 0.0, %v1062
        %v1064 = vpop.f32.mrb[0].mxu0
        %v1065 = vpop.f32.mrb[0].mxu0
        %v1066 = vpop.f32.mrb[0].mxu0
        %1067 = vdwg.mxu0
        %v1068 = vsel %vm795, %v1063, -inf
        %1069 = vmax.xlane.f32.xlu0 %v1068
        %v1070 = vpop.xlane.xlu0 %1069
        %v1071 = vsub.f32 %v1063, %v1070
        %v1072 = vmul.f32 %v1071, 1.442695
        %v1073 = vpow.pop %v1072
        %v1074 = vsel %vm795, %v1073, 0.0
        %1075 = vadd.xlane.f32.xlu0 %v1074
        %v1076 = vpop.xlane.xlu0 %1075
        %v1077 = vrcp.pop %v1076
        %v1078 = vmul.f32 %v1073, %v1077
        %v1079 = vpack.c.bf16 %v1078, %v1078
        %1080 = vrot.lane.b32.xlu0 %v969, 112
        %v1081 = vpop.permute.xlu0 %1080
        %v1083 = vsel %vm795, %v1079, 0
        %v1086 = vsel %vm857, %v1081, 0
        %1088 = vmatprep.subr.bf16.mxu0 0
        %1089 = vmatpush1.bf16.msra.mxu0 %v1086
        %1090 = vmatprep.subr.bf16.mxu0 0
        %1091 = vmatpush1.bf16.msra.mxu0 0
        %1092 = vmatprep.subr.bf16.mxu0 0
        %1093 = vmatpush1.bf16.msra.mxu0 0
        %1094 = vmatprep.subr.bf16.mxu0 0
        %1095 = vmatpush1.bf16.msra.mxu0 0
        %1096 = vmatprep.subr.bf16.mxu0 0
        %1097 = vmatpush1.bf16.msra.mxu0 0
        %1098 = vmatprep.subr.bf16.mxu0 0
        %1099 = vmatpush1.bf16.msra.mxu0 0
        %1100 = vmatprep.subr.bf16.mxu0 0
        %1101 = vmatpush1.bf16.msra.mxu0 0
        %1102 = vmatprep.subr.bf16.mxu0 0
        %1103 = vmatpush1.bf16.msra.mxu0 0
        %1104 = vmatprep.subr.bf16.mxu0 0
        %1105 = vmatpush1.bf16.msra.mxu0 0
        %1106 = vmatprep.subr.bf16.mxu0 0
        %1107 = vmatpush1.bf16.msra.mxu0 0
        %1108 = vmatprep.subr.bf16.mxu0 0
        %1109 = vmatpush1.bf16.msra.mxu0 0
        %1110 = vmatprep.subr.bf16.mxu0 0
        %1111 = vmatpush1.bf16.msra.mxu0 0
        %1112 = vmatprep.subr.bf16.mxu0 0
        %1113 = vmatpush1.bf16.msra.mxu0 0
        %1114 = vmatprep.subr.bf16.mxu0 0
        %1115 = vmatpush1.bf16.msra.mxu0 0
        %1116 = vmatprep.subr.bf16.mxu0 0
        %1117 = vmatpush1.bf16.msra.mxu0 0
        %1118 = vmatprep.subr.bf16.mxu0 0
        %1119 = vmatpush1.bf16.msra.mxu0 0
        %1120 = vmatprep.mubr.bf16.mxu0 0
        %1121 = vmatmul.mubr.bf16.gmra.mrb[0].mxu0 %v1083
        %v1122 = vpop.f32.mrb[0].mxu0
        %v1123 = vadd.f32 0.0, %v1122
        %v1124 = vpop.f32.mrb[0].mxu0
        %v1125 = vpop.f32.mrb[0].mxu0
        %v1126 = vpop.f32.mrb[0].mxu0
        %1127 = vdwg.mxu0
        %1128 = vrot.lane.b32.xlu0 %v794, 104
        %v1129 = vpop.permute.xlu0 %1128
        %1130 = vrot.lane.b32.xlu0 %v906, 104
        %v1131 = vpop.permute.xlu0 %1130
        %v1133 = vsel %vm795, %v1129, 0
        %v1136 = vsel %vm795, %v1131, 0
        %1138 = vmatprep.subr.bf16.mxu0 0
        %1139 = vmatpush1.bf16.xpose.msra.mxu0 %v1136
        %1140 = vmatprep.subr.bf16.mxu0 0
        %1141 = vmatpush1.bf16.xpose.msra.mxu0 0
        %1142 = vmatprep.subr.bf16.mxu0 0
        %1143 = vmatpush1.bf16.xpose.msra.mxu0 0
        %1144 = vmatprep.subr.bf16.mxu0 0
        %1145 = vmatpush1.bf16.xpose.msra.mxu0 0
        %1146 = vmatprep.subr.bf16.mxu0 0
        %1147 = vmatpush1.bf16.xpose.msra.mxu0 0
        %1148 = vmatprep.subr.bf16.mxu0 0
        %1149 = vmatpush1.bf16.xpose.msra.mxu0 0
        %1150 = vmatprep.subr.bf16.mxu0 0
        %1151 = vmatpush1.bf16.xpose.msra.mxu0 0
        %1152 = vmatprep.subr.bf16.mxu0 0
        %1153 = vmatpush1.bf16.xpose.msra.mxu0 0
        %1154 = vmatprep.subr.bf16.mxu0 0
        %1155 = vmatpush1.bf16.xpose.msra.mxu0 0
        %1156 = vmatprep.subr.bf16.mxu0 0
        %1157 = vmatpush1.bf16.xpose.msra.mxu0 0
        %1158 = vmatprep.subr.bf16.mxu0 0
        %1159 = vmatpush1.bf16.xpose.msra.mxu0 0
        %1160 = vmatprep.subr.bf16.mxu0 0
        %1161 = vmatpush1.bf16.xpose.msra.mxu0 0
        %1162 = vmatprep.subr.bf16.mxu0 0
        %1163 = vmatpush1.bf16.xpose.msra.mxu0 0
        %1164 = vmatprep.subr.bf16.mxu0 0
        %1165 = vmatpush1.bf16.xpose.msra.mxu0 0
        %1166 = vmatprep.subr.bf16.mxu0 0
        %1167 = vmatpush1.bf16.xpose.msra.mxu0 0
        %1168 = vmatprep.subr.bf16.mxu0 0
        %1169 = vmatpush1.bf16.xpose.msra.mxu0 0
        %1170 = vmatprep.mubr.bf16.mxu0 0
        %1171 = vmatmul.mubr.bf16.gmra.mrb[0].mxu0 %v1133
        %v1172 = vpop.f32.mrb[0].mxu0
        %v1173 = vadd.f32 0.0, %v1172
        %v1174 = vpop.f32.mrb[0].mxu0
        %v1175 = vpop.f32.mrb[0].mxu0
        %v1176 = vpop.f32.mrb[0].mxu0
        %1177 = vdwg.mxu0
        %v1178 = vsel %vm795, %v1173, -inf
        %1179 = vmax.xlane.f32.xlu0 %v1178
        %v1180 = vpop.xlane.xlu0 %1179
        %v1181 = vsub.f32 %v1173, %v1180
        %v1182 = vmul.f32 %v1181, 1.442695
        %v1183 = vpow.pop %v1182
        %v1184 = vsel %vm795, %v1183, 0.0
        %1185 = vadd.xlane.f32.xlu0 %v1184
        %v1186 = vpop.xlane.xlu0 %1185
        %v1187 = vrcp.pop %v1186
        %v1188 = vmul.f32 %v1183, %v1187
        %v1189 = vpack.c.bf16 %v1188, %v1188
        %1190 = vrot.lane.b32.xlu0 %v969, 104
        %v1191 = vpop.permute.xlu0 %1190
        %v1193 = vsel %vm795, %v1189, 0
        %v1196 = vsel %vm857, %v1191, 0
        %1198 = vmatprep.subr.bf16.mxu0 0
        %1199 = vmatpush1.bf16.msra.mxu0 %v1196
        %1200 = vmatprep.subr.bf16.mxu0 0
        %1201 = vmatpush1.bf16.msra.mxu0 0
        %1202 = vmatprep.subr.bf16.mxu0 0
        %1203 = vmatpush1.bf16.msra.mxu0 0
        %1204 = vmatprep.subr.bf16.mxu0 0
        %1205 = vmatpush1.bf16.msra.mxu0 0
        %1206 = vmatprep.subr.bf16.mxu0 0
        %1207 = vmatpush1.bf16.msra.mxu0 0
        %1208 = vmatprep.subr.bf16.mxu0 0
        %1209 = vmatpush1.bf16.msra.mxu0 0
        %1210 = vmatprep.subr.bf16.mxu0 0
        %1211 = vmatpush1.bf16.msra.mxu0 0
        %1212 = vmatprep.subr.bf16.mxu0 0
        %1213 = vmatpush1.bf16.msra.mxu0 0
        %1214 = vmatprep.subr.bf16.mxu0 0
        %1215 = vmatpush1.bf16.msra.mxu0 0
        %1216 = vmatprep.subr.bf16.mxu0 0
        %1217 = vmatpush1.bf16.msra.mxu0 0
        %1218 = vmatprep.subr.bf16.mxu0 0
        %1219 = vmatpush1.bf16.msra.mxu0 0
        %1220 = vmatprep.subr.bf16.mxu0 0
        %1221 = vmatpush1.bf16.msra.mxu0 0
        %1222 = vmatprep.subr.bf16.mxu0 0
        %1223 = vmatpush1.bf16.msra.mxu0 0
        %1224 = vmatprep.subr.bf16.mxu0 0
        %1225 = vmatpush1.bf16.msra.mxu0 0
        %1226 = vmatprep.subr.bf16.mxu0 0
        %1227 = vmatpush1.bf16.msra.mxu0 0
        %1228 = vmatprep.subr.bf16.mxu0 0
        %1229 = vmatpush1.bf16.msra.mxu0 0
        %1230 = vmatprep.mubr.bf16.mxu0 0
        %1231 = vmatmul.mubr.bf16.gmra.mrb[0].mxu0 %v1193
        %v1232 = vpop.f32.mrb[0].mxu0
        %v1233 = vadd.f32 0.0, %v1232
        %v1234 = vpop.f32.mrb[0].mxu0
        %v1235 = vpop.f32.mrb[0].mxu0
        %v1236 = vpop.f32.mrb[0].mxu0
        %1237 = vdwg.mxu0
        %1239 = vrot.lane.b32.xlu0 %v1013, 8
        %v1240 = vpop.permute.xlu0 %1239
        %1243 = vrot.lane.b32.xlu0 %v1123, 16
        %v1244 = vpop.permute.xlu0 %1243
        %1247 = vrot.lane.b32.xlu0 %v1233, 24
        %v1248 = vpop.permute.xlu0 %1247
        %v1250 = vsel %vm795, %v896, %v1240
        %vm1251 = vcmask 130048
        %v1252 = vsel %vm1251, %v1250, %v1244
        %vm1253 = vcmask 195584
        %v1254 = vsel %vm1253, %v1252, %v1248
        %v1255 = vpack.c.bf16 %v1254, %v1254
        %v1256 = vld [vmem:[%s7] sm:$0xf]
        %v1257 = vld [vmem:[%s7 + $0x4] sm:$0xf]
        %v1258 = vld [vmem:[%s7 + $0x8] sm:$0xf]
        %v1259 = vld [vmem:[%s7 + $0xc] sm:$0xf]
        %v1260 = vld [vmem:[%s8] sm:$0x1]
        %v1262 = vlaneseq
        %v1263 = vshrl.u32 %v1262, 7
        %v1264 = vsub.s32 0, %v1263
        %v1265 = vrot.slane %v1260, %v1264
        %v1271 = vunpack.c.l.b16 %v1256
        %v1272 = vunpack.c.l.b16 %v1257
        %v1273 = vunpack.c.l.b16 %v1258
        %v1274 = vunpack.c.l.b16 %v1259
        %v1275 = vpack.c.b16 %v1272, %v1271
        %v1276 = vpack.c.b16 %v1274, %v1273
        %v1280 = vsel %vm748, %v1255, 0
        %1282 = vmatprep.subr.bf16.mxu0 0
        %1283 = vmatpush1.bf16.msra.mxu0 %v1275
        %1284 = vmatprep.subr.bf16.mxu0 0
        %1285 = vmatpush1.bf16.msra.mxu0 %v1276
        %1286 = vmatprep.subr.bf16.mxu0 0
        %1287 = vmatpush1.bf16.msra.mxu0 0
        %1288 = vmatprep.subr.bf16.mxu0 0
        %1289 = vmatpush1.bf16.msra.mxu0 0
        %1290 = vmatprep.subr.bf16.mxu0 0
        %1291 = vmatpush1.bf16.msra.mxu0 0
        %1292 = vmatprep.subr.bf16.mxu0 0
        %1293 = vmatpush1.bf16.msra.mxu0 0
        %1294 = vmatprep.subr.bf16.mxu0 0
        %1295 = vmatpush1.bf16.msra.mxu0 0
        %1296 = vmatprep.subr.bf16.mxu0 0
        %1297 = vmatpush1.bf16.msra.mxu0 0
        %1298 = vmatprep.subr.bf16.mxu0 0
        %1299 = vmatpush1.bf16.msra.mxu0 0
        %1300 = vmatprep.subr.bf16.mxu0 0
        %1301 = vmatpush1.bf16.msra.mxu0 0
        %1302 = vmatprep.subr.bf16.mxu0 0
        %1303 = vmatpush1.bf16.msra.mxu0 0
        %1304 = vmatprep.subr.bf16.mxu0 0
        %1305 = vmatpush1.bf16.msra.mxu0 0
        %1306 = vmatprep.subr.bf16.mxu0 0
        %1307 = vmatpush1.bf16.msra.mxu0 0
        %1308 = vmatprep.subr.bf16.mxu0 0
        %1309 = vmatpush1.bf16.msra.mxu0 0
        %1310 = vmatprep.subr.bf16.mxu0 0
        %1311 = vmatpush1.bf16.msra.mxu0 0
        %1312 = vmatprep.subr.bf16.mxu0 0
        %1313 = vmatpush1.bf16.msra.mxu0 0
        %1314 = vmatprep.mubr.bf16.mxu0 0
        %1315 = vmatmul.mubr.bf16.gmra.mrb[0].mxu0 %v1280
        %v1316 = vpop.f32.mrb[0].mxu0
        %v1317 = vadd.f32 %v1265, %v1316
        %v1318 = vpop.f32.mrb[0].mxu0
        %v1319 = vpop.f32.mrb[0].mxu0
        %v1320 = vpop.f32.mrb[0].mxu0
        %1321 = vdwg.mxu0
        %v1322 = vunpack.c.l.bf16 %v724
        %v1323 = vadd.f32 %v1322, %v1317
        %v1324 = vld [vmem:[%s9] sm:$0x1]
        %v1325 = vld [vmem:[%s10] sm:$0x1]
        %v1326 = vsel %vm748, %v1323, 0.0
        %1327 = vadd.xlane.f32.xlu0 %v1326
        %v1328 = vpop.xlane.xlu0 %1327
        %v1329 = vrcp.pop 32.0
        %v1330 = vmul.f32 %v1328, %v1329
        %v1331 = vsub.f32 %v1323, %v1330
        %v1332 = vmul.f32 %v1331, %v1331
        %v1333 = vsel %vm748, %v1332, 0.0
        %1334 = vadd.xlane.f32.xlu0 %v1333
        %v1335 = vpop.xlane.xlu0 %1334
        %v1336 = vmul.f32 %v1335, %v1329
        %v1337 = vadd.f32 %v1336, 1e-05
        %v1338 = vrsqrt.pop %v1337
        %v1339 = vmul.f32 %v1331, %v1338
        %v1341 = vlaneseq
        %v1342 = vshrl.u32 %v1341, 7
        %v1343 = vsub.s32 0, %v1342
        %v1344 = vrot.slane %v1324, %v1343
        %v1346 = vmul.f32 %v1339, %v1344
        %v1348 = vlaneseq
        %v1349 = vshrl.u32 %v1348, 7
        %v1350 = vsub.s32 0, %v1349
        %v1351 = vrot.slane %v1325, %v1350
        %v1353 = vadd.f32 %v1346, %v1351
        %v1354 = vpack.c.bf16 %v1353, %v1353
        %v1355 = vld [vmem:[%s11] sm:$0xf]
        %v1356 = vld [vmem:[%s11 + $0x4] sm:$0xf]
        %v1357 = vld [vmem:[%s11 + $0x8] sm:$0xf]
        %v1358 = vld [vmem:[%s11 + $0xc] sm:$0xf]
        %v1359 = vld [vmem:[%s12] sm:$0x1]
        %v1361 = vlaneseq
        %v1362 = vshrl.u32 %v1361, 7
        %v1363 = vsub.s32 0, %v1362
        %v1364 = vrot.slane %v1359, %v1363
        %v1370 = vunpack.c.l.b16 %v1355
        %v1371 = vunpack.c.l.b16 %v1356
        %v1372 = vunpack.c.l.b16 %v1357
        %v1373 = vunpack.c.l.b16 %v1358
        %v1374 = vpack.c.b16 %v1371, %v1370
        %v1375 = vpack.c.b16 %v1373, %v1372
        %v1379 = vsel %vm748, %v1354, 0
        %1381 = vmatprep.subr.bf16.mxu0 0
        %1382 = vmatpush1.bf16.msra.mxu0 %v1374
        %1383 = vmatprep.subr.bf16.mxu0 0
        %1384 = vmatpush1.bf16.msra.mxu0 %v1375
        %1385 = vmatprep.subr.bf16.mxu0 0
        %1386 = vmatpush1.bf16.msra.mxu0 0
        %1387 = vmatprep.subr.bf16.mxu0 0
        %1388 = vmatpush1.bf16.msra.mxu0 0
        %1389 = vmatprep.subr.bf16.mxu0 0
        %1390 = vmatpush1.bf16.msra.mxu0 0
        %1391 = vmatprep.subr.bf16.mxu0 0
        %1392 = vmatpush1.bf16.msra.mxu0 0
        %1393 = vmatprep.subr.bf16.mxu0 0
        %1394 = vmatpush1.bf16.msra.mxu0 0
        %1395 = vmatprep.subr.bf16.mxu0 0
        %1396 = vmatpush1.bf16.msra.mxu0 0
        %1397 = vmatprep.subr.bf16.mxu0 0
        %1398 = vmatpush1.bf16.msra.mxu0 0
        %1399 = vmatprep.subr.bf16.mxu0 0
        %1400 = vmatpush1.bf16.msra.mxu0 0
        %1401 = vmatprep.subr.bf16.mxu0 0
        %1402 = vmatpush1.bf16.msra.mxu0 0
        %1403 = vmatprep.subr.bf16.mxu0 0
        %1404 = vmatpush1.bf16.msra.mxu0 0
        %1405 = vmatprep.subr.bf16.mxu0 0
        %1406 = vmatpush1.bf16.msra.mxu0 0
        %1407 = vmatprep.subr.bf16.mxu0 0
        %1408 = vmatpush1.bf16.msra.mxu0 0
        %1409 = vmatprep.subr.bf16.mxu0 0
        %1410 = vmatpush1.bf16.msra.mxu0 0
        %1411 = vmatprep.subr.bf16.mxu0 0
        %1412 = vmatpush1.bf16.msra.mxu0 0
        %1413 = vmatprep.mubr.bf16.mxu0 0
        %1414 = vmatmul.mubr.bf16.gmra.mrb[0].mxu0 %v1379
        %v1415 = vpop.f32.mrb[0].mxu0
        %v1416 = vadd.f32 %v1364, %v1415
        %v1417 = vpop.f32.mrb[0].mxu0
        %v1418 = vpop.f32.mrb[0].mxu0
        %v1419 = vpop.f32.mrb[0].mxu0
        %1420 = vdwg.mxu0
        %v1421 = vmul.f32 %v1416, 0.5
        %v1422 = vmul.f32 %v1416, 0.70710677
        %v1423 = verf.f32.pop %v1422
        %v1424 = vadd.f32 %v1423, 1.0
        %v1425 = vmul.f32 %v1421, %v1424
        %v1426 = vpack.c.bf16 %v1425, %v1425
        %v1427 = vld [vmem:[%s13] sm:$0xf]
        %v1428 = vld [vmem:[%s13 + $0x4] sm:$0xf]
        %v1429 = vld [vmem:[%s13 + $0x8] sm:$0xf]
        %v1430 = vld [vmem:[%s13 + $0xc] sm:$0xf]
        %v1431 = vld [vmem:[%s13 + $0x10] sm:$0xf]
        %v1432 = vld [vmem:[%s13 + $0x14] sm:$0xf]
        %v1433 = vld [vmem:[%s13 + $0x18] sm:$0xf]
        %v1434 = vld [vmem:[%s13 + $0x1c] sm:$0xf]
        %v1435 = vld [vmem:[%s13 + $0x20] sm:$0xf]
        %v1436 = vld [vmem:[%s13 + $0x24] sm:$0xf]
        %v1437 = vld [vmem:[%s13 + $0x28] sm:$0xf]
        %v1438 = vld [vmem:[%s13 + $0x2c] sm:$0xf]
        %v1439 = vld [vmem:[%s13 + $0x30] sm:$0xf]
        %v1440 = vld [vmem:[%s13 + $0x34] sm:$0xf]
        %v1441 = vld [vmem:[%s13 + $0x38] sm:$0xf]
        %v1442 = vld [vmem:[%s13 + $0x3c] sm:$0xf]
        %v1443 = vld [vmem:[%s14] sm:$0x1]
        %v1445 = vlaneseq
        %v1446 = vshrl.u32 %v1445, 7
        %v1447 = vsub.s32 0, %v1446
        %v1448 = vrot.slane %v1443, %v1447
        %v1466 = vunpack.c.l.b16 %v1427
        %v1467 = vunpack.c.l.b16 %v1428
        %v1468 = vunpack.c.l.b16 %v1429
        %v1469 = vunpack.c.l.b16 %v1430
        %v1470 = vunpack.c.l.b16 %v1431
        %v1471 = vunpack.c.l.b16 %v1432
        %v1472 = vunpack.c.l.b16 %v1433
        %v1473 = vunpack.c.l.b16 %v1434
        %v1474 = vunpack.c.l.b16 %v1435
        %v1475 = vunpack.c.l.b16 %v1436
        %v1476 = vunpack.c.l.b16 %v1437
        %v1477 = vunpack.c.l.b16 %v1438
        %v1478 = vunpack.c.l.b16 %v1439
        %v1479 = vunpack.c.l.b16 %v1440
        %v1480 = vunpack.c.l.b16 %v1441
        %v1481 = vunpack.c.l.b16 %v1442
        %v1482 = vpack.c.b16 %v1467, %v1466
        %v1483 = vpack.c.b16 %v1469, %v1468
        %v1484 = vpack.c.b16 %v1471, %v1470
        %v1485 = vpack.c.b16 %v1473, %v1472
        %v1486 = vpack.c.b16 %v1475, %v1474
        %v1487 = vpack.c.b16 %v1477, %v1476
        %v1488 = vpack.c.b16 %v1479, %v1478
        %v1489 = vpack.c.b16 %v1481, %v1480
        %1498 = vmatprep.subr.bf16.mxu0 0
        %1499 = vmatpush1.bf16.msra.mxu0 %v1482
        %1500 = vmatprep.subr.bf16.mxu0 0
        %1501 = vmatpush1.bf16.msra.mxu0 %v1483
        %1502 = vmatprep.subr.bf16.mxu0 0
        %1503 = vmatpush1.bf16.msra.mxu0 %v1484
        %1504 = vmatprep.subr.bf16.mxu0 0
        %1505 = vmatpush1.bf16.msra.mxu0 %v1485
        %1506 = vmatprep.subr.bf16.mxu0 0
        %1507 = vmatpush1.bf16.msra.mxu0 %v1486
        %1508 = vmatprep.subr.bf16.mxu0 0
        %1509 = vmatpush1.bf16.msra.mxu0 %v1487
        %1510 = vmatprep.subr.bf16.mxu0 0
        %1511 = vmatpush1.bf16.msra.mxu0 %v1488
        %1512 = vmatprep.subr.bf16.mxu0 0
        %1513 = vmatpush1.bf16.msra.mxu0 %v1489
        %1514 = vmatprep.subr.bf16.mxu0 0
        %1515 = vmatpush1.bf16.msra.mxu0 0
        %1516 = vmatprep.subr.bf16.mxu0 0
        %1517 = vmatpush1.bf16.msra.mxu0 0
        %1518 = vmatprep.subr.bf16.mxu0 0
        %1519 = vmatpush1.bf16.msra.mxu0 0
        %1520 = vmatprep.subr.bf16.mxu0 0
        %1521 = vmatpush1.bf16.msra.mxu0 0
        %1522 = vmatprep.subr.bf16.mxu0 0
        %1523 = vmatpush1.bf16.msra.mxu0 0
        %1524 = vmatprep.subr.bf16.mxu0 0
        %1525 = vmatpush1.bf16.msra.mxu0 0
        %1526 = vmatprep.subr.bf16.mxu0 0
        %1527 = vmatpush1.bf16.msra.mxu0 0
        %1528 = vmatprep.subr.bf16.mxu0 0
        %1529 = vmatpush1.bf16.msra.mxu0 0
        %1530 = vmatprep.mubr.bf16.mxu0 0
        %1531 = vmatmul.mubr.bf16.gmra.mrb[0].mxu0 %v1426
        %v1532 = vpop.f32.mrb[0].mxu0
        %v1533 = vadd.f32 %v1448, %v1532
        %v1534 = vpop.f32.mrb[0].mxu0
        %v1535 = vpop.f32.mrb[0].mxu0
        %v1536 = vpop.f32.mrb[0].mxu0
        %1537 = vdwg.mxu0
        %v1538 = vadd.f32 %v1353, %v1533
        %v1539 = vld [vmem:[%s15] sm:$0x1]
        %v1540 = vld [vmem:[%s16] sm:$0x1]
        %v1541 = vsel %vm748, %v1538, 0.0
        %1542 = vadd.xlane.f32.xlu0 %v1541
        %v1543 = vpop.xlane.xlu0 %1542
        %v1544 = vmul.f32 %v1543, %v1329
        %v1545 = vsub.f32 %v1538, %v1544
        %v1546 = vmul.f32 %v1545, %v1545
        %v1547 = vsel %vm748, %v1546, 0.0
        %1548 = vadd.xlane.f32.xlu0 %v1547
        %v1549 = vpop.xlane.xlu0 %1548
        %v1550 = vmul.f32 %v1549, %v1329
        %v1551 = vadd.f32 %v1550, 1e-05
        %v1552 = vrsqrt.pop %v1551
        %v1553 = vmul.f32 %v1545, %v1552
        %v1555 = vlaneseq
        %v1556 = vshrl.u32 %v1555, 7
        %v1557 = vsub.s32 0, %v1556
        %v1558 = vrot.slane %v1539, %v1557
        %v1560 = vmul.f32 %v1553, %v1558
        %v1562 = vlaneseq
        %v1563 = vshrl.u32 %v1562, 7
        %v1564 = vsub.s32 0, %v1563
        %v1565 = vrot.slane %v1540, %v1564
        %v1567 = vadd.f32 %v1560, %v1565
        %1568 = vst.msk [vmem:[%s577] sm:$0xff] %vm748, %v1567
        %s1569 = sand.u32 %s418, 1
        %s1570 = scalar_lea.sflag [#allocation6], %s1569
        %s1571 = sand.u32 %s418, 1
        %s1572 = smul.addr %s1571, 8
        %s1573 = scalar_lea.vmem [#allocation7], %s1572
        // Predicated region
        $region97: #{tpu_custom_call.1} parent=87 // pred_check
          %p1574 = pneg %p428
        $region98: #{tpu_custom_call.1} parent=87 // pred_check_branch
          %1576 = sbr.rel (%p1574) target = $region100
        $region99: #{tpu_custom_call.1} parent=87 // pred_region
          %s1578 = ssub.s32 128, 128
          %1579 = vsyncadd %s1570, %s1578
          %s1580 = sadd.s32 %s39, %s38
          %s1581 = smul.addr %s1580, 128
          %s1582 = scalar_lea.hbm %s17, %s1581
          %s1584 = sshll.u32 %s1573, 4
          %s1585 = int_to_ptr.vmem [resolvable:$true] %s1584
          %1587 = dma.vmem_to_hbm [thread:$0]  %s1585, 128, %s1582, %s1570
        $region100: #{tpu_custom_call.1} parent=87 // pred_fallthru
          _
      $region88: #{tpu_custom_call.1} parent=5 // pred_fallthru
        _
      %p1588 = scmp.le.s32.totalorder 2, %s29
      // Predicated region
      $region101: #{tpu_custom_call.1} parent=5 // pred_check
        %p1589 = pneg %p1588
      $region102: #{tpu_custom_call.1} parent=5 // pred_check_branch
        %1591 = sbr.rel (%p1589) target = $region104
      $region103: #{tpu_custom_call.1} parent=5 // pred_region
        %s1592 = ssub.s32 %s29, 2
        // Predicated region
        $region105: #{tpu_custom_call.1} parent=103 // pred_check
          %p1593 = pneg %p434
        $region106: #{tpu_custom_call.1} parent=103 // pred_check_branch
          %1595 = sbr.rel (%p1593) target = $region108
        $region107: #{tpu_custom_call.1} parent=103 // pred_region
          %s1596 = sand.u32 %s419, 1
          %s1597 = scalar_lea.sflag [#allocation6], %s1596
          %s1598 = sand.u32 %s419, 1
          %s1599 = smul.addr %s1598, 8
          %s1600 = scalar_lea.vmem [#allocation7], %s1599
          %1601 = dma.done %s1597, 128
        $region108: #{tpu_custom_call.1} parent=103 // pred_fallthru
          _
      $region104: #{tpu_custom_call.1} parent=5 // pred_fallthru
        _
    $region6: #{tpu_custom_call.1} parent=1 // loop_footer
      %s33 = sadd.s32 1, %s29
    $region7: #{tpu_custom_call.1} parent=1 // loop_footer_branch
      %28 = sbr.rel target = $region3
    $region8: #{tpu_custom_call.1} parent=1 // loop_exit
      _
    %1602 = vsyncpa [#allocation5], 1
    %s1603 = scalar_lea.sflag [#allocation5], 1
    %1604 = vsyncpa %s1603, 1
    %1605 = vsyncpa [#allocation6], 1
    %s1606 = scalar_lea.sflag [#allocation6], 1
    %1607 = vsyncpa %s1606, 1

</llo_original>
